<compile_context>
chip_gen: v5e
topology: v5e:2x2
jax: 0.10.0
libtpu: 0.0.40
codegen_flags: <defaults>
</compile_context>

<pallas_src>
import numpy as np
import jax
import jax.numpy as jnp
from jax.experimental import pallas as pl
from jax.experimental.pallas import tpu as pltpu

KERNEL_SIZE = 5
# Taps kept by a mask-'B' 5x5 masked conv (mask-'A' additionally zeroes tap
# (2,2); handled by pre-masking the weights, so every layer uses the same loop).
TAPS = [(0, 0), (0, 1), (0, 2), (0, 3), (0, 4),
        (1, 0), (1, 1), (1, 2), (1, 3), (1, 4),
        (2, 0), (2, 1), (2, 2)]
N_TAPS = len(TAPS)        # 13
N_TAPS_PAD = 16           # pad contraction dim to 16 * 32 = 512 (4 x 128 lanes)


def _conv_mask(mask_type: str) -> np.ndarray:
    k = KERNEL_SIZE
    m = np.zeros((k, k, 1, 1), np.float32)        # HWIO layout
    m[:k // 2, :] = 1.0
    m[k // 2, :k // 2] = 1.0
    if mask_type == 'B':
        m[k // 2, k // 2] = 1.0
    return m


def _tap_shifts_and_masks(H, W):
    """Per-tap (static) sublane roll amount and per-pixel boundary mask.

    For output row n = y*W + x, tap (dy,dx) reads source n - shift (after a
    wrap-around roll); mask[t, n] = 1 iff the true source pixel is inside the
    image, which also guarantees the roll did not wrap.
    """
    HW = H * W
    shifts = []
    masks = np.zeros((N_TAPS, HW), np.float32)
    for t, (dy, dx) in enumerate(TAPS):
        oy, ox = dy - KERNEL_SIZE // 2, dx - KERNEL_SIZE // 2
        shifts.append(-(oy * W + ox))             # >= 0 for all causal taps
        for y in range(H):
            if not (0 <= y + oy < H):
                continue
            for x in range(W):
                if 0 <= x + ox < W:
                    masks[t, y * W + x] = 1.0
    return shifts, masks


def init_params(key, num_embeddings=128, n_filters=32, n_layers=5, num_stages=4):
    C_embed = 64
    ks = jax.random.split(key, 8)
    p = {}
    p['token_embed'] = 0.5 * jax.random.normal(ks[0], (num_embeddings, C_embed), jnp.float32)
    p['stage_embed'] = 0.5 * jax.random.normal(ks[1], (num_stages, n_filters), jnp.float32)
    # in_proj: 1x1 conv 64 -> 32 (stored as [C_in, C_out] for right-multiply)
    p['win'] = jax.random.normal(ks[2], (C_embed, n_filters), jnp.float32) / np.sqrt(C_embed)
    p['bin'] = 0.1 * jax.random.normal(ks[3], (1, n_filters), jnp.float32)
    # 1 mask-'A' conv + n_layers mask-'B' convs, all 5x5, 32->32, HWIO layout
    n_conv5 = 1 + n_layers
    w5 = jax.random.normal(
        ks[4], (n_conv5, KERNEL_SIZE, KERNEL_SIZE, n_filters, n_filters),
        jnp.float32) / np.sqrt(N_TAPS * n_filters)
    masks = np.stack([_conv_mask('A')] + [_conv_mask('B')] * n_layers)   # [6,5,5,1,1]
    p['w5_full'] = w5 * jnp.asarray(masks)                                # pre-masked
    p['b5'] = 0.1 * jax.random.normal(ks[5], (n_conv5, 1, n_filters), jnp.float32)
    # final masked 1x1 conv (mask 'B' at k=1 == full) 32 -> num_embeddings
    p['wout'] = jax.random.normal(ks[6], (n_filters, num_embeddings), jnp.float32) / np.sqrt(n_filters)
    p['bout'] = 0.1 * jax.random.normal(ks[7], (1, num_embeddings), jnp.float32)
    return p


def _make_kernel(tap_shifts, pad_cols):
    """Kernel processing one image: enc [HW,64] -> logits [HW,num_emb]."""

    def kernel(enc_ref, mask_ref, win_ref, bin_ref, w5_ref, b5_ref,
               wout_ref, bout_ref, out_ref):
        HW = enc_ref.shape[0]

        # in_proj (1x1 conv) with stage embedding pre-folded into the bias.
        x = jnp.dot(enc_ref[...].astype(jnp.bfloat16), win_ref[...],
                    preferred_element_type=jnp.float32) + bin_ref[...]     # [HW,32] f32

        n_conv = w5_ref.shape[0]
        zeros_pad = jnp.zeros((HW, pad_cols), jnp.float32) if pad_cols else None

        for l in range(n_conv):
            if l > 0:
                x = jnp.maximum(x, 0.0)                       # ReLU before each 'B' conv
            # Build the 13 shifted-and-masked tap views (XLU rolls + VPU masks),
            # lane-concatenate into one [HW, 512] tile -> single fused matmul.
            cols = []
            for t, s in enumerate(tap_shifts):
                xs = x if s == 0 else pltpu.roll(x, shift=s, axis=0)
                cols.append(xs * mask_ref[t])
            if zeros_pad is not None:
                cols.append(zeros_pad)
            xcat = jnp.concatenate(cols, axis=-1).astype(jnp.bfloat16)     # [HW, 512]
            x = jnp.dot(xcat, w5_ref[l],
                        preferred_element_type=jnp.float32) + b5_ref[l]    # [HW, 32]

        x = jnp.maximum(x, 0.0)
        out_ref[...] = (jnp.dot(x.astype(jnp.bfloat16), wout_ref[...],
                                preferred_element_type=jnp.float32)
                        + bout_ref[...])                                   # [HW, 128]

    return kernel


def pixelcnn_nx_forward(prev_x_b1hw, stage_id, out_shape, params):
    H, W = out_shape
    B = prev_x_b1hw.shape[0]
    h0, w0 = prev_x_b1hw.shape[2], prev_x_b1hw.shape[3]
    HW = H * W

    # nearest-neighbor upsample == F.interpolate(mode='nearest') index glue
    iy = (np.arange(H) * h0) // H
    ix = (np.arange(W) * w0) // W
    xu = prev_x_b1hw[:, 0][:, iy][:, :, ix].astype(jnp.int32)              # [B,H,W]

    # Embedding lookup hoisted out of the kernel (cheap XLA gather).
    enc = params['token_embed'][xu].reshape(B, HW, -1)                     # [B,HW,64] f32
    C_embed = enc.shape[-1]
    n_filters = params['win'].shape[1]
    num_emb = params['wout'].shape[1]
    n_conv = params['w5_full'].shape[0]

    # Static per-tap roll amounts and per-image boundary masks.
    tap_shifts, masks_np = _tap_shifts_and_masks(H, W)
    masks = jnp.asarray(
        np.broadcast_to(masks_np[:, :, None], (N_TAPS, HW, n_filters)).copy())

    # Fused per-layer conv weights: [n_conv, 16*32, 32] (tap-major rows), bf16.
    w5_taps = jnp.stack([params['w5_full'][:, dy, dx] for (dy, dx) in TAPS],
                        axis=1)                                            # [6,13,32,32]
    w5_fused = jnp.concatenate(
        [w5_taps,
         jnp.zeros((n_conv, N_TAPS_PAD - N_TAPS, n_filters, n_filters), jnp.float32)],
        axis=1).reshape(n_conv, N_TAPS_PAD * n_filters, n_filters).astype(jnp.bfloat16)

    # Fold the stage embedding into the in_proj bias.
    bin_stage = params['bin'] + params['stage_embed'][stage_id][None, :]   # [1,32]

    win_bf = params['win'].astype(jnp.bfloat16)
    wout_bf = params['wout'].astype(jnp.bfloat16)

    kernel = _make_kernel(tap_shifts, (N_TAPS_PAD - N_TAPS) * n_filters)

    out_flat = pl.pallas_call(
        kernel,
        grid=(B,),
        out_shape=jax.ShapeDtypeStruct((B, HW, num_emb), jnp.float32),
        in_specs=[
            pl.BlockSpec((None, HW, C_embed), lambda b: (b, 0, 0)),                     # enc
            pl.BlockSpec((N_TAPS, HW, n_filters), lambda b: (0, 0, 0)),                 # masks
            pl.BlockSpec((C_embed, n_filters), lambda b: (0, 0)),                       # win
            pl.BlockSpec((1, n_filters), lambda b: (0, 0)),                             # bin+stage
            pl.BlockSpec((n_conv, N_TAPS_PAD * n_filters, n_filters), lambda b: (0, 0, 0)),  # w5
            pl.BlockSpec((n_conv, 1, n_filters), lambda b: (0, 0, 0)),                  # b5
            pl.BlockSpec((n_filters, num_emb), lambda b: (0, 0)),                       # wout
            pl.BlockSpec((1, num_emb), lambda b: (0, 0)),                               # bout
        ],
        out_specs=pl.BlockSpec((None, HW, num_emb), lambda b: (b, 0, 0)),
        compiler_params=pltpu.CompilerParams(dimension_semantics=("parallel",)),
    )(enc, masks, win_bf, bin_stage, w5_fused, params['b5'], wout_bf, params['bout'])

    out = out_flat.reshape(B, H, W, num_emb)
    # PyTorch output layout: [B, num_embeddings, 1, H, W]
    return jnp.transpose(out, (0, 3, 1, 2))[:, :, None, :, :]


def reference_forward(prev_x_b1hw, stage_id, out_shape, params):
    """Pure-JAX f32/HIGHEST reference replicating the PyTorch forward."""
    H, W = out_shape
    h0, w0 = prev_x_b1hw.shape[2], prev_x_b1hw.shape[3]
    iy = (np.arange(H) * h0) // H
    ix = (np.arange(W) * w0) // W
    xu = prev_x_b1hw[:, 0][:, iy][:, :, ix].astype(jnp.int32)              # [B,H,W]
    enc = params['token_embed'][xu]                                        # [B,H,W,64]
    hi = jax.lax.Precision.HIGHEST
    x = (jnp.einsum('bhwc,cf->bhwf', enc, params['win'], precision=hi)
         + params['bin'][0] + params['stage_embed'][stage_id])
    n_conv = params['w5_full'].shape[0]
    for l in range(n_conv):
        if l > 0:
            x = jnp.maximum(x, 0.0)
        x = jax.lax.conv_general_dilated(
            x, params['w5_full'][l], (1, 1), 'SAME',
            dimension_numbers=('NHWC', 'HWIO', 'NHWC'),
            precision=hi) + params['b5'][l, 0]
    x = jnp.maximum(x, 0.0)
    out = jnp.einsum('bhwf,fe->bhwe', x, params['wout'], precision=hi) + params['bout'][0]
    return jnp.transpose(out, (0, 3, 1, 2))[:, :, None, :, :]


if __name__ == "__main__":
    key = jax.random.PRNGKey(0)
    pkey, xkey = jax.random.split(key)

    num_embeddings = 128
    B, H, W = 2, 8, 8          # out_shape = (8, 8)
    h0, w0 = 4, 4              # previous-stage spatial size
    stage_id = 1

    params = init_params(pkey, num_embeddings=num_embeddings)
    prev_x = jax.random.randint(xkey, (B, 1, h0, w0), 0, num_embeddings, dtype=jnp.int32)

    out = pixelcnn_nx_forward(prev_x, stage_id, (H, W), params)
    out = jax.block_until_ready(out)

    ref = reference_forward(prev_x, stage_id, (H, W), params)
    assert out.shape == (B, num_embeddings, 1, H, W)
    # bf16 MXU operands with f32 accumulation vs f32/HIGHEST reference.
    np.testing.assert_allclose(np.asarray(out), np.asarray(ref), rtol=2e-2, atol=2e-2)
    print("KERNEL_OK")
</pallas_src>

<mosaic_0001>
module attributes {stable_mosaic.version = 11 : i64} {
  func.func @kernel(%arg0: i32, %arg1: memref<1x64x64xf32, #tpu.memory_space<vmem>>, %arg2: memref<13x64x32xf32, #tpu.memory_space<vmem>>, %arg3: memref<64x32xbf16, #tpu.memory_space<vmem>>, %arg4: memref<1x32xf32, #tpu.memory_space<vmem>>, %arg5: memref<6x512x32xbf16, #tpu.memory_space<vmem>>, %arg6: memref<6x1x32xf32, #tpu.memory_space<vmem>>, %arg7: memref<32x128xbf16, #tpu.memory_space<vmem>>, %arg8: memref<1x128xf32, #tpu.memory_space<vmem>>, %arg9: memref<1x64x128xf32, #tpu.memory_space<vmem>>) attributes {dimension_semantics = [#tpu.dimension_semantics<parallel>], iteration_bounds = array<i64: 2>, scalar_prefetch = 0 : i64, scratch_operands = 0 : i64, tpu.core_type = #tpu.core_type<tc>, window_params = [{transform_indices = @transform_0, window_bounds = array<i64: 1, 64, 64>}, {pipeline_mode = #tpu.pipeline_mode<synchronous>, transform_indices = @transform_1, window_bounds = array<i64: 13, 64, 32>}, {pipeline_mode = #tpu.pipeline_mode<synchronous>, transform_indices = @transform_2, window_bounds = array<i64: 64, 32>}, {pipeline_mode = #tpu.pipeline_mode<synchronous>, transform_indices = @transform_3, window_bounds = array<i64: 1, 32>}, {pipeline_mode = #tpu.pipeline_mode<synchronous>, transform_indices = @transform_4, window_bounds = array<i64: 6, 512, 32>}, {pipeline_mode = #tpu.pipeline_mode<synchronous>, transform_indices = @transform_5, window_bounds = array<i64: 6, 1, 32>}, {pipeline_mode = #tpu.pipeline_mode<synchronous>, transform_indices = @transform_6, window_bounds = array<i64: 32, 128>}, {pipeline_mode = #tpu.pipeline_mode<synchronous>, transform_indices = @transform_7, window_bounds = array<i64: 1, 128>}, {transform_indices = @transform_8, window_bounds = array<i64: 1, 64, 128>}]} {
    %c0 = arith.constant 0 : index
    %c0_0 = arith.constant 0 : index
    %c0_1 = arith.constant 0 : index
    %0 = vector.load %arg1[%c0, %c0_0, %c0_1] : memref<1x64x64xf32, #tpu.memory_space<vmem>>, vector<1x64x64xf32>
    %1 = vector.shape_cast %0 : vector<1x64x64xf32> to vector<64x64xf32>
    %2 = arith.truncf %1 : vector<64x64xf32> to vector<64x64xbf16>
    %c0_2 = arith.constant 0 : index
    %c0_3 = arith.constant 0 : index
    %3 = vector.load %arg3[%c0_2, %c0_3] : memref<64x32xbf16, #tpu.memory_space<vmem>>, vector<64x32xbf16>
    %cst = arith.constant dense<0.000000e+00> : vector<64x32xf32>
    %4 = tpu.matmul %2, %3, %cst {dimension_numbers = #tpu.dot_dimension_numbers<[1], [0], [0], [1], [0, 0, 1, 1], [], []>} : vector<64x64xbf16>, vector<64x32xbf16>, vector<64x32xf32> -> vector<64x32xf32>
    %c0_4 = arith.constant 0 : index
    %c0_5 = arith.constant 0 : index
    %5 = vector.load %arg4[%c0_4, %c0_5] : memref<1x32xf32, #tpu.memory_space<vmem>>, vector<1x32xf32>
    %6 = vector.broadcast %5 : vector<1x32xf32> to vector<64x32xf32>
    %7 = arith.addf %4, %6 : vector<64x32xf32>
    %cst_6 = arith.constant 0.000000e+00 : f32
    %8 = vector.broadcast %cst_6 : f32 to vector<64x96xf32>
    %c18_i32 = arith.constant 18 : i32
    %9 = tpu.dynamic_rotate %7 by %c18_i32 dim 0 : vector<64x32xf32>, i32 -> vector<64x32xf32>
    %c0_7 = arith.constant 0 : index
    %c0_8 = arith.constant 0 : index
    %c0_9 = arith.constant 0 : index
    %10 = vector.load %arg2[%c0_7, %c0_8, %c0_9] : memref<13x64x32xf32, #tpu.memory_space<vmem>>, vector<1x64x32xf32>
    %11 = vector.shape_cast %10 : vector<1x64x32xf32> to vector<64x32xf32>
    %12 = arith.mulf %9, %11 : vector<64x32xf32>
    %c17_i32 = arith.constant 17 : i32
    %13 = tpu.dynamic_rotate %7 by %c17_i32 dim 0 : vector<64x32xf32>, i32 -> vector<64x32xf32>
    %c1 = arith.constant 1 : index
    %c0_10 = arith.constant 0 : index
    %c0_11 = arith.constant 0 : index
    %14 = vector.load %arg2[%c1, %c0_10, %c0_11] : memref<13x64x32xf32, #tpu.memory_space<vmem>>, vector<1x64x32xf32>
    %15 = vector.shape_cast %14 : vector<1x64x32xf32> to vector<64x32xf32>
    %16 = arith.mulf %13, %15 : vector<64x32xf32>
    %c16_i32 = arith.constant 16 : i32
    %17 = tpu.dynamic_rotate %7 by %c16_i32 dim 0 : vector<64x32xf32>, i32 -> vector<64x32xf32>
    %c2 = arith.constant 2 : index
    %c0_12 = arith.constant 0 : index
    %c0_13 = arith.constant 0 : index
    %18 = vector.load %arg2[%c2, %c0_12, %c0_13] : memref<13x64x32xf32, #tpu.memory_space<vmem>>, vector<1x64x32xf32>
    %19 = vector.shape_cast %18 : vector<1x64x32xf32> to vector<64x32xf32>
    %20 = arith.mulf %17, %19 : vector<64x32xf32>
    %c15_i32 = arith.constant 15 : i32
    %21 = tpu.dynamic_rotate %7 by %c15_i32 dim 0 : vector<64x32xf32>, i32 -> vector<64x32xf32>
    %c3 = arith.constant 3 : index
    %c0_14 = arith.constant 0 : index
    %c0_15 = arith.constant 0 : index
    %22 = vector.load %arg2[%c3, %c0_14, %c0_15] : memref<13x64x32xf32, #tpu.memory_space<vmem>>, vector<1x64x32xf32>
    %23 = vector.shape_cast %22 : vector<1x64x32xf32> to vector<64x32xf32>
    %24 = arith.mulf %21, %23 : vector<64x32xf32>
    %c14_i32 = arith.constant 14 : i32
    %25 = tpu.dynamic_rotate %7 by %c14_i32 dim 0 : vector<64x32xf32>, i32 -> vector<64x32xf32>
    %c4 = arith.constant 4 : index
    %c0_16 = arith.constant 0 : index
    %c0_17 = arith.constant 0 : index
    %26 = vector.load %arg2[%c4, %c0_16, %c0_17] : memref<13x64x32xf32, #tpu.memory_space<vmem>>, vector<1x64x32xf32>
    %27 = vector.shape_cast %26 : vector<1x64x32xf32> to vector<64x32xf32>
    %28 = arith.mulf %25, %27 : vector<64x32xf32>
    %c10_i32 = arith.constant 10 : i32
    %29 = tpu.dynamic_rotate %7 by %c10_i32 dim 0 : vector<64x32xf32>, i32 -> vector<64x32xf32>
    %c5 = arith.constant 5 : index
    %c0_18 = arith.constant 0 : index
    %c0_19 = arith.constant 0 : index
    %30 = vector.load %arg2[%c5, %c0_18, %c0_19] : memref<13x64x32xf32, #tpu.memory_space<vmem>>, vector<1x64x32xf32>
    %31 = vector.shape_cast %30 : vector<1x64x32xf32> to vector<64x32xf32>
    %32 = arith.mulf %29, %31 : vector<64x32xf32>
    %c9_i32 = arith.constant 9 : i32
    %33 = tpu.dynamic_rotate %7 by %c9_i32 dim 0 : vector<64x32xf32>, i32 -> vector<64x32xf32>
    %c6 = arith.constant 6 : index
    %c0_20 = arith.constant 0 : index
    %c0_21 = arith.constant 0 : index
    %34 = vector.load %arg2[%c6, %c0_20, %c0_21] : memref<13x64x32xf32, #tpu.memory_space<vmem>>, vector<1x64x32xf32>
    %35 = vector.shape_cast %34 : vector<1x64x32xf32> to vector<64x32xf32>
    %36 = arith.mulf %33, %35 : vector<64x32xf32>
    %c8_i32 = arith.constant 8 : i32
    %37 = tpu.dynamic_rotate %7 by %c8_i32 dim 0 : vector<64x32xf32>, i32 -> vector<64x32xf32>
    %c7 = arith.constant 7 : index
    %c0_22 = arith.constant 0 : index
    %c0_23 = arith.constant 0 : index
    %38 = vector.load %arg2[%c7, %c0_22, %c0_23] : memref<13x64x32xf32, #tpu.memory_space<vmem>>, vector<1x64x32xf32>
    %39 = vector.shape_cast %38 : vector<1x64x32xf32> to vector<64x32xf32>
    %40 = arith.mulf %37, %39 : vector<64x32xf32>
    %c7_i32 = arith.constant 7 : i32
    %41 = tpu.dynamic_rotate %7 by %c7_i32 dim 0 : vector<64x32xf32>, i32 -> vector<64x32xf32>
    %c8 = arith.constant 8 : index
    %c0_24 = arith.constant 0 : index
    %c0_25 = arith.constant 0 : index
    %42 = vector.load %arg2[%c8, %c0_24, %c0_25] : memref<13x64x32xf32, #tpu.memory_space<vmem>>, vector<1x64x32xf32>
    %43 = vector.shape_cast %42 : vector<1x64x32xf32> to vector<64x32xf32>
    %44 = arith.mulf %41, %43 : vector<64x32xf32>
    %c6_i32 = arith.constant 6 : i32
    %45 = tpu.dynamic_rotate %7 by %c6_i32 dim 0 : vector<64x32xf32>, i32 -> vector<64x32xf32>
    %c9 = arith.constant 9 : index
    %c0_26 = arith.constant 0 : index
    %c0_27 = arith.constant 0 : index
    %46 = vector.load %arg2[%c9, %c0_26, %c0_27] : memref<13x64x32xf32, #tpu.memory_space<vmem>>, vector<1x64x32xf32>
    %47 = vector.shape_cast %46 : vector<1x64x32xf32> to vector<64x32xf32>
    %48 = arith.mulf %45, %47 : vector<64x32xf32>
    %c2_i32 = arith.constant 2 : i32
    %49 = tpu.dynamic_rotate %7 by %c2_i32 dim 0 : vector<64x32xf32>, i32 -> vector<64x32xf32>
    %c10 = arith.constant 10 : index
    %c0_28 = arith.constant 0 : index
    %c0_29 = arith.constant 0 : index
    %50 = vector.load %arg2[%c10, %c0_28, %c0_29] : memref<13x64x32xf32, #tpu.memory_space<vmem>>, vector<1x64x32xf32>
    %51 = vector.shape_cast %50 : vector<1x64x32xf32> to vector<64x32xf32>
    %52 = arith.mulf %49, %51 : vector<64x32xf32>
    %c1_i32 = arith.constant 1 : i32
    %53 = tpu.dynamic_rotate %7 by %c1_i32 dim 0 : vector<64x32xf32>, i32 -> vector<64x32xf32>
    %c11 = arith.constant 11 : index
    %c0_30 = arith.constant 0 : index
    %c0_31 = arith.constant 0 : index
    %54 = vector.load %arg2[%c11, %c0_30, %c0_31] : memref<13x64x32xf32, #tpu.memory_space<vmem>>, vector<1x64x32xf32>
    %55 = vector.shape_cast %54 : vector<1x64x32xf32> to vector<64x32xf32>
    %56 = arith.mulf %53, %55 : vector<64x32xf32>
    %c12 = arith.constant 12 : index
    %c0_32 = arith.constant 0 : index
    %c0_33 = arith.constant 0 : index
    %57 = vector.load %arg2[%c12, %c0_32, %c0_33] : memref<13x64x32xf32, #tpu.memory_space<vmem>>, vector<1x64x32xf32>
    %58 = vector.shape_cast %57 : vector<1x64x32xf32> to vector<64x32xf32>
    %59 = arith.mulf %7, %58 : vector<64x32xf32>
    %60 = tpu.concatenate %12, %16, %20, %24, %28, %32, %36, %40, %44, %48, %52, %56, %59, %8 in 1 : vector<64x32xf32>, vector<64x32xf32>, vector<64x32xf32>, vector<64x32xf32>, vector<64x32xf32>, vector<64x32xf32>, vector<64x32xf32>, vector<64x32xf32>, vector<64x32xf32>, vector<64x32xf32>, vector<64x32xf32>, vector<64x32xf32>, vector<64x32xf32>, vector<64x96xf32> -> vector<64x512xf32>
    %61 = arith.truncf %60 : vector<64x512xf32> to vector<64x512xbf16>
    %c0_34 = arith.constant 0 : index
    %c0_35 = arith.constant 0 : index
    %c0_36 = arith.constant 0 : index
    %62 = vector.load %arg5[%c0_34, %c0_35, %c0_36] : memref<6x512x32xbf16, #tpu.memory_space<vmem>>, vector<1x512x32xbf16>
    %63 = vector.shape_cast %62 : vector<1x512x32xbf16> to vector<512x32xbf16>
    %cst_37 = arith.constant dense<0.000000e+00> : vector<64x32xf32>
    %64 = tpu.matmul %61, %63, %cst_37 {dimension_numbers = #tpu.dot_dimension_numbers<[1], [0], [0], [1], [0, 0, 1, 1], [], []>} : vector<64x512xbf16>, vector<512x32xbf16>, vector<64x32xf32> -> vector<64x32xf32>
    %c0_38 = arith.constant 0 : index
    %c0_39 = arith.constant 0 : index
    %c0_40 = arith.constant 0 : index
    %65 = vector.load %arg6[%c0_38, %c0_39, %c0_40] : memref<6x1x32xf32, #tpu.memory_space<vmem>>, vector<1x1x32xf32>
    %66 = vector.shape_cast %65 : vector<1x1x32xf32> to vector<1x32xf32>
    %67 = vector.broadcast %66 : vector<1x32xf32> to vector<64x32xf32>
    %68 = arith.addf %64, %67 : vector<64x32xf32>
    %cst_41 = arith.constant 0.000000e+00 : f32
    %69 = vector.broadcast %cst_41 : f32 to vector<64x32xf32>
    %70 = arith.maximumf %68, %69 : vector<64x32xf32>
    %c18_i32_42 = arith.constant 18 : i32
    %71 = tpu.dynamic_rotate %70 by %c18_i32_42 dim 0 : vector<64x32xf32>, i32 -> vector<64x32xf32>
    %c0_43 = arith.constant 0 : index
    %c0_44 = arith.constant 0 : index
    %c0_45 = arith.constant 0 : index
    %72 = vector.load %arg2[%c0_43, %c0_44, %c0_45] : memref<13x64x32xf32, #tpu.memory_space<vmem>>, vector<1x64x32xf32>
    %73 = vector.shape_cast %72 : vector<1x64x32xf32> to vector<64x32xf32>
    %74 = arith.mulf %71, %73 : vector<64x32xf32>
    %c17_i32_46 = arith.constant 17 : i32
    %75 = tpu.dynamic_rotate %70 by %c17_i32_46 dim 0 : vector<64x32xf32>, i32 -> vector<64x32xf32>
    %c1_47 = arith.constant 1 : index
    %c0_48 = arith.constant 0 : index
    %c0_49 = arith.constant 0 : index
    %76 = vector.load %arg2[%c1_47, %c0_48, %c0_49] : memref<13x64x32xf32, #tpu.memory_space<vmem>>, vector<1x64x32xf32>
    %77 = vector.shape_cast %76 : vector<1x64x32xf32> to vector<64x32xf32>
    %78 = arith.mulf %75, %77 : vector<64x32xf32>
    %c16_i32_50 = arith.constant 16 : i32
    %79 = tpu.dynamic_rotate %70 by %c16_i32_50 dim 0 : vector<64x32xf32>, i32 -> vector<64x32xf32>
    %c2_51 = arith.constant 2 : index
    %c0_52 = arith.constant 0 : index
    %c0_53 = arith.constant 0 : index
    %80 = vector.load %arg2[%c2_51, %c0_52, %c0_53] : memref<13x64x32xf32, #tpu.memory_space<vmem>>, vector<1x64x32xf32>
    %81 = vector.shape_cast %80 : vector<1x64x32xf32> to vector<64x32xf32>
    %82 = arith.mulf %79, %81 : vector<64x32xf32>
    %c15_i32_54 = arith.constant 15 : i32
    %83 = tpu.dynamic_rotate %70 by %c15_i32_54 dim 0 : vector<64x32xf32>, i32 -> vector<64x32xf32>
    %c3_55 = arith.constant 3 : index
    %c0_56 = arith.constant 0 : index
    %c0_57 = arith.constant 0 : index
    %84 = vector.load %arg2[%c3_55, %c0_56, %c0_57] : memref<13x64x32xf32, #tpu.memory_space<vmem>>, vector<1x64x32xf32>
    %85 = vector.shape_cast %84 : vector<1x64x32xf32> to vector<64x32xf32>
    %86 = arith.mulf %83, %85 : vector<64x32xf32>
    %c14_i32_58 = arith.constant 14 : i32
    %87 = tpu.dynamic_rotate %70 by %c14_i32_58 dim 0 : vector<64x32xf32>, i32 -> vector<64x32xf32>
    %c4_59 = arith.constant 4 : index
    %c0_60 = arith.constant 0 : index
    %c0_61 = arith.constant 0 : index
    %88 = vector.load %arg2[%c4_59, %c0_60, %c0_61] : memref<13x64x32xf32, #tpu.memory_space<vmem>>, vector<1x64x32xf32>
    %89 = vector.shape_cast %88 : vector<1x64x32xf32> to vector<64x32xf32>
    %90 = arith.mulf %87, %89 : vector<64x32xf32>
    %c10_i32_62 = arith.constant 10 : i32
    %91 = tpu.dynamic_rotate %70 by %c10_i32_62 dim 0 : vector<64x32xf32>, i32 -> vector<64x32xf32>
    %c5_63 = arith.constant 5 : index
    %c0_64 = arith.constant 0 : index
    %c0_65 = arith.constant 0 : index
    %92 = vector.load %arg2[%c5_63, %c0_64, %c0_65] : memref<13x64x32xf32, #tpu.memory_space<vmem>>, vector<1x64x32xf32>
    %93 = vector.shape_cast %92 : vector<1x64x32xf32> to vector<64x32xf32>
    %94 = arith.mulf %91, %93 : vector<64x32xf32>
    %c9_i32_66 = arith.constant 9 : i32
    %95 = tpu.dynamic_rotate %70 by %c9_i32_66 dim 0 : vector<64x32xf32>, i32 -> vector<64x32xf32>
    %c6_67 = arith.constant 6 : index
    %c0_68 = arith.constant 0 : index
    %c0_69 = arith.constant 0 : index
    %96 = vector.load %arg2[%c6_67, %c0_68, %c0_69] : memref<13x64x32xf32, #tpu.memory_space<vmem>>, vector<1x64x32xf32>
    %97 = vector.shape_cast %96 : vector<1x64x32xf32> to vector<64x32xf32>
    %98 = arith.mulf %95, %97 : vector<64x32xf32>
    %c8_i32_70 = arith.constant 8 : i32
    %99 = tpu.dynamic_rotate %70 by %c8_i32_70 dim 0 : vector<64x32xf32>, i32 -> vector<64x32xf32>
    %c7_71 = arith.constant 7 : index
    %c0_72 = arith.constant 0 : index
    %c0_73 = arith.constant 0 : index
    %100 = vector.load %arg2[%c7_71, %c0_72, %c0_73] : memref<13x64x32xf32, #tpu.memory_space<vmem>>, vector<1x64x32xf32>
    %101 = vector.shape_cast %100 : vector<1x64x32xf32> to vector<64x32xf32>
    %102 = arith.mulf %99, %101 : vector<64x32xf32>
    %c7_i32_74 = arith.constant 7 : i32
    %103 = tpu.dynamic_rotate %70 by %c7_i32_74 dim 0 : vector<64x32xf32>, i32 -> vector<64x32xf32>
    %c8_75 = arith.constant 8 : index
    %c0_76 = arith.constant 0 : index
    %c0_77 = arith.constant 0 : index
    %104 = vector.load %arg2[%c8_75, %c0_76, %c0_77] : memref<13x64x32xf32, #tpu.memory_space<vmem>>, vector<1x64x32xf32>
    %105 = vector.shape_cast %104 : vector<1x64x32xf32> to vector<64x32xf32>
    %106 = arith.mulf %103, %105 : vector<64x32xf32>
    %c6_i32_78 = arith.constant 6 : i32
    %107 = tpu.dynamic_rotate %70 by %c6_i32_78 dim 0 : vector<64x32xf32>, i32 -> vector<64x32xf32>
    %c9_79 = arith.constant 9 : index
    %c0_80 = arith.constant 0 : index
    %c0_81 = arith.constant 0 : index
    %108 = vector.load %arg2[%c9_79, %c0_80, %c0_81] : memref<13x64x32xf32, #tpu.memory_space<vmem>>, vector<1x64x32xf32>
    %109 = vector.shape_cast %108 : vector<1x64x32xf32> to vector<64x32xf32>
    %110 = arith.mulf %107, %109 : vector<64x32xf32>
    %c2_i32_82 = arith.constant 2 : i32
    %111 = tpu.dynamic_rotate %70 by %c2_i32_82 dim 0 : vector<64x32xf32>, i32 -> vector<64x32xf32>
    %c10_83 = arith.constant 10 : index
    %c0_84 = arith.constant 0 : index
    %c0_85 = arith.constant 0 : index
    %112 = vector.load %arg2[%c10_83, %c0_84, %c0_85] : memref<13x64x32xf32, #tpu.memory_space<vmem>>, vector<1x64x32xf32>
    %113 = vector.shape_cast %112 : vector<1x64x32xf32> to vector<64x32xf32>
    %114 = arith.mulf %111, %113 : vector<64x32xf32>
    %c1_i32_86 = arith.constant 1 : i32
    %115 = tpu.dynamic_rotate %70 by %c1_i32_86 dim 0 : vector<64x32xf32>, i32 -> vector<64x32xf32>
    %c11_87 = arith.constant 11 : index
    %c0_88 = arith.constant 0 : index
    %c0_89 = arith.constant 0 : index
    %116 = vector.load %arg2[%c11_87, %c0_88, %c0_89] : memref<13x64x32xf32, #tpu.memory_space<vmem>>, vector<1x64x32xf32>
    %117 = vector.shape_cast %116 : vector<1x64x32xf32> to vector<64x32xf32>
    %118 = arith.mulf %115, %117 : vector<64x32xf32>
    %c12_90 = arith.constant 12 : index
    %c0_91 = arith.constant 0 : index
    %c0_92 = arith.constant 0 : index
    %119 = vector.load %arg2[%c12_90, %c0_91, %c0_92] : memref<13x64x32xf32, #tpu.memory_space<vmem>>, vector<1x64x32xf32>
    %120 = vector.shape_cast %119 : vector<1x64x32xf32> to vector<64x32xf32>
    %121 = arith.mulf %70, %120 : vector<64x32xf32>
    %122 = tpu.concatenate %74, %78, %82, %86, %90, %94, %98, %102, %106, %110, %114, %118, %121, %8 in 1 : vector<64x32xf32>, vector<64x32xf32>, vector<64x32xf32>, vector<64x32xf32>, vector<64x32xf32>, vector<64x32xf32>, vector<64x32xf32>, vector<64x32xf32>, vector<64x32xf32>, vector<64x32xf32>, vector<64x32xf32>, vector<64x32xf32>, vector<64x32xf32>, vector<64x96xf32> -> vector<64x512xf32>
    %123 = arith.truncf %122 : vector<64x512xf32> to vector<64x512xbf16>
    %c1_93 = arith.constant 1 : index
    %c0_94 = arith.constant 0 : index
    %c0_95 = arith.constant 0 : index
    %124 = vector.load %arg5[%c1_93, %c0_94, %c0_95] : memref<6x512x32xbf16, #tpu.memory_space<vmem>>, vector<1x512x32xbf16>
    %125 = vector.shape_cast %124 : vector<1x512x32xbf16> to vector<512x32xbf16>
    %cst_96 = arith.constant dense<0.000000e+00> : vector<64x32xf32>
    %126 = tpu.matmul %123, %125, %cst_96 {dimension_numbers = #tpu.dot_dimension_numbers<[1], [0], [0], [1], [0, 0, 1, 1], [], []>} : vector<64x512xbf16>, vector<512x32xbf16>, vector<64x32xf32> -> vector<64x32xf32>
    %c1_97 = arith.constant 1 : index
    %c0_98 = arith.constant 0 : index
    %c0_99 = arith.constant 0 : index
    %127 = vector.load %arg6[%c1_97, %c0_98, %c0_99] : memref<6x1x32xf32, #tpu.memory_space<vmem>>, vector<1x1x32xf32>
    %128 = vector.shape_cast %127 : vector<1x1x32xf32> to vector<1x32xf32>
    %129 = vector.broadcast %128 : vector<1x32xf32> to vector<64x32xf32>
    %130 = arith.addf %126, %129 : vector<64x32xf32>
    %cst_100 = arith.constant 0.000000e+00 : f32
    %131 = vector.broadcast %cst_100 : f32 to vector<64x32xf32>
    %132 = arith.maximumf %130, %131 : vector<64x32xf32>
    %c18_i32_101 = arith.constant 18 : i32
    %133 = tpu.dynamic_rotate %132 by %c18_i32_101 dim 0 : vector<64x32xf32>, i32 -> vector<64x32xf32>
    %c0_102 = arith.constant 0 : index
    %c0_103 = arith.constant 0 : index
    %c0_104 = arith.constant 0 : index
    %134 = vector.load %arg2[%c0_102, %c0_103, %c0_104] : memref<13x64x32xf32, #tpu.memory_space<vmem>>, vector<1x64x32xf32>
    %135 = vector.shape_cast %134 : vector<1x64x32xf32> to vector<64x32xf32>
    %136 = arith.mulf %133, %135 : vector<64x32xf32>
    %c17_i32_105 = arith.constant 17 : i32
    %137 = tpu.dynamic_rotate %132 by %c17_i32_105 dim 0 : vector<64x32xf32>, i32 -> vector<64x32xf32>
    %c1_106 = arith.constant 1 : index
    %c0_107 = arith.constant 0 : index
    %c0_108 = arith.constant 0 : index
    %138 = vector.load %arg2[%c1_106, %c0_107, %c0_108] : memref<13x64x32xf32, #tpu.memory_space<vmem>>, vector<1x64x32xf32>
    %139 = vector.shape_cast %138 : vector<1x64x32xf32> to vector<64x32xf32>
    %140 = arith.mulf %137, %139 : vector<64x32xf32>
    %c16_i32_109 = arith.constant 16 : i32
    %141 = tpu.dynamic_rotate %132 by %c16_i32_109 dim 0 : vector<64x32xf32>, i32 -> vector<64x32xf32>
    %c2_110 = arith.constant 2 : index
    %c0_111 = arith.constant 0 : index
    %c0_112 = arith.constant 0 : index
    %142 = vector.load %arg2[%c2_110, %c0_111, %c0_112] : memref<13x64x32xf32, #tpu.memory_space<vmem>>, vector<1x64x32xf32>
    %143 = vector.shape_cast %142 : vector<1x64x32xf32> to vector<64x32xf32>
    %144 = arith.mulf %141, %143 : vector<64x32xf32>
    %c15_i32_113 = arith.constant 15 : i32
    %145 = tpu.dynamic_rotate %132 by %c15_i32_113 dim 0 : vector<64x32xf32>, i32 -> vector<64x32xf32>
    %c3_114 = arith.constant 3 : index
    %c0_115 = arith.constant 0 : index
    %c0_116 = arith.constant 0 : index
    %146 = vector.load %arg2[%c3_114, %c0_115, %c0_116] : memref<13x64x32xf32, #tpu.memory_space<vmem>>, vector<1x64x32xf32>
    %147 = vector.shape_cast %146 : vector<1x64x32xf32> to vector<64x32xf32>
    %148 = arith.mulf %145, %147 : vector<64x32xf32>
    %c14_i32_117 = arith.constant 14 : i32
    %149 = tpu.dynamic_rotate %132 by %c14_i32_117 dim 0 : vector<64x32xf32>, i32 -> vector<64x32xf32>
    %c4_118 = arith.constant 4 : index
    %c0_119 = arith.constant 0 : index
    %c0_120 = arith.constant 0 : index
    %150 = vector.load %arg2[%c4_118, %c0_119, %c0_120] : memref<13x64x32xf32, #tpu.memory_space<vmem>>, vector<1x64x32xf32>
    %151 = vector.shape_cast %150 : vector<1x64x32xf32> to vector<64x32xf32>
    %152 = arith.mulf %149, %151 : vector<64x32xf32>
    %c10_i32_121 = arith.constant 10 : i32
    %153 = tpu.dynamic_rotate %132 by %c10_i32_121 dim 0 : vector<64x32xf32>, i32 -> vector<64x32xf32>
    %c5_122 = arith.constant 5 : index
    %c0_123 = arith.constant 0 : index
    %c0_124 = arith.constant 0 : index
    %154 = vector.load %arg2[%c5_122, %c0_123, %c0_124] : memref<13x64x32xf32, #tpu.memory_space<vmem>>, vector<1x64x32xf32>
    %155 = vector.shape_cast %154 : vector<1x64x32xf32> to vector<64x32xf32>
    %156 = arith.mulf %153, %155 : vector<64x32xf32>
    %c9_i32_125 = arith.constant 9 : i32
    %157 = tpu.dynamic_rotate %132 by %c9_i32_125 dim 0 : vector<64x32xf32>, i32 -> vector<64x32xf32>
    %c6_126 = arith.constant 6 : index
    %c0_127 = arith.constant 0 : index
    %c0_128 = arith.constant 0 : index
    %158 = vector.load %arg2[%c6_126, %c0_127, %c0_128] : memref<13x64x32xf32, #tpu.memory_space<vmem>>, vector<1x64x32xf32>
    %159 = vector.shape_cast %158 : vector<1x64x32xf32> to vector<64x32xf32>
    %160 = arith.mulf %157, %159 : vector<64x32xf32>
    %c8_i32_129 = arith.constant 8 : i32
    %161 = tpu.dynamic_rotate %132 by %c8_i32_129 dim 0 : vector<64x32xf32>, i32 -> vector<64x32xf32>
    %c7_130 = arith.constant 7 : index
    %c0_131 = arith.constant 0 : index
    %c0_132 = arith.constant 0 : index
    %162 = vector.load %arg2[%c7_130, %c0_131, %c0_132] : memref<13x64x32xf32, #tpu.memory_space<vmem>>, vector<1x64x32xf32>
    %163 = vector.shape_cast %162 : vector<1x64x32xf32> to vector<64x32xf32>
    %164 = arith.mulf %161, %163 : vector<64x32xf32>
    %c7_i32_133 = arith.constant 7 : i32
    %165 = tpu.dynamic_rotate %132 by %c7_i32_133 dim 0 : vector<64x32xf32>, i32 -> vector<64x32xf32>
    %c8_134 = arith.constant 8 : index
    %c0_135 = arith.constant 0 : index
    %c0_136 = arith.constant 0 : index
    %166 = vector.load %arg2[%c8_134, %c0_135, %c0_136] : memref<13x64x32xf32, #tpu.memory_space<vmem>>, vector<1x64x32xf32>
    %167 = vector.shape_cast %166 : vector<1x64x32xf32> to vector<64x32xf32>
    %168 = arith.mulf %165, %167 : vector<64x32xf32>
    %c6_i32_137 = arith.constant 6 : i32
    %169 = tpu.dynamic_rotate %132 by %c6_i32_137 dim 0 : vector<64x32xf32>, i32 -> vector<64x32xf32>
    %c9_138 = arith.constant 9 : index
    %c0_139 = arith.constant 0 : index
    %c0_140 = arith.constant 0 : index
    %170 = vector.load %arg2[%c9_138, %c0_139, %c0_140] : memref<13x64x32xf32, #tpu.memory_space<vmem>>, vector<1x64x32xf32>
    %171 = vector.shape_cast %170 : vector<1x64x32xf32> to vector<64x32xf32>
    %172 = arith.mulf %169, %171 : vector<64x32xf32>
    %c2_i32_141 = arith.constant 2 : i32
    %173 = tpu.dynamic_rotate %132 by %c2_i32_141 dim 0 : vector<64x32xf32>, i32 -> vector<64x32xf32>
    %c10_142 = arith.constant 10 : index
    %c0_143 = arith.constant 0 : index
    %c0_144 = arith.constant 0 : index
    %174 = vector.load %arg2[%c10_142, %c0_143, %c0_144] : memref<13x64x32xf32, #tpu.memory_space<vmem>>, vector<1x64x32xf32>
    %175 = vector.shape_cast %174 : vector<1x64x32xf32> to vector<64x32xf32>
    %176 = arith.mulf %173, %175 : vector<64x32xf32>
    %c1_i32_145 = arith.constant 1 : i32
    %177 = tpu.dynamic_rotate %132 by %c1_i32_145 dim 0 : vector<64x32xf32>, i32 -> vector<64x32xf32>
    %c11_146 = arith.constant 11 : index
    %c0_147 = arith.constant 0 : index
    %c0_148 = arith.constant 0 : index
    %178 = vector.load %arg2[%c11_146, %c0_147, %c0_148] : memref<13x64x32xf32, #tpu.memory_space<vmem>>, vector<1x64x32xf32>
    %179 = vector.shape_cast %178 : vector<1x64x32xf32> to vector<64x32xf32>
    %180 = arith.mulf %177, %179 : vector<64x32xf32>
    %c12_149 = arith.constant 12 : index
    %c0_150 = arith.constant 0 : index
    %c0_151 = arith.constant 0 : index
    %181 = vector.load %arg2[%c12_149, %c0_150, %c0_151] : memref<13x64x32xf32, #tpu.memory_space<vmem>>, vector<1x64x32xf32>
    %182 = vector.shape_cast %181 : vector<1x64x32xf32> to vector<64x32xf32>
    %183 = arith.mulf %132, %182 : vector<64x32xf32>
    %184 = tpu.concatenate %136, %140, %144, %148, %152, %156, %160, %164, %168, %172, %176, %180, %183, %8 in 1 : vector<64x32xf32>, vector<64x32xf32>, vector<64x32xf32>, vector<64x32xf32>, vector<64x32xf32>, vector<64x32xf32>, vector<64x32xf32>, vector<64x32xf32>, vector<64x32xf32>, vector<64x32xf32>, vector<64x32xf32>, vector<64x32xf32>, vector<64x32xf32>, vector<64x96xf32> -> vector<64x512xf32>
    %185 = arith.truncf %184 : vector<64x512xf32> to vector<64x512xbf16>
    %c2_152 = arith.constant 2 : index
    %c0_153 = arith.constant 0 : index
    %c0_154 = arith.constant 0 : index
    %186 = vector.load %arg5[%c2_152, %c0_153, %c0_154] : memref<6x512x32xbf16, #tpu.memory_space<vmem>>, vector<1x512x32xbf16>
    %187 = vector.shape_cast %186 : vector<1x512x32xbf16> to vector<512x32xbf16>
    %cst_155 = arith.constant dense<0.000000e+00> : vector<64x32xf32>
    %188 = tpu.matmul %185, %187, %cst_155 {dimension_numbers = #tpu.dot_dimension_numbers<[1], [0], [0], [1], [0, 0, 1, 1], [], []>} : vector<64x512xbf16>, vector<512x32xbf16>, vector<64x32xf32> -> vector<64x32xf32>
    %c2_156 = arith.constant 2 : index
    %c0_157 = arith.constant 0 : index
    %c0_158 = arith.constant 0 : index
    %189 = vector.load %arg6[%c2_156, %c0_157, %c0_158] : memref<6x1x32xf32, #tpu.memory_space<vmem>>, vector<1x1x32xf32>
    %190 = vector.shape_cast %189 : vector<1x1x32xf32> to vector<1x32xf32>
    %191 = vector.broadcast %190 : vector<1x32xf32> to vector<64x32xf32>
    %192 = arith.addf %188, %191 : vector<64x32xf32>
    %cst_159 = arith.constant 0.000000e+00 : f32
    %193 = vector.broadcast %cst_159 : f32 to vector<64x32xf32>
    %194 = arith.maximumf %192, %193 : vector<64x32xf32>
    %c18_i32_160 = arith.constant 18 : i32
    %195 = tpu.dynamic_rotate %194 by %c18_i32_160 dim 0 : vector<64x32xf32>, i32 -> vector<64x32xf32>
    %c0_161 = arith.constant 0 : index
    %c0_162 = arith.constant 0 : index
    %c0_163 = arith.constant 0 : index
    %196 = vector.load %arg2[%c0_161, %c0_162, %c0_163] : memref<13x64x32xf32, #tpu.memory_space<vmem>>, vector<1x64x32xf32>
    %197 = vector.shape_cast %196 : vector<1x64x32xf32> to vector<64x32xf32>
    %198 = arith.mulf %195, %197 : vector<64x32xf32>
    %c17_i32_164 = arith.constant 17 : i32
    %199 = tpu.dynamic_rotate %194 by %c17_i32_164 dim 0 : vector<64x32xf32>, i32 -> vector<64x32xf32>
    %c1_165 = arith.constant 1 : index
    %c0_166 = arith.constant 0 : index
    %c0_167 = arith.constant 0 : index
    %200 = vector.load %arg2[%c1_165, %c0_166, %c0_167] : memref<13x64x32xf32, #tpu.memory_space<vmem>>, vector<1x64x32xf32>
    %201 = vector.shape_cast %200 : vector<1x64x32xf32> to vector<64x32xf32>
    %202 = arith.mulf %199, %201 : vector<64x32xf32>
    %c16_i32_168 = arith.constant 16 : i32
    %203 = tpu.dynamic_rotate %194 by %c16_i32_168 dim 0 : vector<64x32xf32>, i32 -> vector<64x32xf32>
    %c2_169 = arith.constant 2 : index
    %c0_170 = arith.constant 0 : index
    %c0_171 = arith.constant 0 : index
    %204 = vector.load %arg2[%c2_169, %c0_170, %c0_171] : memref<13x64x32xf32, #tpu.memory_space<vmem>>, vector<1x64x32xf32>
    %205 = vector.shape_cast %204 : vector<1x64x32xf32> to vector<64x32xf32>
    %206 = arith.mulf %203, %205 : vector<64x32xf32>
    %c15_i32_172 = arith.constant 15 : i32
    %207 = tpu.dynamic_rotate %194 by %c15_i32_172 dim 0 : vector<64x32xf32>, i32 -> vector<64x32xf32>
    %c3_173 = arith.constant 3 : index
    %c0_174 = arith.constant 0 : index
    %c0_175 = arith.constant 0 : index
    %208 = vector.load %arg2[%c3_173, %c0_174, %c0_175] : memref<13x64x32xf32, #tpu.memory_space<vmem>>, vector<1x64x32xf32>
    %209 = vector.shape_cast %208 : vector<1x64x32xf32> to vector<64x32xf32>
    %210 = arith.mulf %207, %209 : vector<64x32xf32>
    %c14_i32_176 = arith.constant 14 : i32
    %211 = tpu.dynamic_rotate %194 by %c14_i32_176 dim 0 : vector<64x32xf32>, i32 -> vector<64x32xf32>
    %c4_177 = arith.constant 4 : index
    %c0_178 = arith.constant 0 : index
    %c0_179 = arith.constant 0 : index
    %212 = vector.load %arg2[%c4_177, %c0_178, %c0_179] : memref<13x64x32xf32, #tpu.memory_space<vmem>>, vector<1x64x32xf32>
    %213 = vector.shape_cast %212 : vector<1x64x32xf32> to vector<64x32xf32>
    %214 = arith.mulf %211, %213 : vector<64x32xf32>
    %c10_i32_180 = arith.constant 10 : i32
    %215 = tpu.dynamic_rotate %194 by %c10_i32_180 dim 0 : vector<64x32xf32>, i32 -> vector<64x32xf32>
    %c5_181 = arith.constant 5 : index
    %c0_182 = arith.constant 0 : index
    %c0_183 = arith.constant 0 : index
    %216 = vector.load %arg2[%c5_181, %c0_182, %c0_183] : memref<13x64x32xf32, #tpu.memory_space<vmem>>, vector<1x64x32xf32>
    %217 = vector.shape_cast %216 : vector<1x64x32xf32> to vector<64x32xf32>
    %218 = arith.mulf %215, %217 : vector<64x32xf32>
    %c9_i32_184 = arith.constant 9 : i32
    %219 = tpu.dynamic_rotate %194 by %c9_i32_184 dim 0 : vector<64x32xf32>, i32 -> vector<64x32xf32>
    %c6_185 = arith.constant 6 : index
    %c0_186 = arith.constant 0 : index
    %c0_187 = arith.constant 0 : index
    %220 = vector.load %arg2[%c6_185, %c0_186, %c0_187] : memref<13x64x32xf32, #tpu.memory_space<vmem>>, vector<1x64x32xf32>
    %221 = vector.shape_cast %220 : vector<1x64x32xf32> to vector<64x32xf32>
    %222 = arith.mulf %219, %221 : vector<64x32xf32>
    %c8_i32_188 = arith.constant 8 : i32
    %223 = tpu.dynamic_rotate %194 by %c8_i32_188 dim 0 : vector<64x32xf32>, i32 -> vector<64x32xf32>
    %c7_189 = arith.constant 7 : index
    %c0_190 = arith.constant 0 : index
    %c0_191 = arith.constant 0 : index
    %224 = vector.load %arg2[%c7_189, %c0_190, %c0_191] : memref<13x64x32xf32, #tpu.memory_space<vmem>>, vector<1x64x32xf32>
    %225 = vector.shape_cast %224 : vector<1x64x32xf32> to vector<64x32xf32>
    %226 = arith.mulf %223, %225 : vector<64x32xf32>
    %c7_i32_192 = arith.constant 7 : i32
    %227 = tpu.dynamic_rotate %194 by %c7_i32_192 dim 0 : vector<64x32xf32>, i32 -> vector<64x32xf32>
    %c8_193 = arith.constant 8 : index
    %c0_194 = arith.constant 0 : index
    %c0_195 = arith.constant 0 : index
    %228 = vector.load %arg2[%c8_193, %c0_194, %c0_195] : memref<13x64x32xf32, #tpu.memory_space<vmem>>, vector<1x64x32xf32>
    %229 = vector.shape_cast %228 : vector<1x64x32xf32> to vector<64x32xf32>
    %230 = arith.mulf %227, %229 : vector<64x32xf32>
    %c6_i32_196 = arith.constant 6 : i32
    %231 = tpu.dynamic_rotate %194 by %c6_i32_196 dim 0 : vector<64x32xf32>, i32 -> vector<64x32xf32>
    %c9_197 = arith.constant 9 : index
    %c0_198 = arith.constant 0 : index
    %c0_199 = arith.constant 0 : index
    %232 = vector.load %arg2[%c9_197, %c0_198, %c0_199] : memref<13x64x32xf32, #tpu.memory_space<vmem>>, vector<1x64x32xf32>
    %233 = vector.shape_cast %232 : vector<1x64x32xf32> to vector<64x32xf32>
    %234 = arith.mulf %231, %233 : vector<64x32xf32>
    %c2_i32_200 = arith.constant 2 : i32
    %235 = tpu.dynamic_rotate %194 by %c2_i32_200 dim 0 : vector<64x32xf32>, i32 -> vector<64x32xf32>
    %c10_201 = arith.constant 10 : index
    %c0_202 = arith.constant 0 : index
    %c0_203 = arith.constant 0 : index
    %236 = vector.load %arg2[%c10_201, %c0_202, %c0_203] : memref<13x64x32xf32, #tpu.memory_space<vmem>>, vector<1x64x32xf32>
    %237 = vector.shape_cast %236 : vector<1x64x32xf32> to vector<64x32xf32>
    %238 = arith.mulf %235, %237 : vector<64x32xf32>
    %c1_i32_204 = arith.constant 1 : i32
    %239 = tpu.dynamic_rotate %194 by %c1_i32_204 dim 0 : vector<64x32xf32>, i32 -> vector<64x32xf32>
    %c11_205 = arith.constant 11 : index
    %c0_206 = arith.constant 0 : index
    %c0_207 = arith.constant 0 : index
    %240 = vector.load %arg2[%c11_205, %c0_206, %c0_207] : memref<13x64x32xf32, #tpu.memory_space<vmem>>, vector<1x64x32xf32>
    %241 = vector.shape_cast %240 : vector<1x64x32xf32> to vector<64x32xf32>
    %242 = arith.mulf %239, %241 : vector<64x32xf32>
    %c12_208 = arith.constant 12 : index
    %c0_209 = arith.constant 0 : index
    %c0_210 = arith.constant 0 : index
    %243 = vector.load %arg2[%c12_208, %c0_209, %c0_210] : memref<13x64x32xf32, #tpu.memory_space<vmem>>, vector<1x64x32xf32>
    %244 = vector.shape_cast %243 : vector<1x64x32xf32> to vector<64x32xf32>
    %245 = arith.mulf %194, %244 : vector<64x32xf32>
    %246 = tpu.concatenate %198, %202, %206, %210, %214, %218, %222, %226, %230, %234, %238, %242, %245, %8 in 1 : vector<64x32xf32>, vector<64x32xf32>, vector<64x32xf32>, vector<64x32xf32>, vector<64x32xf32>, vector<64x32xf32>, vector<64x32xf32>, vector<64x32xf32>, vector<64x32xf32>, vector<64x32xf32>, vector<64x32xf32>, vector<64x32xf32>, vector<64x32xf32>, vector<64x96xf32> -> vector<64x512xf32>
    %247 = arith.truncf %246 : vector<64x512xf32> to vector<64x512xbf16>
    %c3_211 = arith.constant 3 : index
    %c0_212 = arith.constant 0 : index
    %c0_213 = arith.constant 0 : index
    %248 = vector.load %arg5[%c3_211, %c0_212, %c0_213] : memref<6x512x32xbf16, #tpu.memory_space<vmem>>, vector<1x512x32xbf16>
    %249 = vector.shape_cast %248 : vector<1x512x32xbf16> to vector<512x32xbf16>
    %cst_214 = arith.constant dense<0.000000e+00> : vector<64x32xf32>
    %250 = tpu.matmul %247, %249, %cst_214 {dimension_numbers = #tpu.dot_dimension_numbers<[1], [0], [0], [1], [0, 0, 1, 1], [], []>} : vector<64x512xbf16>, vector<512x32xbf16>, vector<64x32xf32> -> vector<64x32xf32>
    %c3_215 = arith.constant 3 : index
    %c0_216 = arith.constant 0 : index
    %c0_217 = arith.constant 0 : index
    %251 = vector.load %arg6[%c3_215, %c0_216, %c0_217] : memref<6x1x32xf32, #tpu.memory_space<vmem>>, vector<1x1x32xf32>
    %252 = vector.shape_cast %251 : vector<1x1x32xf32> to vector<1x32xf32>
    %253 = vector.broadcast %252 : vector<1x32xf32> to vector<64x32xf32>
    %254 = arith.addf %250, %253 : vector<64x32xf32>
    %cst_218 = arith.constant 0.000000e+00 : f32
    %255 = vector.broadcast %cst_218 : f32 to vector<64x32xf32>
    %256 = arith.maximumf %254, %255 : vector<64x32xf32>
    %c18_i32_219 = arith.constant 18 : i32
    %257 = tpu.dynamic_rotate %256 by %c18_i32_219 dim 0 : vector<64x32xf32>, i32 -> vector<64x32xf32>
    %c0_220 = arith.constant 0 : index
    %c0_221 = arith.constant 0 : index
    %c0_222 = arith.constant 0 : index
    %258 = vector.load %arg2[%c0_220, %c0_221, %c0_222] : memref<13x64x32xf32, #tpu.memory_space<vmem>>, vector<1x64x32xf32>
    %259 = vector.shape_cast %258 : vector<1x64x32xf32> to vector<64x32xf32>
    %260 = arith.mulf %257, %259 : vector<64x32xf32>
    %c17_i32_223 = arith.constant 17 : i32
    %261 = tpu.dynamic_rotate %256 by %c17_i32_223 dim 0 : vector<64x32xf32>, i32 -> vector<64x32xf32>
    %c1_224 = arith.constant 1 : index
    %c0_225 = arith.constant 0 : index
    %c0_226 = arith.constant 0 : index
    %262 = vector.load %arg2[%c1_224, %c0_225, %c0_226] : memref<13x64x32xf32, #tpu.memory_space<vmem>>, vector<1x64x32xf32>
    %263 = vector.shape_cast %262 : vector<1x64x32xf32> to vector<64x32xf32>
    %264 = arith.mulf %261, %263 : vector<64x32xf32>
    %c16_i32_227 = arith.constant 16 : i32
    %265 = tpu.dynamic_rotate %256 by %c16_i32_227 dim 0 : vector<64x32xf32>, i32 -> vector<64x32xf32>
    %c2_228 = arith.constant 2 : index
    %c0_229 = arith.constant 0 : index
    %c0_230 = arith.constant 0 : index
    %266 = vector.load %arg2[%c2_228, %c0_229, %c0_230] : memref<13x64x32xf32, #tpu.memory_space<vmem>>, vector<1x64x32xf32>
    %267 = vector.shape_cast %266 : vector<1x64x32xf32> to vector<64x32xf32>
    %268 = arith.mulf %265, %267 : vector<64x32xf32>
    %c15_i32_231 = arith.constant 15 : i32
    %269 = tpu.dynamic_rotate %256 by %c15_i32_231 dim 0 : vector<64x32xf32>, i32 -> vector<64x32xf32>
    %c3_232 = arith.constant 3 : index
    %c0_233 = arith.constant 0 : index
    %c0_234 = arith.constant 0 : index
    %270 = vector.load %arg2[%c3_232, %c0_233, %c0_234] : memref<13x64x32xf32, #tpu.memory_space<vmem>>, vector<1x64x32xf32>
    %271 = vector.shape_cast %270 : vector<1x64x32xf32> to vector<64x32xf32>
    %272 = arith.mulf %269, %271 : vector<64x32xf32>
    %c14_i32_235 = arith.constant 14 : i32
    %273 = tpu.dynamic_rotate %256 by %c14_i32_235 dim 0 : vector<64x32xf32>, i32 -> vector<64x32xf32>
    %c4_236 = arith.constant 4 : index
    %c0_237 = arith.constant 0 : index
    %c0_238 = arith.constant 0 : index
    %274 = vector.load %arg2[%c4_236, %c0_237, %c0_238] : memref<13x64x32xf32, #tpu.memory_space<vmem>>, vector<1x64x32xf32>
    %275 = vector.shape_cast %274 : vector<1x64x32xf32> to vector<64x32xf32>
    %276 = arith.mulf %273, %275 : vector<64x32xf32>
    %c10_i32_239 = arith.constant 10 : i32
    %277 = tpu.dynamic_rotate %256 by %c10_i32_239 dim 0 : vector<64x32xf32>, i32 -> vector<64x32xf32>
    %c5_240 = arith.constant 5 : index
    %c0_241 = arith.constant 0 : index
    %c0_242 = arith.constant 0 : index
    %278 = vector.load %arg2[%c5_240, %c0_241, %c0_242] : memref<13x64x32xf32, #tpu.memory_space<vmem>>, vector<1x64x32xf32>
    %279 = vector.shape_cast %278 : vector<1x64x32xf32> to vector<64x32xf32>
    %280 = arith.mulf %277, %279 : vector<64x32xf32>
    %c9_i32_243 = arith.constant 9 : i32
    %281 = tpu.dynamic_rotate %256 by %c9_i32_243 dim 0 : vector<64x32xf32>, i32 -> vector<64x32xf32>
    %c6_244 = arith.constant 6 : index
    %c0_245 = arith.constant 0 : index
    %c0_246 = arith.constant 0 : index
    %282 = vector.load %arg2[%c6_244, %c0_245, %c0_246] : memref<13x64x32xf32, #tpu.memory_space<vmem>>, vector<1x64x32xf32>
    %283 = vector.shape_cast %282 : vector<1x64x32xf32> to vector<64x32xf32>
    %284 = arith.mulf %281, %283 : vector<64x32xf32>
    %c8_i32_247 = arith.constant 8 : i32
    %285 = tpu.dynamic_rotate %256 by %c8_i32_247 dim 0 : vector<64x32xf32>, i32 -> vector<64x32xf32>
    %c7_248 = arith.constant 7 : index
    %c0_249 = arith.constant 0 : index
    %c0_250 = arith.constant 0 : index
    %286 = vector.load %arg2[%c7_248, %c0_249, %c0_250] : memref<13x64x32xf32, #tpu.memory_space<vmem>>, vector<1x64x32xf32>
    %287 = vector.shape_cast %286 : vector<1x64x32xf32> to vector<64x32xf32>
    %288 = arith.mulf %285, %287 : vector<64x32xf32>
    %c7_i32_251 = arith.constant 7 : i32
    %289 = tpu.dynamic_rotate %256 by %c7_i32_251 dim 0 : vector<64x32xf32>, i32 -> vector<64x32xf32>
    %c8_252 = arith.constant 8 : index
    %c0_253 = arith.constant 0 : index
    %c0_254 = arith.constant 0 : index
    %290 = vector.load %arg2[%c8_252, %c0_253, %c0_254] : memref<13x64x32xf32, #tpu.memory_space<vmem>>, vector<1x64x32xf32>
    %291 = vector.shape_cast %290 : vector<1x64x32xf32> to vector<64x32xf32>
    %292 = arith.mulf %289, %291 : vector<64x32xf32>
    %c6_i32_255 = arith.constant 6 : i32
    %293 = tpu.dynamic_rotate %256 by %c6_i32_255 dim 0 : vector<64x32xf32>, i32 -> vector<64x32xf32>
    %c9_256 = arith.constant 9 : index
    %c0_257 = arith.constant 0 : index
    %c0_258 = arith.constant 0 : index
    %294 = vector.load %arg2[%c9_256, %c0_257, %c0_258] : memref<13x64x32xf32, #tpu.memory_space<vmem>>, vector<1x64x32xf32>
    %295 = vector.shape_cast %294 : vector<1x64x32xf32> to vector<64x32xf32>
    %296 = arith.mulf %293, %295 : vector<64x32xf32>
    %c2_i32_259 = arith.constant 2 : i32
    %297 = tpu.dynamic_rotate %256 by %c2_i32_259 dim 0 : vector<64x32xf32>, i32 -> vector<64x32xf32>
    %c10_260 = arith.constant 10 : index
    %c0_261 = arith.constant 0 : index
    %c0_262 = arith.constant 0 : index
    %298 = vector.load %arg2[%c10_260, %c0_261, %c0_262] : memref<13x64x32xf32, #tpu.memory_space<vmem>>, vector<1x64x32xf32>
    %299 = vector.shape_cast %298 : vector<1x64x32xf32> to vector<64x32xf32>
    %300 = arith.mulf %297, %299 : vector<64x32xf32>
    %c1_i32_263 = arith.constant 1 : i32
    %301 = tpu.dynamic_rotate %256 by %c1_i32_263 dim 0 : vector<64x32xf32>, i32 -> vector<64x32xf32>
    %c11_264 = arith.constant 11 : index
    %c0_265 = arith.constant 0 : index
    %c0_266 = arith.constant 0 : index
    %302 = vector.load %arg2[%c11_264, %c0_265, %c0_266] : memref<13x64x32xf32, #tpu.memory_space<vmem>>, vector<1x64x32xf32>
    %303 = vector.shape_cast %302 : vector<1x64x32xf32> to vector<64x32xf32>
    %304 = arith.mulf %301, %303 : vector<64x32xf32>
    %c12_267 = arith.constant 12 : index
    %c0_268 = arith.constant 0 : index
    %c0_269 = arith.constant 0 : index
    %305 = vector.load %arg2[%c12_267, %c0_268, %c0_269] : memref<13x64x32xf32, #tpu.memory_space<vmem>>, vector<1x64x32xf32>
    %306 = vector.shape_cast %305 : vector<1x64x32xf32> to vector<64x32xf32>
    %307 = arith.mulf %256, %306 : vector<64x32xf32>
    %308 = tpu.concatenate %260, %264, %268, %272, %276, %280, %284, %288, %292, %296, %300, %304, %307, %8 in 1 : vector<64x32xf32>, vector<64x32xf32>, vector<64x32xf32>, vector<64x32xf32>, vector<64x32xf32>, vector<64x32xf32>, vector<64x32xf32>, vector<64x32xf32>, vector<64x32xf32>, vector<64x32xf32>, vector<64x32xf32>, vector<64x32xf32>, vector<64x32xf32>, vector<64x96xf32> -> vector<64x512xf32>
    %309 = arith.truncf %308 : vector<64x512xf32> to vector<64x512xbf16>
    %c4_270 = arith.constant 4 : index
    %c0_271 = arith.constant 0 : index
    %c0_272 = arith.constant 0 : index
    %310 = vector.load %arg5[%c4_270, %c0_271, %c0_272] : memref<6x512x32xbf16, #tpu.memory_space<vmem>>, vector<1x512x32xbf16>
    %311 = vector.shape_cast %310 : vector<1x512x32xbf16> to vector<512x32xbf16>
    %cst_273 = arith.constant dense<0.000000e+00> : vector<64x32xf32>
    %312 = tpu.matmul %309, %311, %cst_273 {dimension_numbers = #tpu.dot_dimension_numbers<[1], [0], [0], [1], [0, 0, 1, 1], [], []>} : vector<64x512xbf16>, vector<512x32xbf16>, vector<64x32xf32> -> vector<64x32xf32>
    %c4_274 = arith.constant 4 : index
    %c0_275 = arith.constant 0 : index
    %c0_276 = arith.constant 0 : index
    %313 = vector.load %arg6[%c4_274, %c0_275, %c0_276] : memref<6x1x32xf32, #tpu.memory_space<vmem>>, vector<1x1x32xf32>
    %314 = vector.shape_cast %313 : vector<1x1x32xf32> to vector<1x32xf32>
    %315 = vector.broadcast %314 : vector<1x32xf32> to vector<64x32xf32>
    %316 = arith.addf %312, %315 : vector<64x32xf32>
    %cst_277 = arith.constant 0.000000e+00 : f32
    %317 = vector.broadcast %cst_277 : f32 to vector<64x32xf32>
    %318 = arith.maximumf %316, %317 : vector<64x32xf32>
    %c18_i32_278 = arith.constant 18 : i32
    %319 = tpu.dynamic_rotate %318 by %c18_i32_278 dim 0 : vector<64x32xf32>, i32 -> vector<64x32xf32>
    %c0_279 = arith.constant 0 : index
    %c0_280 = arith.constant 0 : index
    %c0_281 = arith.constant 0 : index
    %320 = vector.load %arg2[%c0_279, %c0_280, %c0_281] : memref<13x64x32xf32, #tpu.memory_space<vmem>>, vector<1x64x32xf32>
    %321 = vector.shape_cast %320 : vector<1x64x32xf32> to vector<64x32xf32>
    %322 = arith.mulf %319, %321 : vector<64x32xf32>
    %c17_i32_282 = arith.constant 17 : i32
    %323 = tpu.dynamic_rotate %318 by %c17_i32_282 dim 0 : vector<64x32xf32>, i32 -> vector<64x32xf32>
    %c1_283 = arith.constant 1 : index
    %c0_284 = arith.constant 0 : index
    %c0_285 = arith.constant 0 : index
    %324 = vector.load %arg2[%c1_283, %c0_284, %c0_285] : memref<13x64x32xf32, #tpu.memory_space<vmem>>, vector<1x64x32xf32>
    %325 = vector.shape_cast %324 : vector<1x64x32xf32> to vector<64x32xf32>
    %326 = arith.mulf %323, %325 : vector<64x32xf32>
    %c16_i32_286 = arith.constant 16 : i32
    %327 = tpu.dynamic_rotate %318 by %c16_i32_286 dim 0 : vector<64x32xf32>, i32 -> vector<64x32xf32>
    %c2_287 = arith.constant 2 : index
    %c0_288 = arith.constant 0 : index
    %c0_289 = arith.constant 0 : index
    %328 = vector.load %arg2[%c2_287, %c0_288, %c0_289] : memref<13x64x32xf32, #tpu.memory_space<vmem>>, vector<1x64x32xf32>
    %329 = vector.shape_cast %328 : vector<1x64x32xf32> to vector<64x32xf32>
    %330 = arith.mulf %327, %329 : vector<64x32xf32>
    %c15_i32_290 = arith.constant 15 : i32
    %331 = tpu.dynamic_rotate %318 by %c15_i32_290 dim 0 : vector<64x32xf32>, i32 -> vector<64x32xf32>
    %c3_291 = arith.constant 3 : index
    %c0_292 = arith.constant 0 : index
    %c0_293 = arith.constant 0 : index
    %332 = vector.load %arg2[%c3_291, %c0_292, %c0_293] : memref<13x64x32xf32, #tpu.memory_space<vmem>>, vector<1x64x32xf32>
    %333 = vector.shape_cast %332 : vector<1x64x32xf32> to vector<64x32xf32>
    %334 = arith.mulf %331, %333 : vector<64x32xf32>
    %c14_i32_294 = arith.constant 14 : i32
    %335 = tpu.dynamic_rotate %318 by %c14_i32_294 dim 0 : vector<64x32xf32>, i32 -> vector<64x32xf32>
    %c4_295 = arith.constant 4 : index
    %c0_296 = arith.constant 0 : index
    %c0_297 = arith.constant 0 : index
    %336 = vector.load %arg2[%c4_295, %c0_296, %c0_297] : memref<13x64x32xf32, #tpu.memory_space<vmem>>, vector<1x64x32xf32>
    %337 = vector.shape_cast %336 : vector<1x64x32xf32> to vector<64x32xf32>
    %338 = arith.mulf %335, %337 : vector<64x32xf32>
    %c10_i32_298 = arith.constant 10 : i32
    %339 = tpu.dynamic_rotate %318 by %c10_i32_298 dim 0 : vector<64x32xf32>, i32 -> vector<64x32xf32>
    %c5_299 = arith.constant 5 : index
    %c0_300 = arith.constant 0 : index
    %c0_301 = arith.constant 0 : index
    %340 = vector.load %arg2[%c5_299, %c0_300, %c0_301] : memref<13x64x32xf32, #tpu.memory_space<vmem>>, vector<1x64x32xf32>
    %341 = vector.shape_cast %340 : vector<1x64x32xf32> to vector<64x32xf32>
    %342 = arith.mulf %339, %341 : vector<64x32xf32>
    %c9_i32_302 = arith.constant 9 : i32
    %343 = tpu.dynamic_rotate %318 by %c9_i32_302 dim 0 : vector<64x32xf32>, i32 -> vector<64x32xf32>
    %c6_303 = arith.constant 6 : index
    %c0_304 = arith.constant 0 : index
    %c0_305 = arith.constant 0 : index
    %344 = vector.load %arg2[%c6_303, %c0_304, %c0_305] : memref<13x64x32xf32, #tpu.memory_space<vmem>>, vector<1x64x32xf32>
    %345 = vector.shape_cast %344 : vector<1x64x32xf32> to vector<64x32xf32>
    %346 = arith.mulf %343, %345 : vector<64x32xf32>
    %c8_i32_306 = arith.constant 8 : i32
    %347 = tpu.dynamic_rotate %318 by %c8_i32_306 dim 0 : vector<64x32xf32>, i32 -> vector<64x32xf32>
    %c7_307 = arith.constant 7 : index
    %c0_308 = arith.constant 0 : index
    %c0_309 = arith.constant 0 : index
    %348 = vector.load %arg2[%c7_307, %c0_308, %c0_309] : memref<13x64x32xf32, #tpu.memory_space<vmem>>, vector<1x64x32xf32>
    %349 = vector.shape_cast %348 : vector<1x64x32xf32> to vector<64x32xf32>
    %350 = arith.mulf %347, %349 : vector<64x32xf32>
    %c7_i32_310 = arith.constant 7 : i32
    %351 = tpu.dynamic_rotate %318 by %c7_i32_310 dim 0 : vector<64x32xf32>, i32 -> vector<64x32xf32>
    %c8_311 = arith.constant 8 : index
    %c0_312 = arith.constant 0 : index
    %c0_313 = arith.constant 0 : index
    %352 = vector.load %arg2[%c8_311, %c0_312, %c0_313] : memref<13x64x32xf32, #tpu.memory_space<vmem>>, vector<1x64x32xf32>
    %353 = vector.shape_cast %352 : vector<1x64x32xf32> to vector<64x32xf32>
    %354 = arith.mulf %351, %353 : vector<64x32xf32>
    %c6_i32_314 = arith.constant 6 : i32
    %355 = tpu.dynamic_rotate %318 by %c6_i32_314 dim 0 : vector<64x32xf32>, i32 -> vector<64x32xf32>
    %c9_315 = arith.constant 9 : index
    %c0_316 = arith.constant 0 : index
    %c0_317 = arith.constant 0 : index
    %356 = vector.load %arg2[%c9_315, %c0_316, %c0_317] : memref<13x64x32xf32, #tpu.memory_space<vmem>>, vector<1x64x32xf32>
    %357 = vector.shape_cast %356 : vector<1x64x32xf32> to vector<64x32xf32>
    %358 = arith.mulf %355, %357 : vector<64x32xf32>
    %c2_i32_318 = arith.constant 2 : i32
    %359 = tpu.dynamic_rotate %318 by %c2_i32_318 dim 0 : vector<64x32xf32>, i32 -> vector<64x32xf32>
    %c10_319 = arith.constant 10 : index
    %c0_320 = arith.constant 0 : index
    %c0_321 = arith.constant 0 : index
    %360 = vector.load %arg2[%c10_319, %c0_320, %c0_321] : memref<13x64x32xf32, #tpu.memory_space<vmem>>, vector<1x64x32xf32>
    %361 = vector.shape_cast %360 : vector<1x64x32xf32> to vector<64x32xf32>
    %362 = arith.mulf %359, %361 : vector<64x32xf32>
    %c1_i32_322 = arith.constant 1 : i32
    %363 = tpu.dynamic_rotate %318 by %c1_i32_322 dim 0 : vector<64x32xf32>, i32 -> vector<64x32xf32>
    %c11_323 = arith.constant 11 : index
    %c0_324 = arith.constant 0 : index
    %c0_325 = arith.constant 0 : index
    %364 = vector.load %arg2[%c11_323, %c0_324, %c0_325] : memref<13x64x32xf32, #tpu.memory_space<vmem>>, vector<1x64x32xf32>
    %365 = vector.shape_cast %364 : vector<1x64x32xf32> to vector<64x32xf32>
    %366 = arith.mulf %363, %365 : vector<64x32xf32>
    %c12_326 = arith.constant 12 : index
    %c0_327 = arith.constant 0 : index
    %c0_328 = arith.constant 0 : index
    %367 = vector.load %arg2[%c12_326, %c0_327, %c0_328] : memref<13x64x32xf32, #tpu.memory_space<vmem>>, vector<1x64x32xf32>
    %368 = vector.shape_cast %367 : vector<1x64x32xf32> to vector<64x32xf32>
    %369 = arith.mulf %318, %368 : vector<64x32xf32>
    %370 = tpu.concatenate %322, %326, %330, %334, %338, %342, %346, %350, %354, %358, %362, %366, %369, %8 in 1 : vector<64x32xf32>, vector<64x32xf32>, vector<64x32xf32>, vector<64x32xf32>, vector<64x32xf32>, vector<64x32xf32>, vector<64x32xf32>, vector<64x32xf32>, vector<64x32xf32>, vector<64x32xf32>, vector<64x32xf32>, vector<64x32xf32>, vector<64x32xf32>, vector<64x96xf32> -> vector<64x512xf32>
    %371 = arith.truncf %370 : vector<64x512xf32> to vector<64x512xbf16>
    %c5_329 = arith.constant 5 : index
    %c0_330 = arith.constant 0 : index
    %c0_331 = arith.constant 0 : index
    %372 = vector.load %arg5[%c5_329, %c0_330, %c0_331] : memref<6x512x32xbf16, #tpu.memory_space<vmem>>, vector<1x512x32xbf16>
    %373 = vector.shape_cast %372 : vector<1x512x32xbf16> to vector<512x32xbf16>
    %cst_332 = arith.constant dense<0.000000e+00> : vector<64x32xf32>
    %374 = tpu.matmul %371, %373, %cst_332 {dimension_numbers = #tpu.dot_dimension_numbers<[1], [0], [0], [1], [0, 0, 1, 1], [], []>} : vector<64x512xbf16>, vector<512x32xbf16>, vector<64x32xf32> -> vector<64x32xf32>
    %c5_333 = arith.constant 5 : index
    %c0_334 = arith.constant 0 : index
    %c0_335 = arith.constant 0 : index
    %375 = vector.load %arg6[%c5_333, %c0_334, %c0_335] : memref<6x1x32xf32, #tpu.memory_space<vmem>>, vector<1x1x32xf32>
    %376 = vector.shape_cast %375 : vector<1x1x32xf32> to vector<1x32xf32>
    %377 = vector.broadcast %376 : vector<1x32xf32> to vector<64x32xf32>
    %378 = arith.addf %374, %377 : vector<64x32xf32>
    %cst_336 = arith.constant 0.000000e+00 : f32
    %379 = vector.broadcast %cst_336 : f32 to vector<64x32xf32>
    %380 = arith.maximumf %378, %379 : vector<64x32xf32>
    %381 = arith.truncf %380 : vector<64x32xf32> to vector<64x32xbf16>
    %c0_337 = arith.constant 0 : index
    %c0_338 = arith.constant 0 : index
    %382 = vector.load %arg7[%c0_337, %c0_338] : memref<32x128xbf16, #tpu.memory_space<vmem>>, vector<32x128xbf16>
    %cst_339 = arith.constant dense<0.000000e+00> : vector<64x128xf32>
    %383 = tpu.matmul %381, %382, %cst_339 {dimension_numbers = #tpu.dot_dimension_numbers<[1], [0], [0], [1], [0, 0, 1, 1], [], []>} : vector<64x32xbf16>, vector<32x128xbf16>, vector<64x128xf32> -> vector<64x128xf32>
    %c0_340 = arith.constant 0 : index
    %c0_341 = arith.constant 0 : index
    %384 = vector.load %arg8[%c0_340, %c0_341] : memref<1x128xf32, #tpu.memory_space<vmem>>, vector<1x128xf32>
    %385 = vector.broadcast %384 : vector<1x128xf32> to vector<64x128xf32>
    %386 = arith.addf %383, %385 : vector<64x128xf32>
    %c0_342 = arith.constant 0 : index
    %c0_343 = arith.constant 0 : index
    %c0_344 = arith.constant 0 : index
    %387 = vector.load %arg9[%c0_342, %c0_343, %c0_344] : memref<1x64x128xf32, #tpu.memory_space<vmem>>, vector<1x64x128xf32>
    %388 = vector.shape_cast %387 : vector<1x64x128xf32> to vector<64x128xf32>
    %389 = vector.shape_cast %386 : vector<64x128xf32> to vector<1x64x128xf32>
    tpu.vector_store %arg9[%c0_342, %c0_343, %c0_344], %389 {strides = array<i32>} : memref<1x64x128xf32, #tpu.memory_space<vmem>>, vector<1x64x128xf32>,
    return
  }
  func.func @transform_0(%arg0: i32) -> (i32, i32, i32) {
    %c0_i32 = arith.constant 0 : i32
    %c0_i32_0 = arith.constant 0 : i32
    %c0_i32_1 = arith.constant 0 : i32
    return %arg0, %c0_i32, %c0_i32_0 : i32, i32, i32
  }
  func.func @transform_1(%arg0: i32) -> (i32, i32, i32) {
    %c0_i32 = arith.constant 0 : i32
    %c0_i32_0 = arith.constant 0 : i32
    %c0_i32_1 = arith.constant 0 : i32
    %c0_i32_2 = arith.constant 0 : i32
    return %c0_i32, %c0_i32_0, %c0_i32_1 : i32, i32, i32
  }
  func.func @transform_2(%arg0: i32) -> (i32, i32) {
    %c0_i32 = arith.constant 0 : i32
    %c0_i32_0 = arith.constant 0 : i32
    %c0_i32_1 = arith.constant 0 : i32
    return %c0_i32, %c0_i32_0 : i32, i32
  }
  func.func @transform_3(%arg0: i32) -> (i32, i32) {
    %c0_i32 = arith.constant 0 : i32
    %c0_i32_0 = arith.constant 0 : i32
    %c0_i32_1 = arith.constant 0 : i32
    return %c0_i32, %c0_i32_0 : i32, i32
  }
  func.func @transform_4(%arg0: i32) -> (i32, i32, i32) {
    %c0_i32 = arith.constant 0 : i32
    %c0_i32_0 = arith.constant 0 : i32
    %c0_i32_1 = arith.constant 0 : i32
    %c0_i32_2 = arith.constant 0 : i32
    return %c0_i32, %c0_i32_0, %c0_i32_1 : i32, i32, i32
  }
  func.func @transform_5(%arg0: i32) -> (i32, i32, i32) {
    %c0_i32 = arith.constant 0 : i32
    %c0_i32_0 = arith.constant 0 : i32
    %c0_i32_1 = arith.constant 0 : i32
    %c0_i32_2 = arith.constant 0 : i32
    return %c0_i32, %c0_i32_0, %c0_i32_1 : i32, i32, i32
  }
  func.func @transform_6(%arg0: i32) -> (i32, i32) {
    %c0_i32 = arith.constant 0 : i32
    %c0_i32_0 = arith.constant 0 : i32
    %c0_i32_1 = arith.constant 0 : i32
    return %c0_i32, %c0_i32_0 : i32, i32
  }
  func.func @transform_7(%arg0: i32) -> (i32, i32) {
    %c0_i32 = arith.constant 0 : i32
    %c0_i32_0 = arith.constant 0 : i32
    %c0_i32_1 = arith.constant 0 : i32
    return %c0_i32, %c0_i32_0 : i32, i32
  }
  func.func @transform_8(%arg0: i32) -> (i32, i32, i32) {
    %c0_i32 = arith.constant 0 : i32
    %c0_i32_0 = arith.constant 0 : i32
    %c0_i32_1 = arith.constant 0 : i32
    return %arg0, %c0_i32, %c0_i32_0 : i32, i32, i32
  }
}

</mosaic_0001>

<llo_original>
// kernel: tpu_custom_call.1
$region0: #{tpu_custom_call.1}
  #allocation0 [shape = 'u32[]', space=smem, size = 0x4, offset = 0x4, fixed_abs, tag = 'smem constant byte address 0x4 - core index']
  #allocation1 [shape = 'u32[72,128]{1,0:T(1,128)}', space=vmem, size = 0x9000, scoped, tag = 'internal scratch']
  %s0 = inlined_call_operand.vmem [shape: f32[2,64,64], index: 0, kind: input, shape index: {}]
  %s1 = inlined_call_operand.vmem [shape: f32[13,64,32], index: 1, kind: input, shape index: {}]
  %s2 = inlined_call_operand.vmem [shape: bf16[64,32], index: 2, kind: input, shape index: {}]
  %s3 = inlined_call_operand.vmem [shape: f32[1,32], index: 3, kind: input, shape index: {}]
  %s4 = inlined_call_operand.vmem [shape: bf16[6,512,32], index: 4, kind: input, shape index: {}]
  %s5 = inlined_call_operand.vmem [shape: f32[6,1,32], index: 5, kind: input, shape index: {}]
  %s6 = inlined_call_operand.vmem [shape: bf16[32,128], index: 6, kind: input, shape index: {}]
  %s7 = inlined_call_operand.vmem [shape: f32[1,128], index: 7, kind: input, shape index: {}]
  %s8 = inlined_call_operand.hbm [shape: f32[2,64,128], index: 8, kind: output, shape index: {}]
  %s9 = sld [smem:[#allocation0]]
  $region65: #{tpu_custom_call.1} parent=0
    _
  %s11 = ssub.s32 1, %s9
  %s12 = scalar_select 0, %s11, %s9
  $region1: #{tpu_custom_call.1} parent=0
    #allocation2 [shape = 'u8[65536]{0}', space=vmem, size = 0x10000, scoped, tag = 'output window, operand 0']
    #allocation3 [shape = 's32[2]{0}', space=sflag, size = 0x8, scoped, tag = 'scoped memory for tpu_custom_call.1']
    %13 = vsyncpa [#allocation3], 0
    %s14 = scalar_lea.sflag [#allocation3], 1
    %15 = vsyncpa %s14, 0
    loop: start=0, step=1, limit=4
    $region2: #{tpu_custom_call.1} parent=1 // loop_pre_header
      _
    $region3: #{tpu_custom_call.1} parent=1 // loop_header
      %s17 = sphi 0, %s21
      %p18 = scmp.ge.s32.totalorder %s17, 4
      %s27 = sphi 0, %s29
      %s30 = sphi 0, %s27
      %s31 = sphi 0, %s30
      %s47 = sphi 0, %s31
      %s51 = sphi 0, %s51
      %s53 = sphi 0, %s51
      %s54 = sphi 0, %s53
      %s68 = sphi 0, %s54
      %s72 = sphi 0, %s72
      %s74 = sphi 0, %s72
      %s75 = sphi 0, %s74
      %s89 = sphi 0, %s75
      %s93 = sphi 0, %s93
      %s95 = sphi 0, %s93
      %s96 = sphi 0, %s95
      %s110 = sphi 0, %s96
      %s114 = sphi 0, %s114
      %s116 = sphi 0, %s114
      %s117 = sphi 0, %s116
      %s131 = sphi 0, %s117
      %s135 = sphi 0, %s135
      %s137 = sphi 0, %s135
      %s138 = sphi 0, %s137
      %s152 = sphi 0, %s138
      %s156 = sphi 0, %s156
      %s158 = sphi 0, %s156
      %s159 = sphi 0, %s158
      %s173 = sphi 0, %s159
      %s177 = sphi 0, %s177
      %s179 = sphi 0, %s177
      %s180 = sphi 0, %s179
      %s194 = sphi 0, %s180
      %s200 = sphi 0, %s202
      %s203 = sphi 0, %s200
      %s204 = sphi 0, %s203
      %s220 = sphi 0, %s204
    $region4: #{tpu_custom_call.1} parent=1 // loop_header_branch
      %20 = sbr.rel (%p18) target = $region8
    $region5: #{tpu_custom_call.1} parent=1 // loop_body
      %s22 = ssub.s32 %s17, 1
      %s23 = ssub.s32 %s17, 2
      %s24 = sadd.s32 %s17, 1
      %s25 = ssub.s32 %s17, %s24
      %p26 = scmp.eq.s32.totalorder %s25, 0
      %s28 = sadd.s32 %s27, 1
      %s29 = scalar_select %p26, %s27, %s28
      %p32 = pneg %p26
      %p33 = scmp.eq.s32.totalorder %s17, 1
      %p34 = por %p32, %p33
      %p35 = scmp.ne.s32.totalorder %s27, %s30
      %p36 = scmp.eq.s32.totalorder %s17, 0
      %p37 = por %p35, %p36
      %p38 = scmp.ne.s32.totalorder %s27, %s30
      %p39 = scmp.eq.s32.totalorder %s22, 1
      %p40 = por %p38, %p39
      %p41 = scmp.ne.s32.totalorder %s30, %s31
      %p42 = scmp.eq.s32.totalorder %s22, 0
      %p43 = por %p41, %p42
      %p44 = scmp.ne.s32.totalorder %s30, %s31
      %p45 = scmp.eq.s32.totalorder %s23, 1
      %p46 = por %p44, %p45
      %p48 = scmp.ne.s32.totalorder %s31, %s47
      %p49 = scmp.eq.s32.totalorder %s23, 0
      %p50 = por %p48, %p49
      %s52 = sadd.s32 %s51, 1
      %p55 = scmp.eq.s32.totalorder %s17, 1
      %p56 = scmp.ne.s32.totalorder %s51, %s53
      %p57 = scmp.eq.s32.totalorder %s17, 0
      %p58 = por %p56, %p57
      %p59 = scmp.ne.s32.totalorder %s51, %s53
      %p60 = scmp.eq.s32.totalorder %s22, 1
      %p61 = por %p59, %p60
      %p62 = scmp.ne.s32.totalorder %s53, %s54
      %p63 = scmp.eq.s32.totalorder %s22, 0
      %p64 = por %p62, %p63
      %p65 = scmp.ne.s32.totalorder %s53, %s54
      %p66 = scmp.eq.s32.totalorder %s23, 1
      %p67 = por %p65, %p66
      %p69 = scmp.ne.s32.totalorder %s54, %s68
      %p70 = scmp.eq.s32.totalorder %s23, 0
      %p71 = por %p69, %p70
      %s73 = sadd.s32 %s72, 1
      %p76 = scmp.eq.s32.totalorder %s17, 1
      %p77 = scmp.ne.s32.totalorder %s72, %s74
      %p78 = scmp.eq.s32.totalorder %s17, 0
      %p79 = por %p77, %p78
      %p80 = scmp.ne.s32.totalorder %s72, %s74
      %p81 = scmp.eq.s32.totalorder %s22, 1
      %p82 = por %p80, %p81
      %p83 = scmp.ne.s32.totalorder %s74, %s75
      %p84 = scmp.eq.s32.totalorder %s22, 0
      %p85 = por %p83, %p84
      %p86 = scmp.ne.s32.totalorder %s74, %s75
      %p87 = scmp.eq.s32.totalorder %s23, 1
      %p88 = por %p86, %p87
      %p90 = scmp.ne.s32.totalorder %s75, %s89
      %p91 = scmp.eq.s32.totalorder %s23, 0
      %p92 = por %p90, %p91
      %s94 = sadd.s32 %s93, 1
      %p97 = scmp.eq.s32.totalorder %s17, 1
      %p98 = scmp.ne.s32.totalorder %s93, %s95
      %p99 = scmp.eq.s32.totalorder %s17, 0
      %p100 = por %p98, %p99
      %p101 = scmp.ne.s32.totalorder %s93, %s95
      %p102 = scmp.eq.s32.totalorder %s22, 1
      %p103 = por %p101, %p102
      %p104 = scmp.ne.s32.totalorder %s95, %s96
      %p105 = scmp.eq.s32.totalorder %s22, 0
      %p106 = por %p104, %p105
      %p107 = scmp.ne.s32.totalorder %s95, %s96
      %p108 = scmp.eq.s32.totalorder %s23, 1
      %p109 = por %p107, %p108
      %p111 = scmp.ne.s32.totalorder %s96, %s110
      %p112 = scmp.eq.s32.totalorder %s23, 0
      %p113 = por %p111, %p112
      %s115 = sadd.s32 %s114, 1
      %p118 = scmp.eq.s32.totalorder %s17, 1
      %p119 = scmp.ne.s32.totalorder %s114, %s116
      %p120 = scmp.eq.s32.totalorder %s17, 0
      %p121 = por %p119, %p120
      %p122 = scmp.ne.s32.totalorder %s114, %s116
      %p123 = scmp.eq.s32.totalorder %s22, 1
      %p124 = por %p122, %p123
      %p125 = scmp.ne.s32.totalorder %s116, %s117
      %p126 = scmp.eq.s32.totalorder %s22, 0
      %p127 = por %p125, %p126
      %p128 = scmp.ne.s32.totalorder %s116, %s117
      %p129 = scmp.eq.s32.totalorder %s23, 1
      %p130 = por %p128, %p129
      %p132 = scmp.ne.s32.totalorder %s117, %s131
      %p133 = scmp.eq.s32.totalorder %s23, 0
      %p134 = por %p132, %p133
      %s136 = sadd.s32 %s135, 1
      %p139 = scmp.eq.s32.totalorder %s17, 1
      %p140 = scmp.ne.s32.totalorder %s135, %s137
      %p141 = scmp.eq.s32.totalorder %s17, 0
      %p142 = por %p140, %p141
      %p143 = scmp.ne.s32.totalorder %s135, %s137
      %p144 = scmp.eq.s32.totalorder %s22, 1
      %p145 = por %p143, %p144
      %p146 = scmp.ne.s32.totalorder %s137, %s138
      %p147 = scmp.eq.s32.totalorder %s22, 0
      %p148 = por %p146, %p147
      %p149 = scmp.ne.s32.totalorder %s137, %s138
      %p150 = scmp.eq.s32.totalorder %s23, 1
      %p151 = por %p149, %p150
      %p153 = scmp.ne.s32.totalorder %s138, %s152
      %p154 = scmp.eq.s32.totalorder %s23, 0
      %p155 = por %p153, %p154
      %s157 = sadd.s32 %s156, 1
      %p160 = scmp.eq.s32.totalorder %s17, 1
      %p161 = scmp.ne.s32.totalorder %s156, %s158
      %p162 = scmp.eq.s32.totalorder %s17, 0
      %p163 = por %p161, %p162
      %p164 = scmp.ne.s32.totalorder %s156, %s158
      %p165 = scmp.eq.s32.totalorder %s22, 1
      %p166 = por %p164, %p165
      %p167 = scmp.ne.s32.totalorder %s158, %s159
      %p168 = scmp.eq.s32.totalorder %s22, 0
      %p169 = por %p167, %p168
      %p170 = scmp.ne.s32.totalorder %s158, %s159
      %p171 = scmp.eq.s32.totalorder %s23, 1
      %p172 = por %p170, %p171
      %p174 = scmp.ne.s32.totalorder %s159, %s173
      %p175 = scmp.eq.s32.totalorder %s23, 0
      %p176 = por %p174, %p175
      %s178 = sadd.s32 %s177, 1
      %p181 = scmp.eq.s32.totalorder %s17, 1
      %p182 = scmp.ne.s32.totalorder %s177, %s179
      %p183 = scmp.eq.s32.totalorder %s17, 0
      %p184 = por %p182, %p183
      %p185 = scmp.ne.s32.totalorder %s177, %s179
      %p186 = scmp.eq.s32.totalorder %s22, 1
      %p187 = por %p185, %p186
      %p188 = scmp.ne.s32.totalorder %s179, %s180
      %p189 = scmp.eq.s32.totalorder %s22, 0
      %p190 = por %p188, %p189
      %p191 = scmp.ne.s32.totalorder %s179, %s180
      %p192 = scmp.eq.s32.totalorder %s23, 1
      %p193 = por %p191, %p192
      %p195 = scmp.ne.s32.totalorder %s180, %s194
      %p196 = scmp.eq.s32.totalorder %s23, 0
      %p197 = por %p195, %p196
      %s198 = ssub.s32 %s17, %s24
      %p199 = scmp.eq.s32.totalorder %s198, 0
      %s201 = sadd.s32 %s200, 1
      %s202 = scalar_select %p199, %s200, %s201
      %p205 = pneg %p199
      %p206 = scmp.eq.s32.totalorder %s17, 1
      %p207 = por %p205, %p206
      %p208 = scmp.ne.s32.totalorder %s200, %s203
      %p209 = scmp.eq.s32.totalorder %s17, 0
      %p210 = por %p208, %p209
      %p211 = scmp.ne.s32.totalorder %s200, %s203
      %p212 = scmp.eq.s32.totalorder %s22, 1
      %p213 = por %p211, %p212
      %p214 = scmp.ne.s32.totalorder %s203, %s204
      %p215 = scmp.eq.s32.totalorder %s22, 0
      %p216 = por %p214, %p215
      %p217 = scmp.ne.s32.totalorder %s203, %s204
      %p218 = scmp.eq.s32.totalorder %s23, 1
      %p219 = por %p217, %p218
      %p221 = scmp.ne.s32.totalorder %s204, %s220
      %p222 = scmp.eq.s32.totalorder %s23, 0
      %p223 = por %p221, %p222
      %p224 = scmp.le.s32.totalorder 1, %s17
      %p225 = scmp.lt.s32.totalorder %s17, 3
      %p226 = pnand %p224, %p225
      %p227 = pneg %p226
      // Predicated region
      $region9: #{tpu_custom_call.1} parent=5 // pred_check
        _
      $region10: #{tpu_custom_call.1} parent=5 // pred_check_branch
        %229 = sbr.rel (%p226) target = $region12
      $region11: #{tpu_custom_call.1} parent=5 // pred_region
        %s230 = ssub.s32 %s17, 1
        // Predicated region
        $region13: #{tpu_custom_call.1} parent=11 // pred_check
          %p231 = pneg %p64
        $region14: #{tpu_custom_call.1} parent=11 // pred_check_branch
          %233 = sbr.rel (%p231) target = $region16
        $region15: #{tpu_custom_call.1} parent=11 // pred_region
          _
        $region16: #{tpu_custom_call.1} parent=11 // pred_fallthru
          _
        // Predicated region
        $region17: #{tpu_custom_call.1} parent=11 // pred_check
          %p234 = pneg %p85
        $region18: #{tpu_custom_call.1} parent=11 // pred_check_branch
          %236 = sbr.rel (%p234) target = $region20
        $region19: #{tpu_custom_call.1} parent=11 // pred_region
          _
        $region20: #{tpu_custom_call.1} parent=11 // pred_fallthru
          _
        // Predicated region
        $region21: #{tpu_custom_call.1} parent=11 // pred_check
          %p237 = pneg %p106
        $region22: #{tpu_custom_call.1} parent=11 // pred_check_branch
          %239 = sbr.rel (%p237) target = $region24
        $region23: #{tpu_custom_call.1} parent=11 // pred_region
          _
        $region24: #{tpu_custom_call.1} parent=11 // pred_fallthru
          _
        // Predicated region
        $region25: #{tpu_custom_call.1} parent=11 // pred_check
          %p240 = pneg %p127
        $region26: #{tpu_custom_call.1} parent=11 // pred_check_branch
          %242 = sbr.rel (%p240) target = $region28
        $region27: #{tpu_custom_call.1} parent=11 // pred_region
          _
        $region28: #{tpu_custom_call.1} parent=11 // pred_fallthru
          _
        // Predicated region
        $region29: #{tpu_custom_call.1} parent=11 // pred_check
          %p243 = pneg %p148
        $region30: #{tpu_custom_call.1} parent=11 // pred_check_branch
          %245 = sbr.rel (%p243) target = $region32
        $region31: #{tpu_custom_call.1} parent=11 // pred_region
          _
        $region32: #{tpu_custom_call.1} parent=11 // pred_fallthru
          _
        // Predicated region
        $region33: #{tpu_custom_call.1} parent=11 // pred_check
          %p246 = pneg %p169
        $region34: #{tpu_custom_call.1} parent=11 // pred_check_branch
          %248 = sbr.rel (%p246) target = $region36
        $region35: #{tpu_custom_call.1} parent=11 // pred_region
          _
        $region36: #{tpu_custom_call.1} parent=11 // pred_fallthru
          _
        // Predicated region
        $region37: #{tpu_custom_call.1} parent=11 // pred_check
          %p249 = pneg %p190
        $region38: #{tpu_custom_call.1} parent=11 // pred_check_branch
          %251 = sbr.rel (%p249) target = $region40
        $region39: #{tpu_custom_call.1} parent=11 // pred_region
          _
        $region40: #{tpu_custom_call.1} parent=11 // pred_fallthru
          _
      $region12: #{tpu_custom_call.1} parent=5 // pred_fallthru
        _
      %p252 = scmp.lt.s32.totalorder %s17, 2
      // Predicated region
      $region41: #{tpu_custom_call.1} parent=5 // pred_check
        %p253 = pneg %p252
      $region42: #{tpu_custom_call.1} parent=5 // pred_check_branch
        %255 = sbr.rel (%p253) target = $region44
      $region43: #{tpu_custom_call.1} parent=5 // pred_region
        // Predicated region
        $region45: #{tpu_custom_call.1} parent=43 // pred_check
          %p256 = pneg %p37
        $region46: #{tpu_custom_call.1} parent=43 // pred_check_branch
          %258 = sbr.rel (%p256) target = $region48
        $region47: #{tpu_custom_call.1} parent=43 // pred_region
          %p259 = scmp.lt.s32.totalorder %s17, 1
          %s260 = scalar_select %p259, %s17, 1
          %s261 = smul.addr %s260, 8
          %s262 = smul.addr %s261, 8
          %s263 = scalar_lea.vmem %s0, %s262
        $region48: #{tpu_custom_call.1} parent=43 // pred_fallthru
          _
      $region44: #{tpu_custom_call.1} parent=5 // pred_fallthru
        _
      %p264 = scmp.le.s32.totalorder 1, %s17
      %p265 = scmp.lt.s32.totalorder %s17, 3
      %p266 = pnand %p264, %p265
      %p267 = pneg %p266
      // Predicated region
      $region49: #{tpu_custom_call.1} parent=5 // pred_check
        _
      $region50: #{tpu_custom_call.1} parent=5 // pred_check_branch
        %269 = sbr.rel (%p266) target = $region52
      $region51: #{tpu_custom_call.1} parent=5 // pred_region
        %s270 = ssub.s32 %s17, 1
        %p271 = scmp.lt.s32.totalorder %s22, 1
        %s272 = scalar_select %p271, %s22, 1
        %s273 = smul.addr %s272, 8
        %s274 = smul.addr %s273, 8
        %s275 = scalar_lea.vmem %s0, %s274
        %p276 = pneg %p43
        %p277 = pneg %p40
        %p278 = pneg %p64
        %p279 = pneg %p61
        %p280 = pneg %p85
        %p281 = pneg %p82
        %p282 = pneg %p106
        %p283 = pneg %p103
        %p284 = pneg %p127
        %p285 = pneg %p124
        %p286 = pneg %p148
        %p287 = pneg %p145
        %p288 = pneg %p169
        %p289 = pneg %p166
        %p290 = pneg %p190
        %p291 = pneg %p187
        %p292 = pneg %p216
        %p293 = pneg %p213
        %s294 = sand.u32 %s203, 1
        %s295 = scalar_lea.sflag [#allocation3], %s294
        %s296 = sand.u32 %s203, 1
        %s297 = smul.addr %s296, 64
        %s298 = scalar_lea.vmem [#allocation2], %s297
        %p299 = scmp.lt.s32.totalorder %s22, 1
        %s300 = scalar_select %p299, %s22, 1
        %s301 = smul.addr %s300, 8
        %s302 = smul.addr %s301, 8
        %s303 = scalar_lea.vmem %s0, %s302
        %v305 = vld [vmem:[%s303] sm:$0xff]
        %v306 = vld [vmem:[%s303 + $0x8] sm:$0xff]
        %v307 = vld [vmem:[%s303 + $0x10] sm:$0xff]
        %v308 = vld [vmem:[%s303 + $0x18] sm:$0xff]
        %v309 = vld [vmem:[%s303 + $0x20] sm:$0xff]
        %v310 = vld [vmem:[%s303 + $0x28] sm:$0xff]
        %v311 = vld [vmem:[%s303 + $0x30] sm:$0xff]
        %v312 = vld [vmem:[%s303 + $0x38] sm:$0xff]
        %v313 = vpack.c.bf16 %v306, %v305
        %v314 = vpack.c.bf16 %v308, %v307
        %v315 = vpack.c.bf16 %v310, %v309
        %v316 = vpack.c.bf16 %v312, %v311
        %v317 = vld [vmem:[%s2] sm:$0xf]
        %v318 = vld [vmem:[%s2 + $0x4] sm:$0xf]
        %v319 = vld [vmem:[%s2 + $0x8] sm:$0xf]
        %v320 = vld [vmem:[%s2 + $0xc] sm:$0xf]
        %v321 = vld [vmem:[%s2 + $0x10] sm:$0xf]
        %v322 = vld [vmem:[%s2 + $0x14] sm:$0xf]
        %v323 = vld [vmem:[%s2 + $0x18] sm:$0xf]
        %v324 = vld [vmem:[%s2 + $0x1c] sm:$0xf]
        %v325 = vld [vmem:[%s3] sm:$0x1]
        %v327 = vperm.slane %v325, 0
        %v337 = vunpack.c.l.b16 %v317
        %v338 = vunpack.c.l.b16 %v318
        %v339 = vunpack.c.l.b16 %v319
        %v340 = vunpack.c.l.b16 %v320
        %v341 = vunpack.c.l.b16 %v321
        %v342 = vunpack.c.l.b16 %v322
        %v343 = vunpack.c.l.b16 %v323
        %v344 = vunpack.c.l.b16 %v324
        %v345 = vpack.c.b16 %v338, %v337
        %v346 = vpack.c.b16 %v340, %v339
        %v347 = vpack.c.b16 %v342, %v341
        %v348 = vpack.c.b16 %v344, %v343
        %vm353 = vcmask 523264
        %v355 = vsel %vm353, %v313, 0
        %v358 = vsel %vm353, %v314, 0
        %v361 = vsel %vm353, %v315, 0
        %v364 = vsel %vm353, %v316, 0
        %366 = vmatpush.bf16.msra.mxu0 0
        %367 = vmatpush.bf16.msra.mxu0 0
        %368 = vmatpush.bf16.msra.mxu0 0
        %369 = vmatpush.bf16.msra.mxu0 0
        %370 = vmatpush.bf16.msra.mxu0 %v348
        %371 = vmatpush.bf16.msra.mxu0 %v347
        %372 = vmatpush.bf16.msra.mxu0 %v346
        %373 = vmatpush.bf16.msra.mxu0 %v345
        %374 = vmatmul.bf16.gmra.mxu0 %v355
        %v375 = vpop.f32.mrf.mxu0
        %v376 = vadd.f32 %v327, %v375
        %v377 = vpop.f32.mrf.mxu0
        %v378 = vadd.f32 %v327, %v377
        %379 = vmatmul.bf16.gmra.mxu0 %v358
        %v380 = vpop.f32.mrf.mxu0
        %v381 = vadd.f32 %v327, %v380
        %v382 = vpop.f32.mrf.mxu0
        %v383 = vadd.f32 %v327, %v382
        %384 = vmatmul.bf16.gmra.mxu0 %v361
        %v385 = vpop.f32.mrf.mxu0
        %v386 = vadd.f32 %v327, %v385
        %v387 = vpop.f32.mrf.mxu0
        %v388 = vadd.f32 %v327, %v387
        %389 = vmatmul.bf16.gmra.mxu0 %v364
        %v390 = vpop.f32.mrf.mxu0
        %v391 = vadd.f32 %v327, %v390
        %v392 = vpop.f32.mrf.mxu0
        %v393 = vadd.f32 %v327, %v392
        %394 = vdwg.mxu0
        %v395 = vrot.slane %v376, 6
        %v396 = vrot.slane %v378, 6
        %v397 = vrot.slane %v381, 6
        %v398 = vrot.slane %v383, 6
        %v399 = vrot.slane %v386, 6
        %v400 = vrot.slane %v388, 6
        %v401 = vrot.slane %v391, 6
        %v402 = vrot.slane %v393, 6
        %v403 = vlaneseq
        %v404 = vshrl.u32 %v403, 7
        %vm405 = vcmp.lt.s32.totalorder %v404, 2
        %v406 = vsel %vm405, %v401, %v402
        %v407 = vsel %vm405, %v400, %v401
        %v408 = vsel %vm405, %v399, %v400
        %v409 = vsel %vm405, %v398, %v399
        %v410 = vsel %vm405, %v397, %v398
        %v411 = vsel %vm405, %v396, %v397
        %v412 = vsel %vm405, %v395, %v396
        %v413 = vsel %vm405, %v402, %v395
        %v414 = vld [vmem:[%s1] sm:$0xff]
        %v415 = vld [vmem:[%s1 + $0x8] sm:$0xff]
        %v416 = vld [vmem:[%s1 + $0x10] sm:$0xff]
        %v417 = vld [vmem:[%s1 + $0x18] sm:$0xff]
        %v418 = vld [vmem:[%s1 + $0x20] sm:$0xff]
        %v419 = vld [vmem:[%s1 + $0x28] sm:$0xff]
        %v420 = vld [vmem:[%s1 + $0x30] sm:$0xff]
        %v421 = vld [vmem:[%s1 + $0x38] sm:$0xff]
        %v422 = vmul.f32 %v407, %v414
        %v423 = vmul.f32 %v406, %v415
        %v424 = vmul.f32 %v413, %v416
        %v425 = vmul.f32 %v412, %v417
        %v426 = vmul.f32 %v411, %v418
        %v427 = vmul.f32 %v410, %v419
        %v428 = vmul.f32 %v409, %v420
        %v429 = vmul.f32 %v408, %v421
        %v430 = vrot.slane %v376, 7
        %v431 = vrot.slane %v378, 7
        %v432 = vrot.slane %v381, 7
        %v433 = vrot.slane %v383, 7
        %v434 = vrot.slane %v386, 7
        %v435 = vrot.slane %v388, 7
        %v436 = vrot.slane %v391, 7
        %v437 = vrot.slane %v393, 7
        %vm438 = vcmp.lt.s32.totalorder %v404, 1
        %v439 = vsel %vm438, %v436, %v437
        %v440 = vsel %vm438, %v435, %v436
        %v441 = vsel %vm438, %v434, %v435
        %v442 = vsel %vm438, %v433, %v434
        %v443 = vsel %vm438, %v432, %v433
        %v444 = vsel %vm438, %v431, %v432
        %v445 = vsel %vm438, %v430, %v431
        %v446 = vsel %vm438, %v437, %v430
        %s447 = scalar_lea.vmem %s1, 64
        %v448 = vld [vmem:[%s447] sm:$0xff]
        %v449 = vld [vmem:[%s447 + $0x8] sm:$0xff]
        %v450 = vld [vmem:[%s447 + $0x10] sm:$0xff]
        %v451 = vld [vmem:[%s447 + $0x18] sm:$0xff]
        %v452 = vld [vmem:[%s447 + $0x20] sm:$0xff]
        %v453 = vld [vmem:[%s447 + $0x28] sm:$0xff]
        %v454 = vld [vmem:[%s447 + $0x30] sm:$0xff]
        %v455 = vld [vmem:[%s447 + $0x38] sm:$0xff]
        %v456 = vmul.f32 %v440, %v448
        %v457 = vmul.f32 %v439, %v449
        %v458 = vmul.f32 %v446, %v450
        %v459 = vmul.f32 %v445, %v451
        %v460 = vmul.f32 %v444, %v452
        %v461 = vmul.f32 %v443, %v453
        %v462 = vmul.f32 %v442, %v454
        %v463 = vmul.f32 %v441, %v455
        %s464 = scalar_lea.vmem %s1, 128
        %v465 = vld [vmem:[%s464] sm:$0xff]
        %v466 = vld [vmem:[%s464 + $0x8] sm:$0xff]
        %v467 = vld [vmem:[%s464 + $0x10] sm:$0xff]
        %v468 = vld [vmem:[%s464 + $0x18] sm:$0xff]
        %v469 = vld [vmem:[%s464 + $0x20] sm:$0xff]
        %v470 = vld [vmem:[%s464 + $0x28] sm:$0xff]
        %v471 = vld [vmem:[%s464 + $0x30] sm:$0xff]
        %v472 = vld [vmem:[%s464 + $0x38] sm:$0xff]
        %v473 = vmul.f32 %v391, %v465
        %v474 = vmul.f32 %v393, %v466
        %v475 = vmul.f32 %v376, %v467
        %v476 = vmul.f32 %v378, %v468
        %v477 = vmul.f32 %v381, %v469
        %v478 = vmul.f32 %v383, %v470
        %v479 = vmul.f32 %v386, %v471
        %v480 = vmul.f32 %v388, %v472
        %v481 = vrot.slane %v376, 1
        %v482 = vrot.slane %v378, 1
        %v483 = vrot.slane %v381, 1
        %v484 = vrot.slane %v383, 1
        %v485 = vrot.slane %v386, 1
        %v486 = vrot.slane %v388, 1
        %v487 = vrot.slane %v391, 1
        %v488 = vrot.slane %v393, 1
        %vm489 = vcmp.lt.s32.totalorder %v404, 7
        %v490 = vsel %vm489, %v487, %v488
        %v491 = vsel %vm489, %v486, %v487
        %v492 = vsel %vm489, %v485, %v486
        %v493 = vsel %vm489, %v484, %v485
        %v494 = vsel %vm489, %v483, %v484
        %v495 = vsel %vm489, %v482, %v483
        %v496 = vsel %vm489, %v481, %v482
        %v497 = vsel %vm489, %v488, %v481
        %s498 = scalar_lea.vmem %s1, 192
        %v499 = vld [vmem:[%s498] sm:$0xff]
        %v500 = vld [vmem:[%s498 + $0x8] sm:$0xff]
        %v501 = vld [vmem:[%s498 + $0x10] sm:$0xff]
        %v502 = vld [vmem:[%s498 + $0x18] sm:$0xff]
        %v503 = vld [vmem:[%s498 + $0x20] sm:$0xff]
        %v504 = vld [vmem:[%s498 + $0x28] sm:$0xff]
        %v505 = vld [vmem:[%s498 + $0x30] sm:$0xff]
        %v506 = vld [vmem:[%s498 + $0x38] sm:$0xff]
        %v507 = vmul.f32 %v490, %v499
        %v508 = vmul.f32 %v497, %v500
        %v509 = vmul.f32 %v496, %v501
        %v510 = vmul.f32 %v495, %v502
        %v511 = vmul.f32 %v494, %v503
        %v512 = vmul.f32 %v493, %v504
        %v513 = vmul.f32 %v492, %v505
        %v514 = vmul.f32 %v491, %v506
        %v515 = vrot.slane %v376, 2
        %v516 = vrot.slane %v378, 2
        %v517 = vrot.slane %v381, 2
        %v518 = vrot.slane %v383, 2
        %v519 = vrot.slane %v386, 2
        %v520 = vrot.slane %v388, 2
        %v521 = vrot.slane %v391, 2
        %v522 = vrot.slane %v393, 2
        %vm523 = vcmp.lt.s32.totalorder %v404, 6
        %v524 = vsel %vm523, %v521, %v522
        %v525 = vsel %vm523, %v520, %v521
        %v526 = vsel %vm523, %v519, %v520
        %v527 = vsel %vm523, %v518, %v519
        %v528 = vsel %vm523, %v517, %v518
        %v529 = vsel %vm523, %v516, %v517
        %v530 = vsel %vm523, %v515, %v516
        %v531 = vsel %vm523, %v522, %v515
        %s532 = scalar_lea.vmem %s1, 256
        %v533 = vld [vmem:[%s532] sm:$0xff]
        %v534 = vld [vmem:[%s532 + $0x8] sm:$0xff]
        %v535 = vld [vmem:[%s532 + $0x10] sm:$0xff]
        %v536 = vld [vmem:[%s532 + $0x18] sm:$0xff]
        %v537 = vld [vmem:[%s532 + $0x20] sm:$0xff]
        %v538 = vld [vmem:[%s532 + $0x28] sm:$0xff]
        %v539 = vld [vmem:[%s532 + $0x30] sm:$0xff]
        %v540 = vld [vmem:[%s532 + $0x38] sm:$0xff]
        %v541 = vmul.f32 %v524, %v533
        %v542 = vmul.f32 %v531, %v534
        %v543 = vmul.f32 %v530, %v535
        %v544 = vmul.f32 %v529, %v536
        %v545 = vmul.f32 %v528, %v537
        %v546 = vmul.f32 %v527, %v538
        %v547 = vmul.f32 %v526, %v539
        %v548 = vmul.f32 %v525, %v540
        %s549 = scalar_lea.vmem %s1, 320
        %v550 = vld [vmem:[%s549] sm:$0xff]
        %v551 = vld [vmem:[%s549 + $0x8] sm:$0xff]
        %v552 = vld [vmem:[%s549 + $0x10] sm:$0xff]
        %v553 = vld [vmem:[%s549 + $0x18] sm:$0xff]
        %v554 = vld [vmem:[%s549 + $0x20] sm:$0xff]
        %v555 = vld [vmem:[%s549 + $0x28] sm:$0xff]
        %v556 = vld [vmem:[%s549 + $0x30] sm:$0xff]
        %v557 = vld [vmem:[%s549 + $0x38] sm:$0xff]
        %v558 = vmul.f32 %v406, %v550
        %v559 = vmul.f32 %v413, %v551
        %v560 = vmul.f32 %v412, %v552
        %v561 = vmul.f32 %v411, %v553
        %v562 = vmul.f32 %v410, %v554
        %v563 = vmul.f32 %v409, %v555
        %v564 = vmul.f32 %v408, %v556
        %v565 = vmul.f32 %v407, %v557
        %s566 = scalar_lea.vmem %s1, 384
        %v567 = vld [vmem:[%s566] sm:$0xff]
        %v568 = vld [vmem:[%s566 + $0x8] sm:$0xff]
        %v569 = vld [vmem:[%s566 + $0x10] sm:$0xff]
        %v570 = vld [vmem:[%s566 + $0x18] sm:$0xff]
        %v571 = vld [vmem:[%s566 + $0x20] sm:$0xff]
        %v572 = vld [vmem:[%s566 + $0x28] sm:$0xff]
        %v573 = vld [vmem:[%s566 + $0x30] sm:$0xff]
        %v574 = vld [vmem:[%s566 + $0x38] sm:$0xff]
        %v575 = vmul.f32 %v439, %v567
        %v576 = vmul.f32 %v446, %v568
        %v577 = vmul.f32 %v445, %v569
        %v578 = vmul.f32 %v444, %v570
        %v579 = vmul.f32 %v443, %v571
        %v580 = vmul.f32 %v442, %v572
        %v581 = vmul.f32 %v441, %v573
        %v582 = vmul.f32 %v440, %v574
        %s583 = scalar_lea.vmem %s1, 448
        %v584 = vld [vmem:[%s583] sm:$0xff]
        %v585 = vld [vmem:[%s583 + $0x8] sm:$0xff]
        %v586 = vld [vmem:[%s583 + $0x10] sm:$0xff]
        %v587 = vld [vmem:[%s583 + $0x18] sm:$0xff]
        %v588 = vld [vmem:[%s583 + $0x20] sm:$0xff]
        %v589 = vld [vmem:[%s583 + $0x28] sm:$0xff]
        %v590 = vld [vmem:[%s583 + $0x30] sm:$0xff]
        %v591 = vld [vmem:[%s583 + $0x38] sm:$0xff]
        %v592 = vmul.f32 %v393, %v584
        %v593 = vmul.f32 %v376, %v585
        %v594 = vmul.f32 %v378, %v586
        %v595 = vmul.f32 %v381, %v587
        %v596 = vmul.f32 %v383, %v588
        %v597 = vmul.f32 %v386, %v589
        %v598 = vmul.f32 %v388, %v590
        %v599 = vmul.f32 %v391, %v591
        %s600 = scalar_lea.vmem %s1, 512
        %v601 = vld [vmem:[%s600] sm:$0xff]
        %v602 = vld [vmem:[%s600 + $0x8] sm:$0xff]
        %v603 = vld [vmem:[%s600 + $0x10] sm:$0xff]
        %v604 = vld [vmem:[%s600 + $0x18] sm:$0xff]
        %v605 = vld [vmem:[%s600 + $0x20] sm:$0xff]
        %v606 = vld [vmem:[%s600 + $0x28] sm:$0xff]
        %v607 = vld [vmem:[%s600 + $0x30] sm:$0xff]
        %v608 = vld [vmem:[%s600 + $0x38] sm:$0xff]
        %v609 = vmul.f32 %v497, %v601
        %v610 = vmul.f32 %v496, %v602
        %v611 = vmul.f32 %v495, %v603
        %v612 = vmul.f32 %v494, %v604
        %v613 = vmul.f32 %v493, %v605
        %v614 = vmul.f32 %v492, %v606
        %v615 = vmul.f32 %v491, %v607
        %v616 = vmul.f32 %v490, %v608
        %s617 = scalar_lea.vmem %s1, 576
        %v618 = vld [vmem:[%s617] sm:$0xff]
        %v619 = vld [vmem:[%s617 + $0x8] sm:$0xff]
        %v620 = vld [vmem:[%s617 + $0x10] sm:$0xff]
        %v621 = vld [vmem:[%s617 + $0x18] sm:$0xff]
        %v622 = vld [vmem:[%s617 + $0x20] sm:$0xff]
        %v623 = vld [vmem:[%s617 + $0x28] sm:$0xff]
        %v624 = vld [vmem:[%s617 + $0x30] sm:$0xff]
        %v625 = vld [vmem:[%s617 + $0x38] sm:$0xff]
        %v626 = vmul.f32 %v531, %v618
        %v627 = vmul.f32 %v530, %v619
        %v628 = vmul.f32 %v529, %v620
        %v629 = vmul.f32 %v528, %v621
        %v630 = vmul.f32 %v527, %v622
        %v631 = vmul.f32 %v526, %v623
        %v632 = vmul.f32 %v525, %v624
        %v633 = vmul.f32 %v524, %v625
        %s634 = scalar_lea.vmem %s1, 640
        %v635 = vld [vmem:[%s634] sm:$0xff]
        %v636 = vld [vmem:[%s634 + $0x8] sm:$0xff]
        %v637 = vld [vmem:[%s634 + $0x10] sm:$0xff]
        %v638 = vld [vmem:[%s634 + $0x18] sm:$0xff]
        %v639 = vld [vmem:[%s634 + $0x20] sm:$0xff]
        %v640 = vld [vmem:[%s634 + $0x28] sm:$0xff]
        %v641 = vld [vmem:[%s634 + $0x30] sm:$0xff]
        %v642 = vld [vmem:[%s634 + $0x38] sm:$0xff]
        %v643 = vmul.f32 %v413, %v635
        %v644 = vmul.f32 %v412, %v636
        %v645 = vmul.f32 %v411, %v637
        %v646 = vmul.f32 %v410, %v638
        %v647 = vmul.f32 %v409, %v639
        %v648 = vmul.f32 %v408, %v640
        %v649 = vmul.f32 %v407, %v641
        %v650 = vmul.f32 %v406, %v642
        %s651 = scalar_lea.vmem %s1, 704
        %v652 = vld [vmem:[%s651] sm:$0xff]
        %v653 = vld [vmem:[%s651 + $0x8] sm:$0xff]
        %v654 = vld [vmem:[%s651 + $0x10] sm:$0xff]
        %v655 = vld [vmem:[%s651 + $0x18] sm:$0xff]
        %v656 = vld [vmem:[%s651 + $0x20] sm:$0xff]
        %v657 = vld [vmem:[%s651 + $0x28] sm:$0xff]
        %v658 = vld [vmem:[%s651 + $0x30] sm:$0xff]
        %v659 = vld [vmem:[%s651 + $0x38] sm:$0xff]
        %v660 = vmul.f32 %v446, %v652
        %v661 = vmul.f32 %v445, %v653
        %v662 = vmul.f32 %v444, %v654
        %v663 = vmul.f32 %v443, %v655
        %v664 = vmul.f32 %v442, %v656
        %v665 = vmul.f32 %v441, %v657
        %v666 = vmul.f32 %v440, %v658
        %v667 = vmul.f32 %v439, %v659
        %s668 = scalar_lea.vmem %s1, 768
        %v669 = vld [vmem:[%s668] sm:$0xff]
        %v670 = vld [vmem:[%s668 + $0x8] sm:$0xff]
        %v671 = vld [vmem:[%s668 + $0x10] sm:$0xff]
        %v672 = vld [vmem:[%s668 + $0x18] sm:$0xff]
        %v673 = vld [vmem:[%s668 + $0x20] sm:$0xff]
        %v674 = vld [vmem:[%s668 + $0x28] sm:$0xff]
        %v675 = vld [vmem:[%s668 + $0x30] sm:$0xff]
        %v676 = vld [vmem:[%s668 + $0x38] sm:$0xff]
        %v677 = vmul.f32 %v376, %v669
        %v678 = vmul.f32 %v378, %v670
        %v679 = vmul.f32 %v381, %v671
        %v680 = vmul.f32 %v383, %v672
        %v681 = vmul.f32 %v386, %v673
        %v682 = vmul.f32 %v388, %v674
        %v683 = vmul.f32 %v391, %v675
        %v684 = vmul.f32 %v393, %v676
        %693 = vrot.lane.b32.xlu0 %v456, 32
        %v694 = vpop.permute.xlu0 %693
        %695 = vrot.lane.b32.xlu0 %v457, 32
        %v696 = vpop.permute.xlu0 %695
        %697 = vrot.lane.b32.xlu0 %v458, 32
        %v698 = vpop.permute.xlu0 %697
        %699 = vrot.lane.b32.xlu0 %v459, 32
        %v700 = vpop.permute.xlu0 %699
        %701 = vrot.lane.b32.xlu0 %v460, 32
        %v702 = vpop.permute.xlu0 %701
        %703 = vrot.lane.b32.xlu0 %v461, 32
        %v704 = vpop.permute.xlu0 %703
        %705 = vrot.lane.b32.xlu0 %v462, 32
        %v706 = vpop.permute.xlu0 %705
        %707 = vrot.lane.b32.xlu0 %v463, 32
        %v708 = vpop.permute.xlu0 %707
        %725 = vrot.lane.b32.xlu0 %v473, 64
        %v726 = vpop.permute.xlu0 %725
        %727 = vrot.lane.b32.xlu0 %v474, 64
        %v728 = vpop.permute.xlu0 %727
        %729 = vrot.lane.b32.xlu0 %v475, 64
        %v730 = vpop.permute.xlu0 %729
        %731 = vrot.lane.b32.xlu0 %v476, 64
        %v732 = vpop.permute.xlu0 %731
        %733 = vrot.lane.b32.xlu0 %v477, 64
        %v734 = vpop.permute.xlu0 %733
        %735 = vrot.lane.b32.xlu0 %v478, 64
        %v736 = vpop.permute.xlu0 %735
        %737 = vrot.lane.b32.xlu0 %v479, 64
        %v738 = vpop.permute.xlu0 %737
        %739 = vrot.lane.b32.xlu0 %v480, 64
        %v740 = vpop.permute.xlu0 %739
        %757 = vrot.lane.b32.xlu0 %v507, 96
        %v758 = vpop.permute.xlu0 %757
        %759 = vrot.lane.b32.xlu0 %v508, 96
        %v760 = vpop.permute.xlu0 %759
        %761 = vrot.lane.b32.xlu0 %v509, 96
        %v762 = vpop.permute.xlu0 %761
        %763 = vrot.lane.b32.xlu0 %v510, 96
        %v764 = vpop.permute.xlu0 %763
        %765 = vrot.lane.b32.xlu0 %v511, 96
        %v766 = vpop.permute.xlu0 %765
        %767 = vrot.lane.b32.xlu0 %v512, 96
        %v768 = vpop.permute.xlu0 %767
        %769 = vrot.lane.b32.xlu0 %v513, 96
        %v770 = vpop.permute.xlu0 %769
        %771 = vrot.lane.b32.xlu0 %v514, 96
        %v772 = vpop.permute.xlu0 %771
        %789 = vrot.lane.b32.xlu0 %v558, 32
        %v790 = vpop.permute.xlu0 %789
        %791 = vrot.lane.b32.xlu0 %v559, 32
        %v792 = vpop.permute.xlu0 %791
        %793 = vrot.lane.b32.xlu0 %v560, 32
        %v794 = vpop.permute.xlu0 %793
        %795 = vrot.lane.b32.xlu0 %v561, 32
        %v796 = vpop.permute.xlu0 %795
        %797 = vrot.lane.b32.xlu0 %v562, 32
        %v798 = vpop.permute.xlu0 %797
        %799 = vrot.lane.b32.xlu0 %v563, 32
        %v800 = vpop.permute.xlu0 %799
        %801 = vrot.lane.b32.xlu0 %v564, 32
        %v802 = vpop.permute.xlu0 %801
        %803 = vrot.lane.b32.xlu0 %v565, 32
        %v804 = vpop.permute.xlu0 %803
        %821 = vrot.lane.b32.xlu0 %v575, 64
        %v822 = vpop.permute.xlu0 %821
        %823 = vrot.lane.b32.xlu0 %v576, 64
        %v824 = vpop.permute.xlu0 %823
        %825 = vrot.lane.b32.xlu0 %v577, 64
        %v826 = vpop.permute.xlu0 %825
        %827 = vrot.lane.b32.xlu0 %v578, 64
        %v828 = vpop.permute.xlu0 %827
        %829 = vrot.lane.b32.xlu0 %v579, 64
        %v830 = vpop.permute.xlu0 %829
        %831 = vrot.lane.b32.xlu0 %v580, 64
        %v832 = vpop.permute.xlu0 %831
        %833 = vrot.lane.b32.xlu0 %v581, 64
        %v834 = vpop.permute.xlu0 %833
        %835 = vrot.lane.b32.xlu0 %v582, 64
        %v836 = vpop.permute.xlu0 %835
        %853 = vrot.lane.b32.xlu0 %v592, 96
        %v854 = vpop.permute.xlu0 %853
        %855 = vrot.lane.b32.xlu0 %v593, 96
        %v856 = vpop.permute.xlu0 %855
        %857 = vrot.lane.b32.xlu0 %v594, 96
        %v858 = vpop.permute.xlu0 %857
        %859 = vrot.lane.b32.xlu0 %v595, 96
        %v860 = vpop.permute.xlu0 %859
        %861 = vrot.lane.b32.xlu0 %v596, 96
        %v862 = vpop.permute.xlu0 %861
        %863 = vrot.lane.b32.xlu0 %v597, 96
        %v864 = vpop.permute.xlu0 %863
        %865 = vrot.lane.b32.xlu0 %v598, 96
        %v866 = vpop.permute.xlu0 %865
        %867 = vrot.lane.b32.xlu0 %v599, 96
        %v868 = vpop.permute.xlu0 %867
        %885 = vrot.lane.b32.xlu0 %v626, 32
        %v886 = vpop.permute.xlu0 %885
        %887 = vrot.lane.b32.xlu0 %v627, 32
        %v888 = vpop.permute.xlu0 %887
        %889 = vrot.lane.b32.xlu0 %v628, 32
        %v890 = vpop.permute.xlu0 %889
        %891 = vrot.lane.b32.xlu0 %v629, 32
        %v892 = vpop.permute.xlu0 %891
        %893 = vrot.lane.b32.xlu0 %v630, 32
        %v894 = vpop.permute.xlu0 %893
        %895 = vrot.lane.b32.xlu0 %v631, 32
        %v896 = vpop.permute.xlu0 %895
        %897 = vrot.lane.b32.xlu0 %v632, 32
        %v898 = vpop.permute.xlu0 %897
        %899 = vrot.lane.b32.xlu0 %v633, 32
        %v900 = vpop.permute.xlu0 %899
        %917 = vrot.lane.b32.xlu0 %v643, 64
        %v918 = vpop.permute.xlu0 %917
        %919 = vrot.lane.b32.xlu0 %v644, 64
        %v920 = vpop.permute.xlu0 %919
        %921 = vrot.lane.b32.xlu0 %v645, 64
        %v922 = vpop.permute.xlu0 %921
        %923 = vrot.lane.b32.xlu0 %v646, 64
        %v924 = vpop.permute.xlu0 %923
        %925 = vrot.lane.b32.xlu0 %v647, 64
        %v926 = vpop.permute.xlu0 %925
        %927 = vrot.lane.b32.xlu0 %v648, 64
        %v928 = vpop.permute.xlu0 %927
        %929 = vrot.lane.b32.xlu0 %v649, 64
        %v930 = vpop.permute.xlu0 %929
        %931 = vrot.lane.b32.xlu0 %v650, 64
        %v932 = vpop.permute.xlu0 %931
        %949 = vrot.lane.b32.xlu0 %v660, 96
        %v950 = vpop.permute.xlu0 %949
        %951 = vrot.lane.b32.xlu0 %v661, 96
        %v952 = vpop.permute.xlu0 %951
        %953 = vrot.lane.b32.xlu0 %v662, 96
        %v954 = vpop.permute.xlu0 %953
        %955 = vrot.lane.b32.xlu0 %v663, 96
        %v956 = vpop.permute.xlu0 %955
        %957 = vrot.lane.b32.xlu0 %v664, 96
        %v958 = vpop.permute.xlu0 %957
        %959 = vrot.lane.b32.xlu0 %v665, 96
        %v960 = vpop.permute.xlu0 %959
        %961 = vrot.lane.b32.xlu0 %v666, 96
        %v962 = vpop.permute.xlu0 %961
        %963 = vrot.lane.b32.xlu0 %v667, 96
        %v964 = vpop.permute.xlu0 %963
        %vm973 = vcmask 261120
        %v974 = vsel %vm973, %v422, %v694
        %v975 = vsel %vm973, %v423, %v696
        %v976 = vsel %vm973, %v424, %v698
        %v977 = vsel %vm973, %v425, %v700
        %v978 = vsel %vm973, %v426, %v702
        %v979 = vsel %vm973, %v427, %v704
        %v980 = vsel %vm973, %v428, %v706
        %v981 = vsel %vm973, %v429, %v708
        %v982 = vsel %vm353, %v974, %v726
        %v983 = vsel %vm353, %v975, %v728
        %v984 = vsel %vm353, %v976, %v730
        %v985 = vsel %vm353, %v977, %v732
        %v986 = vsel %vm353, %v978, %v734
        %v987 = vsel %vm353, %v979, %v736
        %v988 = vsel %vm353, %v980, %v738
        %v989 = vsel %vm353, %v981, %v740
        %vm990 = vcmask 785408
        %v991 = vsel %vm990, %v982, %v758
        %v992 = vsel %vm990, %v983, %v760
        %v993 = vsel %vm990, %v984, %v762
        %v994 = vsel %vm990, %v985, %v764
        %v995 = vsel %vm990, %v986, %v766
        %v996 = vsel %vm990, %v987, %v768
        %v997 = vsel %vm990, %v988, %v770
        %v998 = vsel %vm990, %v989, %v772
        %v999 = vsel %vm973, %v541, %v790
        %v1000 = vsel %vm973, %v542, %v792
        %v1001 = vsel %vm973, %v543, %v794
        %v1002 = vsel %vm973, %v544, %v796
        %v1003 = vsel %vm973, %v545, %v798
        %v1004 = vsel %vm973, %v546, %v800
        %v1005 = vsel %vm973, %v547, %v802
        %v1006 = vsel %vm973, %v548, %v804
        %v1007 = vsel %vm353, %v999, %v822
        %v1008 = vsel %vm353, %v1000, %v824
        %v1009 = vsel %vm353, %v1001, %v826
        %v1010 = vsel %vm353, %v1002, %v828
        %v1011 = vsel %vm353, %v1003, %v830
        %v1012 = vsel %vm353, %v1004, %v832
        %v1013 = vsel %vm353, %v1005, %v834
        %v1014 = vsel %vm353, %v1006, %v836
        %v1015 = vsel %vm990, %v1007, %v854
        %v1016 = vsel %vm990, %v1008, %v856
        %v1017 = vsel %vm990, %v1009, %v858
        %v1018 = vsel %vm990, %v1010, %v860
        %v1019 = vsel %vm990, %v1011, %v862
        %v1020 = vsel %vm990, %v1012, %v864
        %v1021 = vsel %vm990, %v1013, %v866
        %v1022 = vsel %vm990, %v1014, %v868
        %v1023 = vsel %vm973, %v609, %v886
        %v1024 = vsel %vm973, %v610, %v888
        %v1025 = vsel %vm973, %v611, %v890
        %v1026 = vsel %vm973, %v612, %v892
        %v1027 = vsel %vm973, %v613, %v894
        %v1028 = vsel %vm973, %v614, %v896
        %v1029 = vsel %vm973, %v615, %v898
        %v1030 = vsel %vm973, %v616, %v900
        %v1031 = vsel %vm353, %v1023, %v918
        %v1032 = vsel %vm353, %v1024, %v920
        %v1033 = vsel %vm353, %v1025, %v922
        %v1034 = vsel %vm353, %v1026, %v924
        %v1035 = vsel %vm353, %v1027, %v926
        %v1036 = vsel %vm353, %v1028, %v928
        %v1037 = vsel %vm353, %v1029, %v930
        %v1038 = vsel %vm353, %v1030, %v932
        %v1039 = vsel %vm990, %v1031, %v950
        %v1040 = vsel %vm990, %v1032, %v952
        %v1041 = vsel %vm990, %v1033, %v954
        %v1042 = vsel %vm990, %v1034, %v956
        %v1043 = vsel %vm990, %v1035, %v958
        %v1044 = vsel %vm990, %v1036, %v960
        %v1045 = vsel %vm990, %v1037, %v962
        %v1046 = vsel %vm990, %v1038, %v964
        %v1047 = vsel %vm973, %v677, 0.0
        %v1048 = vsel %vm973, %v678, 0.0
        %v1049 = vsel %vm973, %v679, 0.0
        %v1050 = vsel %vm973, %v680, 0.0
        %v1051 = vsel %vm973, %v681, 0.0
        %v1052 = vsel %vm973, %v682, 0.0
        %v1053 = vsel %vm973, %v683, 0.0
        %v1054 = vsel %vm973, %v684, 0.0
        %v1055 = vpack.c.bf16 %v992, %v991
        %v1056 = vpack.c.bf16 %v1016, %v1015
        %v1057 = vpack.c.bf16 %v1040, %v1039
        %v1058 = vpack.c.bf16 %v1048, %v1047
        %v1059 = vpack.c.bf16 %v994, %v993
        %v1060 = vpack.c.bf16 %v1018, %v1017
        %v1061 = vpack.c.bf16 %v1042, %v1041
        %v1062 = vpack.c.bf16 %v1050, %v1049
        %v1063 = vpack.c.bf16 %v996, %v995
        %v1064 = vpack.c.bf16 %v1020, %v1019
        %v1065 = vpack.c.bf16 %v1044, %v1043
        %v1066 = vpack.c.bf16 %v1052, %v1051
        %v1067 = vpack.c.bf16 %v998, %v997
        %v1068 = vpack.c.bf16 %v1022, %v1021
        %v1069 = vpack.c.bf16 %v1046, %v1045
        %v1070 = vpack.c.bf16 %v1054, %v1053
        %v1071 = vld [vmem:[%s4] sm:$0xf]
        %v1072 = vld [vmem:[%s4 + $0x4] sm:$0xf]
        %v1073 = vld [vmem:[%s4 + $0x8] sm:$0xf]
        %v1074 = vld [vmem:[%s4 + $0xc] sm:$0xf]
        %v1075 = vld [vmem:[%s4 + $0x10] sm:$0xf]
        %v1076 = vld [vmem:[%s4 + $0x14] sm:$0xf]
        %v1077 = vld [vmem:[%s4 + $0x18] sm:$0xf]
        %v1078 = vld [vmem:[%s4 + $0x1c] sm:$0xf]
        %v1079 = vld [vmem:[%s4 + $0x20] sm:$0xf]
        %v1080 = vld [vmem:[%s4 + $0x24] sm:$0xf]
        %v1081 = vld [vmem:[%s4 + $0x28] sm:$0xf]
        %v1082 = vld [vmem:[%s4 + $0x2c] sm:$0xf]
        %v1083 = vld [vmem:[%s4 + $0x30] sm:$0xf]
        %v1084 = vld [vmem:[%s4 + $0x34] sm:$0xf]
        %v1085 = vld [vmem:[%s4 + $0x38] sm:$0xf]
        %v1086 = vld [vmem:[%s4 + $0x3c] sm:$0xf]
        %v1087 = vld [vmem:[%s4 + $0x40] sm:$0xf]
        %v1088 = vld [vmem:[%s4 + $0x44] sm:$0xf]
        %v1089 = vld [vmem:[%s4 + $0x48] sm:$0xf]
        %v1090 = vld [vmem:[%s4 + $0x4c] sm:$0xf]
        %v1091 = vld [vmem:[%s4 + $0x50] sm:$0xf]
        %v1092 = vld [vmem:[%s4 + $0x54] sm:$0xf]
        %v1093 = vld [vmem:[%s4 + $0x58] sm:$0xf]
        %v1094 = vld [vmem:[%s4 + $0x5c] sm:$0xf]
        %v1095 = vld [vmem:[%s4 + $0x60] sm:$0xf]
        %v1096 = vld [vmem:[%s4 + $0x64] sm:$0xf]
        %v1097 = vld [vmem:[%s4 + $0x68] sm:$0xf]
        %v1098 = vld [vmem:[%s4 + $0x6c] sm:$0xf]
        %v1099 = vld [vmem:[%s4 + $0x70] sm:$0xf]
        %v1100 = vld [vmem:[%s4 + $0x74] sm:$0xf]
        %v1101 = vld [vmem:[%s4 + $0x78] sm:$0xf]
        %v1102 = vld [vmem:[%s4 + $0x7c] sm:$0xf]
        %v1103 = vld [vmem:[%s4 + $0x80] sm:$0xf]
        %v1104 = vld [vmem:[%s4 + $0x84] sm:$0xf]
        %v1105 = vld [vmem:[%s4 + $0x88] sm:$0xf]
        %v1106 = vld [vmem:[%s4 + $0x8c] sm:$0xf]
        %v1107 = vld [vmem:[%s4 + $0x90] sm:$0xf]
        %v1108 = vld [vmem:[%s4 + $0x94] sm:$0xf]
        %v1109 = vld [vmem:[%s4 + $0x98] sm:$0xf]
        %v1110 = vld [vmem:[%s4 + $0x9c] sm:$0xf]
        %v1111 = vld [vmem:[%s4 + $0xa0] sm:$0xf]
        %v1112 = vld [vmem:[%s4 + $0xa4] sm:$0xf]
        %v1113 = vld [vmem:[%s4 + $0xa8] sm:$0xf]
        %v1114 = vld [vmem:[%s4 + $0xac] sm:$0xf]
        %v1115 = vld [vmem:[%s4 + $0xb0] sm:$0xf]
        %v1116 = vld [vmem:[%s4 + $0xb4] sm:$0xf]
        %v1117 = vld [vmem:[%s4 + $0xb8] sm:$0xf]
        %v1118 = vld [vmem:[%s4 + $0xbc] sm:$0xf]
        %v1119 = vld [vmem:[%s4 + $0xc0] sm:$0xf]
        %v1120 = vld [vmem:[%s4 + $0xc4] sm:$0xf]
        %v1121 = vld [vmem:[%s4 + $0xc8] sm:$0xf]
        %v1122 = vld [vmem:[%s4 + $0xcc] sm:$0xf]
        %v1123 = vld [vmem:[%s4 + $0xd0] sm:$0xf]
        %v1124 = vld [vmem:[%s4 + $0xd4] sm:$0xf]
        %v1125 = vld [vmem:[%s4 + $0xd8] sm:$0xf]
        %v1126 = vld [vmem:[%s4 + $0xdc] sm:$0xf]
        %v1127 = vld [vmem:[%s4 + $0xe0] sm:$0xf]
        %v1128 = vld [vmem:[%s4 + $0xe4] sm:$0xf]
        %v1129 = vld [vmem:[%s4 + $0xe8] sm:$0xf]
        %v1130 = vld [vmem:[%s4 + $0xec] sm:$0xf]
        %v1131 = vld [vmem:[%s4 + $0xf0] sm:$0xf]
        %v1132 = vld [vmem:[%s4 + $0xf4] sm:$0xf]
        %v1133 = vld [vmem:[%s4 + $0xf8] sm:$0xf]
        %v1134 = vld [vmem:[%s4 + $0xfc] sm:$0xf]
        %v1135 = vld [vmem:[%s5] sm:$0x1]
        %v1137 = vperm.slane %v1135, 0
        %v1203 = vunpack.c.l.b16 %v1071
        %v1204 = vunpack.c.l.b16 %v1072
        %v1205 = vunpack.c.l.b16 %v1073
        %v1206 = vunpack.c.l.b16 %v1074
        %v1207 = vunpack.c.l.b16 %v1075
        %v1208 = vunpack.c.l.b16 %v1076
        %v1209 = vunpack.c.l.b16 %v1077
        %v1210 = vunpack.c.l.b16 %v1078
        %v1211 = vunpack.c.l.b16 %v1079
        %v1212 = vunpack.c.l.b16 %v1080
        %v1213 = vunpack.c.l.b16 %v1081
        %v1214 = vunpack.c.l.b16 %v1082
        %v1215 = vunpack.c.l.b16 %v1083
        %v1216 = vunpack.c.l.b16 %v1084
        %v1217 = vunpack.c.l.b16 %v1085
        %v1218 = vunpack.c.l.b16 %v1086
        %v1219 = vunpack.c.l.b16 %v1087
        %v1220 = vunpack.c.l.b16 %v1088
        %v1221 = vunpack.c.l.b16 %v1089
        %v1222 = vunpack.c.l.b16 %v1090
        %v1223 = vunpack.c.l.b16 %v1091
        %v1224 = vunpack.c.l.b16 %v1092
        %v1225 = vunpack.c.l.b16 %v1093
        %v1226 = vunpack.c.l.b16 %v1094
        %v1227 = vunpack.c.l.b16 %v1095
        %v1228 = vunpack.c.l.b16 %v1096
        %v1229 = vunpack.c.l.b16 %v1097
        %v1230 = vunpack.c.l.b16 %v1098
        %v1231 = vunpack.c.l.b16 %v1099
        %v1232 = vunpack.c.l.b16 %v1100
        %v1233 = vunpack.c.l.b16 %v1101
        %v1234 = vunpack.c.l.b16 %v1102
        %v1235 = vunpack.c.l.b16 %v1103
        %v1236 = vunpack.c.l.b16 %v1104
        %v1237 = vunpack.c.l.b16 %v1105
        %v1238 = vunpack.c.l.b16 %v1106
        %v1239 = vunpack.c.l.b16 %v1107
        %v1240 = vunpack.c.l.b16 %v1108
        %v1241 = vunpack.c.l.b16 %v1109
        %v1242 = vunpack.c.l.b16 %v1110
        %v1243 = vunpack.c.l.b16 %v1111
        %v1244 = vunpack.c.l.b16 %v1112
        %v1245 = vunpack.c.l.b16 %v1113
        %v1246 = vunpack.c.l.b16 %v1114
        %v1247 = vunpack.c.l.b16 %v1115
        %v1248 = vunpack.c.l.b16 %v1116
        %v1249 = vunpack.c.l.b16 %v1117
        %v1250 = vunpack.c.l.b16 %v1118
        %v1251 = vunpack.c.l.b16 %v1119
        %v1252 = vunpack.c.l.b16 %v1120
        %v1253 = vunpack.c.l.b16 %v1121
        %v1254 = vunpack.c.l.b16 %v1122
        %v1255 = vunpack.c.l.b16 %v1123
        %v1256 = vunpack.c.l.b16 %v1124
        %v1257 = vunpack.c.l.b16 %v1125
        %v1258 = vunpack.c.l.b16 %v1126
        %v1259 = vunpack.c.l.b16 %v1127
        %v1260 = vunpack.c.l.b16 %v1128
        %v1261 = vunpack.c.l.b16 %v1129
        %v1262 = vunpack.c.l.b16 %v1130
        %v1263 = vunpack.c.l.b16 %v1131
        %v1264 = vunpack.c.l.b16 %v1132
        %v1265 = vunpack.c.l.b16 %v1133
        %v1266 = vunpack.c.l.b16 %v1134
        %v1267 = vpack.c.b16 %v1204, %v1203
        %v1268 = vpack.c.b16 %v1206, %v1205
        %v1269 = vpack.c.b16 %v1208, %v1207
        %v1270 = vpack.c.b16 %v1210, %v1209
        %v1271 = vpack.c.b16 %v1212, %v1211
        %v1272 = vpack.c.b16 %v1214, %v1213
        %v1273 = vpack.c.b16 %v1216, %v1215
        %v1274 = vpack.c.b16 %v1218, %v1217
        %v1275 = vpack.c.b16 %v1220, %v1219
        %v1276 = vpack.c.b16 %v1222, %v1221
        %v1277 = vpack.c.b16 %v1224, %v1223
        %v1278 = vpack.c.b16 %v1226, %v1225
        %v1279 = vpack.c.b16 %v1228, %v1227
        %v1280 = vpack.c.b16 %v1230, %v1229
        %v1281 = vpack.c.b16 %v1232, %v1231
        %v1282 = vpack.c.b16 %v1234, %v1233
        %v1283 = vpack.c.b16 %v1236, %v1235
        %v1284 = vpack.c.b16 %v1238, %v1237
        %v1285 = vpack.c.b16 %v1240, %v1239
        %v1286 = vpack.c.b16 %v1242, %v1241
        %v1287 = vpack.c.b16 %v1244, %v1243
        %v1288 = vpack.c.b16 %v1246, %v1245
        %v1289 = vpack.c.b16 %v1248, %v1247
        %v1290 = vpack.c.b16 %v1250, %v1249
        %v1291 = vpack.c.b16 %v1252, %v1251
        %v1292 = vpack.c.b16 %v1254, %v1253
        %v1293 = vpack.c.b16 %v1256, %v1255
        %v1294 = vpack.c.b16 %v1258, %v1257
        %v1295 = vpack.c.b16 %v1260, %v1259
        %v1296 = vpack.c.b16 %v1262, %v1261
        %v1297 = vpack.c.b16 %v1264, %v1263
        %v1298 = vpack.c.b16 %v1266, %v1265
        %1331 = vmatpush.bf16.msra.mxu0 %v1274
        %1332 = vmatpush.bf16.msra.mxu0 %v1273
        %1333 = vmatpush.bf16.msra.mxu0 %v1272
        %1334 = vmatpush.bf16.msra.mxu0 %v1271
        %1335 = vmatpush.bf16.msra.mxu0 %v1270
        %1336 = vmatpush.bf16.msra.mxu0 %v1269
        %1337 = vmatpush.bf16.msra.mxu0 %v1268
        %1338 = vmatpush.bf16.msra.mxu0 %v1267
        %1339 = vmatmul.bf16.gmra.mxu0 %v1055
        %v1340 = vpop.f32.mrf.mxu0
        %v1341 = vadd.f32 %v1137, %v1340
        %v1342 = vpop.f32.mrf.mxu0
        %v1343 = vadd.f32 %v1137, %v1342
        %1344 = vmatmul.bf16.gmra.mxu0 %v1059
        %v1345 = vpop.f32.mrf.mxu0
        %v1346 = vadd.f32 %v1137, %v1345
        %v1347 = vpop.f32.mrf.mxu0
        %v1348 = vadd.f32 %v1137, %v1347
        %1349 = vmatmul.bf16.gmra.mxu0 %v1063
        %v1350 = vpop.f32.mrf.mxu0
        %v1351 = vadd.f32 %v1137, %v1350
        %v1352 = vpop.f32.mrf.mxu0
        %v1353 = vadd.f32 %v1137, %v1352
        %1354 = vmatmul.bf16.gmra.mxu0 %v1067
        %v1355 = vpop.f32.mrf.mxu0
        %v1356 = vadd.f32 %v1137, %v1355
        %v1357 = vpop.f32.mrf.mxu0
        %v1358 = vadd.f32 %v1137, %v1357
        %1359 = vdwg.mxu0
        %1360 = vmatpush.bf16.msra.mxu0 %v1282
        %1361 = vmatpush.bf16.msra.mxu0 %v1281
        %1362 = vmatpush.bf16.msra.mxu0 %v1280
        %1363 = vmatpush.bf16.msra.mxu0 %v1279
        %1364 = vmatpush.bf16.msra.mxu0 %v1278
        %1365 = vmatpush.bf16.msra.mxu0 %v1277
        %1366 = vmatpush.bf16.msra.mxu0 %v1276
        %1367 = vmatpush.bf16.msra.mxu0 %v1275
        %1368 = vmatmul.bf16.gmra.mxu0 %v1056
        %v1369 = vpop.f32.mrf.mxu0
        %v1370 = vadd.f32 %v1341, %v1369
        %v1371 = vpop.f32.mrf.mxu0
        %v1372 = vadd.f32 %v1343, %v1371
        %1373 = vmatmul.bf16.gmra.mxu0 %v1060
        %v1374 = vpop.f32.mrf.mxu0
        %v1375 = vadd.f32 %v1346, %v1374
        %v1376 = vpop.f32.mrf.mxu0
        %v1377 = vadd.f32 %v1348, %v1376
        %1378 = vmatmul.bf16.gmra.mxu0 %v1064
        %v1379 = vpop.f32.mrf.mxu0
        %v1380 = vadd.f32 %v1351, %v1379
        %v1381 = vpop.f32.mrf.mxu0
        %v1382 = vadd.f32 %v1353, %v1381
        %1383 = vmatmul.bf16.gmra.mxu0 %v1068
        %v1384 = vpop.f32.mrf.mxu0
        %v1385 = vadd.f32 %v1356, %v1384
        %v1386 = vpop.f32.mrf.mxu0
        %v1387 = vadd.f32 %v1358, %v1386
        %1388 = vdwg.mxu0
        %1389 = vmatpush.bf16.msra.mxu0 %v1290
        %1390 = vmatpush.bf16.msra.mxu0 %v1289
        %1391 = vmatpush.bf16.msra.mxu0 %v1288
        %1392 = vmatpush.bf16.msra.mxu0 %v1287
        %1393 = vmatpush.bf16.msra.mxu0 %v1286
        %1394 = vmatpush.bf16.msra.mxu0 %v1285
        %1395 = vmatpush.bf16.msra.mxu0 %v1284
        %1396 = vmatpush.bf16.msra.mxu0 %v1283
        %1397 = vmatmul.bf16.gmra.mxu0 %v1057
        %v1398 = vpop.f32.mrf.mxu0
        %v1399 = vadd.f32 %v1370, %v1398
        %v1400 = vpop.f32.mrf.mxu0
        %v1401 = vadd.f32 %v1372, %v1400
        %1402 = vmatmul.bf16.gmra.mxu0 %v1061
        %v1403 = vpop.f32.mrf.mxu0
        %v1404 = vadd.f32 %v1375, %v1403
        %v1405 = vpop.f32.mrf.mxu0
        %v1406 = vadd.f32 %v1377, %v1405
        %1407 = vmatmul.bf16.gmra.mxu0 %v1065
        %v1408 = vpop.f32.mrf.mxu0
        %v1409 = vadd.f32 %v1380, %v1408
        %v1410 = vpop.f32.mrf.mxu0
        %v1411 = vadd.f32 %v1382, %v1410
        %1412 = vmatmul.bf16.gmra.mxu0 %v1069
        %v1413 = vpop.f32.mrf.mxu0
        %v1414 = vadd.f32 %v1385, %v1413
        %v1415 = vpop.f32.mrf.mxu0
        %v1416 = vadd.f32 %v1387, %v1415
        %1417 = vdwg.mxu0
        %1418 = vmatpush.bf16.msra.mxu0 %v1298
        %1419 = vmatpush.bf16.msra.mxu0 %v1297
        %1420 = vmatpush.bf16.msra.mxu0 %v1296
        %1421 = vmatpush.bf16.msra.mxu0 %v1295
        %1422 = vmatpush.bf16.msra.mxu0 %v1294
        %1423 = vmatpush.bf16.msra.mxu0 %v1293
        %1424 = vmatpush.bf16.msra.mxu0 %v1292
        %1425 = vmatpush.bf16.msra.mxu0 %v1291
        %1426 = vmatmul.bf16.gmra.mxu0 %v1058
        %v1427 = vpop.f32.mrf.mxu0
        %v1428 = vadd.f32 %v1399, %v1427
        %v1429 = vpop.f32.mrf.mxu0
        %v1430 = vadd.f32 %v1401, %v1429
        %1431 = vmatmul.bf16.gmra.mxu0 %v1062
        %v1432 = vpop.f32.mrf.mxu0
        %v1433 = vadd.f32 %v1404, %v1432
        %v1434 = vpop.f32.mrf.mxu0
        %v1435 = vadd.f32 %v1406, %v1434
        %1436 = vmatmul.bf16.gmra.mxu0 %v1066
        %v1437 = vpop.f32.mrf.mxu0
        %v1438 = vadd.f32 %v1409, %v1437
        %v1439 = vpop.f32.mrf.mxu0
        %v1440 = vadd.f32 %v1411, %v1439
        %1441 = vmatmul.bf16.gmra.mxu0 %v1070
        %v1442 = vpop.f32.mrf.mxu0
        %v1443 = vadd.f32 %v1414, %v1442
        %v1444 = vpop.f32.mrf.mxu0
        %v1445 = vadd.f32 %v1416, %v1444
        %1446 = vdwg.mxu0
        %v1447 = vmax.f32 %v1428, 0.0
        %v1448 = vmax.f32 %v1430, 0.0
        %v1449 = vmax.f32 %v1433, 0.0
        %v1450 = vmax.f32 %v1435, 0.0
        %v1451 = vmax.f32 %v1438, 0.0
        %v1452 = vmax.f32 %v1440, 0.0
        %v1453 = vmax.f32 %v1443, 0.0
        %v1454 = vmax.f32 %v1445, 0.0
        %v1455 = vrot.slane %v1447, 6
        %v1456 = vrot.slane %v1448, 6
        %v1457 = vrot.slane %v1449, 6
        %v1458 = vrot.slane %v1450, 6
        %v1459 = vrot.slane %v1451, 6
        %v1460 = vrot.slane %v1452, 6
        %v1461 = vrot.slane %v1453, 6
        %v1462 = vrot.slane %v1454, 6
        %v1463 = vsel %vm405, %v1461, %v1462
        %v1464 = vsel %vm405, %v1460, %v1461
        %v1465 = vsel %vm405, %v1459, %v1460
        %v1466 = vsel %vm405, %v1458, %v1459
        %v1467 = vsel %vm405, %v1457, %v1458
        %v1468 = vsel %vm405, %v1456, %v1457
        %v1469 = vsel %vm405, %v1455, %v1456
        %v1470 = vsel %vm405, %v1462, %v1455
        %v1471 = vmul.f32 %v1464, %v414
        %v1472 = vmul.f32 %v1463, %v415
        %v1473 = vmul.f32 %v1470, %v416
        %v1474 = vmul.f32 %v1469, %v417
        %v1475 = vmul.f32 %v1468, %v418
        %v1476 = vmul.f32 %v1467, %v419
        %v1477 = vmul.f32 %v1466, %v420
        %v1478 = vmul.f32 %v1465, %v421
        %v1479 = vrot.slane %v1447, 7
        %v1480 = vrot.slane %v1448, 7
        %v1481 = vrot.slane %v1449, 7
        %v1482 = vrot.slane %v1450, 7
        %v1483 = vrot.slane %v1451, 7
        %v1484 = vrot.slane %v1452, 7
        %v1485 = vrot.slane %v1453, 7
        %v1486 = vrot.slane %v1454, 7
        %v1487 = vsel %vm438, %v1485, %v1486
        %v1488 = vsel %vm438, %v1484, %v1485
        %v1489 = vsel %vm438, %v1483, %v1484
        %v1490 = vsel %vm438, %v1482, %v1483
        %v1491 = vsel %vm438, %v1481, %v1482
        %v1492 = vsel %vm438, %v1480, %v1481
        %v1493 = vsel %vm438, %v1479, %v1480
        %v1494 = vsel %vm438, %v1486, %v1479
        %v1495 = vmul.f32 %v1488, %v448
        %v1496 = vmul.f32 %v1487, %v449
        %v1497 = vmul.f32 %v1494, %v450
        %v1498 = vmul.f32 %v1493, %v451
        %v1499 = vmul.f32 %v1492, %v452
        %v1500 = vmul.f32 %v1491, %v453
        %v1501 = vmul.f32 %v1490, %v454
        %v1502 = vmul.f32 %v1489, %v455
        %v1503 = vmul.f32 %v1453, %v465
        %v1504 = vmul.f32 %v1454, %v466
        %v1505 = vmul.f32 %v1447, %v467
        %v1506 = vmul.f32 %v1448, %v468
        %v1507 = vmul.f32 %v1449, %v469
        %v1508 = vmul.f32 %v1450, %v470
        %v1509 = vmul.f32 %v1451, %v471
        %v1510 = vmul.f32 %v1452, %v472
        %v1511 = vrot.slane %v1447, 1
        %v1512 = vrot.slane %v1448, 1
        %v1513 = vrot.slane %v1449, 1
        %v1514 = vrot.slane %v1450, 1
        %v1515 = vrot.slane %v1451, 1
        %v1516 = vrot.slane %v1452, 1
        %v1517 = vrot.slane %v1453, 1
        %v1518 = vrot.slane %v1454, 1
        %v1519 = vsel %vm489, %v1517, %v1518
        %v1520 = vsel %vm489, %v1516, %v1517
        %v1521 = vsel %vm489, %v1515, %v1516
        %v1522 = vsel %vm489, %v1514, %v1515
        %v1523 = vsel %vm489, %v1513, %v1514
        %v1524 = vsel %vm489, %v1512, %v1513
        %v1525 = vsel %vm489, %v1511, %v1512
        %v1526 = vsel %vm489, %v1518, %v1511
        %v1527 = vmul.f32 %v1519, %v499
        %v1528 = vmul.f32 %v1526, %v500
        %v1529 = vmul.f32 %v1525, %v501
        %v1530 = vmul.f32 %v1524, %v502
        %v1531 = vmul.f32 %v1523, %v503
        %v1532 = vmul.f32 %v1522, %v504
        %v1533 = vmul.f32 %v1521, %v505
        %v1534 = vmul.f32 %v1520, %v506
        %v1535 = vrot.slane %v1447, 2
        %v1536 = vrot.slane %v1448, 2
        %v1537 = vrot.slane %v1449, 2
        %v1538 = vrot.slane %v1450, 2
        %v1539 = vrot.slane %v1451, 2
        %v1540 = vrot.slane %v1452, 2
        %v1541 = vrot.slane %v1453, 2
        %v1542 = vrot.slane %v1454, 2
        %v1543 = vsel %vm523, %v1541, %v1542
        %v1544 = vsel %vm523, %v1540, %v1541
        %v1545 = vsel %vm523, %v1539, %v1540
        %v1546 = vsel %vm523, %v1538, %v1539
        %v1547 = vsel %vm523, %v1537, %v1538
        %v1548 = vsel %vm523, %v1536, %v1537
        %v1549 = vsel %vm523, %v1535, %v1536
        %v1550 = vsel %vm523, %v1542, %v1535
        %v1551 = vmul.f32 %v1543, %v533
        %v1552 = vmul.f32 %v1550, %v534
        %v1553 = vmul.f32 %v1549, %v535
        %v1554 = vmul.f32 %v1548, %v536
        %v1555 = vmul.f32 %v1547, %v537
        %v1556 = vmul.f32 %v1546, %v538
        %v1557 = vmul.f32 %v1545, %v539
        %v1558 = vmul.f32 %v1544, %v540
        %v1559 = vmul.f32 %v1463, %v550
        %v1560 = vmul.f32 %v1470, %v551
        %v1561 = vmul.f32 %v1469, %v552
        %v1562 = vmul.f32 %v1468, %v553
        %v1563 = vmul.f32 %v1467, %v554
        %v1564 = vmul.f32 %v1466, %v555
        %v1565 = vmul.f32 %v1465, %v556
        %v1566 = vmul.f32 %v1464, %v557
        %v1567 = vmul.f32 %v1487, %v567
        %v1568 = vmul.f32 %v1494, %v568
        %v1569 = vmul.f32 %v1493, %v569
        %v1570 = vmul.f32 %v1492, %v570
        %v1571 = vmul.f32 %v1491, %v571
        %v1572 = vmul.f32 %v1490, %v572
        %v1573 = vmul.f32 %v1489, %v573
        %v1574 = vmul.f32 %v1488, %v574
        %v1575 = vmul.f32 %v1454, %v584
        %v1576 = vmul.f32 %v1447, %v585
        %v1577 = vmul.f32 %v1448, %v586
        %v1578 = vmul.f32 %v1449, %v587
        %v1579 = vmul.f32 %v1450, %v588
        %v1580 = vmul.f32 %v1451, %v589
        %v1581 = vmul.f32 %v1452, %v590
        %v1582 = vmul.f32 %v1453, %v591
        %v1583 = vmul.f32 %v1526, %v601
        %v1584 = vmul.f32 %v1525, %v602
        %v1585 = vmul.f32 %v1524, %v603
        %v1586 = vmul.f32 %v1523, %v604
        %v1587 = vmul.f32 %v1522, %v605
        %v1588 = vmul.f32 %v1521, %v606
        %v1589 = vmul.f32 %v1520, %v607
        %v1590 = vmul.f32 %v1519, %v608
        %v1591 = vmul.f32 %v1550, %v618
        %v1592 = vmul.f32 %v1549, %v619
        %v1593 = vmul.f32 %v1548, %v620
        %v1594 = vmul.f32 %v1547, %v621
        %v1595 = vmul.f32 %v1546, %v622
        %v1596 = vmul.f32 %v1545, %v623
        %v1597 = vmul.f32 %v1544, %v624
        %v1598 = vmul.f32 %v1543, %v625
        %v1599 = vmul.f32 %v1470, %v635
        %v1600 = vmul.f32 %v1469, %v636
        %v1601 = vmul.f32 %v1468, %v637
        %v1602 = vmul.f32 %v1467, %v638
        %v1603 = vmul.f32 %v1466, %v639
        %v1604 = vmul.f32 %v1465, %v640
        %v1605 = vmul.f32 %v1464, %v641
        %v1606 = vmul.f32 %v1463, %v642
        %v1607 = vmul.f32 %v1494, %v652
        %v1608 = vmul.f32 %v1493, %v653
        %v1609 = vmul.f32 %v1492, %v654
        %v1610 = vmul.f32 %v1491, %v655
        %v1611 = vmul.f32 %v1490, %v656
        %v1612 = vmul.f32 %v1489, %v657
        %v1613 = vmul.f32 %v1488, %v658
        %v1614 = vmul.f32 %v1487, %v659
        %v1615 = vmul.f32 %v1447, %v669
        %v1616 = vmul.f32 %v1448, %v670
        %v1617 = vmul.f32 %v1449, %v671
        %v1618 = vmul.f32 %v1450, %v672
        %v1619 = vmul.f32 %v1451, %v673
        %v1620 = vmul.f32 %v1452, %v674
        %v1621 = vmul.f32 %v1453, %v675
        %v1622 = vmul.f32 %v1454, %v676
        %1631 = vrot.lane.b32.xlu0 %v1495, 32
        %v1632 = vpop.permute.xlu0 %1631
        %1633 = vrot.lane.b32.xlu0 %v1496, 32
        %v1634 = vpop.permute.xlu0 %1633
        %1635 = vrot.lane.b32.xlu0 %v1497, 32
        %v1636 = vpop.permute.xlu0 %1635
        %1637 = vrot.lane.b32.xlu0 %v1498, 32
        %v1638 = vpop.permute.xlu0 %1637
        %1639 = vrot.lane.b32.xlu0 %v1499, 32
        %v1640 = vpop.permute.xlu0 %1639
        %1641 = vrot.lane.b32.xlu0 %v1500, 32
        %v1642 = vpop.permute.xlu0 %1641
        %1643 = vrot.lane.b32.xlu0 %v1501, 32
        %v1644 = vpop.permute.xlu0 %1643
        %1645 = vrot.lane.b32.xlu0 %v1502, 32
        %v1646 = vpop.permute.xlu0 %1645
        %1663 = vrot.lane.b32.xlu0 %v1503, 64
        %v1664 = vpop.permute.xlu0 %1663
        %1665 = vrot.lane.b32.xlu0 %v1504, 64
        %v1666 = vpop.permute.xlu0 %1665
        %1667 = vrot.lane.b32.xlu0 %v1505, 64
        %v1668 = vpop.permute.xlu0 %1667
        %1669 = vrot.lane.b32.xlu0 %v1506, 64
        %v1670 = vpop.permute.xlu0 %1669
        %1671 = vrot.lane.b32.xlu0 %v1507, 64
        %v1672 = vpop.permute.xlu0 %1671
        %1673 = vrot.lane.b32.xlu0 %v1508, 64
        %v1674 = vpop.permute.xlu0 %1673
        %1675 = vrot.lane.b32.xlu0 %v1509, 64
        %v1676 = vpop.permute.xlu0 %1675
        %1677 = vrot.lane.b32.xlu0 %v1510, 64
        %v1678 = vpop.permute.xlu0 %1677
        %1695 = vrot.lane.b32.xlu0 %v1527, 96
        %v1696 = vpop.permute.xlu0 %1695
        %1697 = vrot.lane.b32.xlu0 %v1528, 96
        %v1698 = vpop.permute.xlu0 %1697
        %1699 = vrot.lane.b32.xlu0 %v1529, 96
        %v1700 = vpop.permute.xlu0 %1699
        %1701 = vrot.lane.b32.xlu0 %v1530, 96
        %v1702 = vpop.permute.xlu0 %1701
        %1703 = vrot.lane.b32.xlu0 %v1531, 96
        %v1704 = vpop.permute.xlu0 %1703
        %1705 = vrot.lane.b32.xlu0 %v1532, 96
        %v1706 = vpop.permute.xlu0 %1705
        %1707 = vrot.lane.b32.xlu0 %v1533, 96
        %v1708 = vpop.permute.xlu0 %1707
        %1709 = vrot.lane.b32.xlu0 %v1534, 96
        %v1710 = vpop.permute.xlu0 %1709
        %1727 = vrot.lane.b32.xlu0 %v1559, 32
        %v1728 = vpop.permute.xlu0 %1727
        %1729 = vrot.lane.b32.xlu0 %v1560, 32
        %v1730 = vpop.permute.xlu0 %1729
        %1731 = vrot.lane.b32.xlu0 %v1561, 32
        %v1732 = vpop.permute.xlu0 %1731
        %1733 = vrot.lane.b32.xlu0 %v1562, 32
        %v1734 = vpop.permute.xlu0 %1733
        %1735 = vrot.lane.b32.xlu0 %v1563, 32
        %v1736 = vpop.permute.xlu0 %1735
        %1737 = vrot.lane.b32.xlu0 %v1564, 32
        %v1738 = vpop.permute.xlu0 %1737
        %1739 = vrot.lane.b32.xlu0 %v1565, 32
        %v1740 = vpop.permute.xlu0 %1739
        %1741 = vrot.lane.b32.xlu0 %v1566, 32
        %v1742 = vpop.permute.xlu0 %1741
        %1759 = vrot.lane.b32.xlu0 %v1567, 64
        %v1760 = vpop.permute.xlu0 %1759
        %1761 = vrot.lane.b32.xlu0 %v1568, 64
        %v1762 = vpop.permute.xlu0 %1761
        %1763 = vrot.lane.b32.xlu0 %v1569, 64
        %v1764 = vpop.permute.xlu0 %1763
        %1765 = vrot.lane.b32.xlu0 %v1570, 64
        %v1766 = vpop.permute.xlu0 %1765
        %1767 = vrot.lane.b32.xlu0 %v1571, 64
        %v1768 = vpop.permute.xlu0 %1767
        %1769 = vrot.lane.b32.xlu0 %v1572, 64
        %v1770 = vpop.permute.xlu0 %1769
        %1771 = vrot.lane.b32.xlu0 %v1573, 64
        %v1772 = vpop.permute.xlu0 %1771
        %1773 = vrot.lane.b32.xlu0 %v1574, 64
        %v1774 = vpop.permute.xlu0 %1773
        %1791 = vrot.lane.b32.xlu0 %v1575, 96
        %v1792 = vpop.permute.xlu0 %1791
        %1793 = vrot.lane.b32.xlu0 %v1576, 96
        %v1794 = vpop.permute.xlu0 %1793
        %1795 = vrot.lane.b32.xlu0 %v1577, 96
        %v1796 = vpop.permute.xlu0 %1795
        %1797 = vrot.lane.b32.xlu0 %v1578, 96
        %v1798 = vpop.permute.xlu0 %1797
        %1799 = vrot.lane.b32.xlu0 %v1579, 96
        %v1800 = vpop.permute.xlu0 %1799
        %1801 = vrot.lane.b32.xlu0 %v1580, 96
        %v1802 = vpop.permute.xlu0 %1801
        %1803 = vrot.lane.b32.xlu0 %v1581, 96
        %v1804 = vpop.permute.xlu0 %1803
        %1805 = vrot.lane.b32.xlu0 %v1582, 96
        %v1806 = vpop.permute.xlu0 %1805
        %1823 = vrot.lane.b32.xlu0 %v1591, 32
        %v1824 = vpop.permute.xlu0 %1823
        %1825 = vrot.lane.b32.xlu0 %v1592, 32
        %v1826 = vpop.permute.xlu0 %1825
        %1827 = vrot.lane.b32.xlu0 %v1593, 32
        %v1828 = vpop.permute.xlu0 %1827
        %1829 = vrot.lane.b32.xlu0 %v1594, 32
        %v1830 = vpop.permute.xlu0 %1829
        %1831 = vrot.lane.b32.xlu0 %v1595, 32
        %v1832 = vpop.permute.xlu0 %1831
        %1833 = vrot.lane.b32.xlu0 %v1596, 32
        %v1834 = vpop.permute.xlu0 %1833
        %1835 = vrot.lane.b32.xlu0 %v1597, 32
        %v1836 = vpop.permute.xlu0 %1835
        %1837 = vrot.lane.b32.xlu0 %v1598, 32
        %v1838 = vpop.permute.xlu0 %1837
        %1855 = vrot.lane.b32.xlu0 %v1599, 64
        %v1856 = vpop.permute.xlu0 %1855
        %1857 = vrot.lane.b32.xlu0 %v1600, 64
        %v1858 = vpop.permute.xlu0 %1857
        %1859 = vrot.lane.b32.xlu0 %v1601, 64
        %v1860 = vpop.permute.xlu0 %1859
        %1861 = vrot.lane.b32.xlu0 %v1602, 64
        %v1862 = vpop.permute.xlu0 %1861
        %1863 = vrot.lane.b32.xlu0 %v1603, 64
        %v1864 = vpop.permute.xlu0 %1863
        %1865 = vrot.lane.b32.xlu0 %v1604, 64
        %v1866 = vpop.permute.xlu0 %1865
        %1867 = vrot.lane.b32.xlu0 %v1605, 64
        %v1868 = vpop.permute.xlu0 %1867
        %1869 = vrot.lane.b32.xlu0 %v1606, 64
        %v1870 = vpop.permute.xlu0 %1869
        %1887 = vrot.lane.b32.xlu0 %v1607, 96
        %v1888 = vpop.permute.xlu0 %1887
        %1889 = vrot.lane.b32.xlu0 %v1608, 96
        %v1890 = vpop.permute.xlu0 %1889
        %1891 = vrot.lane.b32.xlu0 %v1609, 96
        %v1892 = vpop.permute.xlu0 %1891
        %1893 = vrot.lane.b32.xlu0 %v1610, 96
        %v1894 = vpop.permute.xlu0 %1893
        %1895 = vrot.lane.b32.xlu0 %v1611, 96
        %v1896 = vpop.permute.xlu0 %1895
        %1897 = vrot.lane.b32.xlu0 %v1612, 96
        %v1898 = vpop.permute.xlu0 %1897
        %1899 = vrot.lane.b32.xlu0 %v1613, 96
        %v1900 = vpop.permute.xlu0 %1899
        %1901 = vrot.lane.b32.xlu0 %v1614, 96
        %v1902 = vpop.permute.xlu0 %1901
        %v1911 = vsel %vm973, %v1471, %v1632
        %v1912 = vsel %vm973, %v1472, %v1634
        %v1913 = vsel %vm973, %v1473, %v1636
        %v1914 = vsel %vm973, %v1474, %v1638
        %v1915 = vsel %vm973, %v1475, %v1640
        %v1916 = vsel %vm973, %v1476, %v1642
        %v1917 = vsel %vm973, %v1477, %v1644
        %v1918 = vsel %vm973, %v1478, %v1646
        %v1919 = vsel %vm353, %v1911, %v1664
        %v1920 = vsel %vm353, %v1912, %v1666
        %v1921 = vsel %vm353, %v1913, %v1668
        %v1922 = vsel %vm353, %v1914, %v1670
        %v1923 = vsel %vm353, %v1915, %v1672
        %v1924 = vsel %vm353, %v1916, %v1674
        %v1925 = vsel %vm353, %v1917, %v1676
        %v1926 = vsel %vm353, %v1918, %v1678
        %v1927 = vsel %vm990, %v1919, %v1696
        %v1928 = vsel %vm990, %v1920, %v1698
        %v1929 = vsel %vm990, %v1921, %v1700
        %v1930 = vsel %vm990, %v1922, %v1702
        %v1931 = vsel %vm990, %v1923, %v1704
        %v1932 = vsel %vm990, %v1924, %v1706
        %v1933 = vsel %vm990, %v1925, %v1708
        %v1934 = vsel %vm990, %v1926, %v1710
        %v1935 = vsel %vm973, %v1551, %v1728
        %v1936 = vsel %vm973, %v1552, %v1730
        %v1937 = vsel %vm973, %v1553, %v1732
        %v1938 = vsel %vm973, %v1554, %v1734
        %v1939 = vsel %vm973, %v1555, %v1736
        %v1940 = vsel %vm973, %v1556, %v1738
        %v1941 = vsel %vm973, %v1557, %v1740
        %v1942 = vsel %vm973, %v1558, %v1742
        %v1943 = vsel %vm353, %v1935, %v1760
        %v1944 = vsel %vm353, %v1936, %v1762
        %v1945 = vsel %vm353, %v1937, %v1764
        %v1946 = vsel %vm353, %v1938, %v1766
        %v1947 = vsel %vm353, %v1939, %v1768
        %v1948 = vsel %vm353, %v1940, %v1770
        %v1949 = vsel %vm353, %v1941, %v1772
        %v1950 = vsel %vm353, %v1942, %v1774
        %v1951 = vsel %vm990, %v1943, %v1792
        %v1952 = vsel %vm990, %v1944, %v1794
        %v1953 = vsel %vm990, %v1945, %v1796
        %v1954 = vsel %vm990, %v1946, %v1798
        %v1955 = vsel %vm990, %v1947, %v1800
        %v1956 = vsel %vm990, %v1948, %v1802
        %v1957 = vsel %vm990, %v1949, %v1804
        %v1958 = vsel %vm990, %v1950, %v1806
        %v1959 = vsel %vm973, %v1583, %v1824
        %v1960 = vsel %vm973, %v1584, %v1826
        %v1961 = vsel %vm973, %v1585, %v1828
        %v1962 = vsel %vm973, %v1586, %v1830
        %v1963 = vsel %vm973, %v1587, %v1832
        %v1964 = vsel %vm973, %v1588, %v1834
        %v1965 = vsel %vm973, %v1589, %v1836
        %v1966 = vsel %vm973, %v1590, %v1838
        %v1967 = vsel %vm353, %v1959, %v1856
        %v1968 = vsel %vm353, %v1960, %v1858
        %v1969 = vsel %vm353, %v1961, %v1860
        %v1970 = vsel %vm353, %v1962, %v1862
        %v1971 = vsel %vm353, %v1963, %v1864
        %v1972 = vsel %vm353, %v1964, %v1866
        %v1973 = vsel %vm353, %v1965, %v1868
        %v1974 = vsel %vm353, %v1966, %v1870
        %v1975 = vsel %vm990, %v1967, %v1888
        %v1976 = vsel %vm990, %v1968, %v1890
        %v1977 = vsel %vm990, %v1969, %v1892
        %v1978 = vsel %vm990, %v1970, %v1894
        %v1979 = vsel %vm990, %v1971, %v1896
        %v1980 = vsel %vm990, %v1972, %v1898
        %v1981 = vsel %vm990, %v1973, %v1900
        %v1982 = vsel %vm990, %v1974, %v1902
        %v1983 = vsel %vm973, %v1615, 0.0
        %v1984 = vsel %vm973, %v1616, 0.0
        %v1985 = vsel %vm973, %v1617, 0.0
        %v1986 = vsel %vm973, %v1618, 0.0
        %v1987 = vsel %vm973, %v1619, 0.0
        %v1988 = vsel %vm973, %v1620, 0.0
        %v1989 = vsel %vm973, %v1621, 0.0
        %v1990 = vsel %vm973, %v1622, 0.0
        %v1991 = vpack.c.bf16 %v1928, %v1927
        %v1992 = vpack.c.bf16 %v1952, %v1951
        %v1993 = vpack.c.bf16 %v1976, %v1975
        %v1994 = vpack.c.bf16 %v1984, %v1983
        %v1995 = vpack.c.bf16 %v1930, %v1929
        %v1996 = vpack.c.bf16 %v1954, %v1953
        %v1997 = vpack.c.bf16 %v1978, %v1977
        %v1998 = vpack.c.bf16 %v1986, %v1985
        %v1999 = vpack.c.bf16 %v1932, %v1931
        %v2000 = vpack.c.bf16 %v1956, %v1955
        %v2001 = vpack.c.bf16 %v1980, %v1979
        %v2002 = vpack.c.bf16 %v1988, %v1987
        %v2003 = vpack.c.bf16 %v1934, %v1933
        %v2004 = vpack.c.bf16 %v1958, %v1957
        %v2005 = vpack.c.bf16 %v1982, %v1981
        %v2006 = vpack.c.bf16 %v1990, %v1989
        %s2007 = scalar_lea.vmem %s4, 256
        %v2008 = vld [vmem:[%s2007] sm:$0xf]
        %v2009 = vld [vmem:[%s2007 + $0x4] sm:$0xf]
        %v2010 = vld [vmem:[%s2007 + $0x8] sm:$0xf]
        %v2011 = vld [vmem:[%s2007 + $0xc] sm:$0xf]
        %v2012 = vld [vmem:[%s2007 + $0x10] sm:$0xf]
        %v2013 = vld [vmem:[%s2007 + $0x14] sm:$0xf]
        %v2014 = vld [vmem:[%s2007 + $0x18] sm:$0xf]
        %v2015 = vld [vmem:[%s2007 + $0x1c] sm:$0xf]
        %v2016 = vld [vmem:[%s2007 + $0x20] sm:$0xf]
        %v2017 = vld [vmem:[%s2007 + $0x24] sm:$0xf]
        %v2018 = vld [vmem:[%s2007 + $0x28] sm:$0xf]
        %v2019 = vld [vmem:[%s2007 + $0x2c] sm:$0xf]
        %v2020 = vld [vmem:[%s2007 + $0x30] sm:$0xf]
        %v2021 = vld [vmem:[%s2007 + $0x34] sm:$0xf]
        %v2022 = vld [vmem:[%s2007 + $0x38] sm:$0xf]
        %v2023 = vld [vmem:[%s2007 + $0x3c] sm:$0xf]
        %v2024 = vld [vmem:[%s2007 + $0x40] sm:$0xf]
        %v2025 = vld [vmem:[%s2007 + $0x44] sm:$0xf]
        %v2026 = vld [vmem:[%s2007 + $0x48] sm:$0xf]
        %v2027 = vld [vmem:[%s2007 + $0x4c] sm:$0xf]
        %v2028 = vld [vmem:[%s2007 + $0x50] sm:$0xf]
        %v2029 = vld [vmem:[%s2007 + $0x54] sm:$0xf]
        %v2030 = vld [vmem:[%s2007 + $0x58] sm:$0xf]
        %v2031 = vld [vmem:[%s2007 + $0x5c] sm:$0xf]
        %v2032 = vld [vmem:[%s2007 + $0x60] sm:$0xf]
        %v2033 = vld [vmem:[%s2007 + $0x64] sm:$0xf]
        %v2034 = vld [vmem:[%s2007 + $0x68] sm:$0xf]
        %v2035 = vld [vmem:[%s2007 + $0x6c] sm:$0xf]
        %v2036 = vld [vmem:[%s2007 + $0x70] sm:$0xf]
        %v2037 = vld [vmem:[%s2007 + $0x74] sm:$0xf]
        %v2038 = vld [vmem:[%s2007 + $0x78] sm:$0xf]
        %v2039 = vld [vmem:[%s2007 + $0x7c] sm:$0xf]
        %v2040 = vld [vmem:[%s2007 + $0x80] sm:$0xf]
        %v2041 = vld [vmem:[%s2007 + $0x84] sm:$0xf]
        %v2042 = vld [vmem:[%s2007 + $0x88] sm:$0xf]
        %v2043 = vld [vmem:[%s2007 + $0x8c] sm:$0xf]
        %v2044 = vld [vmem:[%s2007 + $0x90] sm:$0xf]
        %v2045 = vld [vmem:[%s2007 + $0x94] sm:$0xf]
        %v2046 = vld [vmem:[%s2007 + $0x98] sm:$0xf]
        %v2047 = vld [vmem:[%s2007 + $0x9c] sm:$0xf]
        %v2048 = vld [vmem:[%s2007 + $0xa0] sm:$0xf]
        %v2049 = vld [vmem:[%s2007 + $0xa4] sm:$0xf]
        %v2050 = vld [vmem:[%s2007 + $0xa8] sm:$0xf]
        %v2051 = vld [vmem:[%s2007 + $0xac] sm:$0xf]
        %v2052 = vld [vmem:[%s2007 + $0xb0] sm:$0xf]
        %v2053 = vld [vmem:[%s2007 + $0xb4] sm:$0xf]
        %v2054 = vld [vmem:[%s2007 + $0xb8] sm:$0xf]
        %v2055 = vld [vmem:[%s2007 + $0xbc] sm:$0xf]
        %v2056 = vld [vmem:[%s2007 + $0xc0] sm:$0xf]
        %v2057 = vld [vmem:[%s2007 + $0xc4] sm:$0xf]
        %v2058 = vld [vmem:[%s2007 + $0xc8] sm:$0xf]
        %v2059 = vld [vmem:[%s2007 + $0xcc] sm:$0xf]
        %v2060 = vld [vmem:[%s2007 + $0xd0] sm:$0xf]
        %v2061 = vld [vmem:[%s2007 + $0xd4] sm:$0xf]
        %v2062 = vld [vmem:[%s2007 + $0xd8] sm:$0xf]
        %v2063 = vld [vmem:[%s2007 + $0xdc] sm:$0xf]
        %v2064 = vld [vmem:[%s2007 + $0xe0] sm:$0xf]
        %v2065 = vld [vmem:[%s2007 + $0xe4] sm:$0xf]
        %v2066 = vld [vmem:[%s2007 + $0xe8] sm:$0xf]
        %v2067 = vld [vmem:[%s2007 + $0xec] sm:$0xf]
        %v2068 = vld [vmem:[%s2007 + $0xf0] sm:$0xf]
        %v2069 = vld [vmem:[%s2007 + $0xf4] sm:$0xf]
        %v2070 = vld [vmem:[%s2007 + $0xf8] sm:$0xf]
        %v2071 = vld [vmem:[%s2007 + $0xfc] sm:$0xf]
        %s2072 = scalar_lea.vmem %s5, 1
        %v2073 = vld [vmem:[%s2072] sm:$0x1]
        %v2075 = vperm.slane %v2073, 0
        %v2141 = vunpack.c.l.b16 %v2008
        %v2142 = vunpack.c.l.b16 %v2009
        %v2143 = vunpack.c.l.b16 %v2010
        %v2144 = vunpack.c.l.b16 %v2011
        %v2145 = vunpack.c.l.b16 %v2012
        %v2146 = vunpack.c.l.b16 %v2013
        %v2147 = vunpack.c.l.b16 %v2014
        %v2148 = vunpack.c.l.b16 %v2015
        %v2149 = vunpack.c.l.b16 %v2016
        %v2150 = vunpack.c.l.b16 %v2017
        %v2151 = vunpack.c.l.b16 %v2018
        %v2152 = vunpack.c.l.b16 %v2019
        %v2153 = vunpack.c.l.b16 %v2020
        %v2154 = vunpack.c.l.b16 %v2021
        %v2155 = vunpack.c.l.b16 %v2022
        %v2156 = vunpack.c.l.b16 %v2023
        %v2157 = vunpack.c.l.b16 %v2024
        %v2158 = vunpack.c.l.b16 %v2025
        %v2159 = vunpack.c.l.b16 %v2026
        %v2160 = vunpack.c.l.b16 %v2027
        %v2161 = vunpack.c.l.b16 %v2028
        %v2162 = vunpack.c.l.b16 %v2029
        %v2163 = vunpack.c.l.b16 %v2030
        %v2164 = vunpack.c.l.b16 %v2031
        %v2165 = vunpack.c.l.b16 %v2032
        %v2166 = vunpack.c.l.b16 %v2033
        %v2167 = vunpack.c.l.b16 %v2034
        %v2168 = vunpack.c.l.b16 %v2035
        %v2169 = vunpack.c.l.b16 %v2036
        %v2170 = vunpack.c.l.b16 %v2037
        %v2171 = vunpack.c.l.b16 %v2038
        %v2172 = vunpack.c.l.b16 %v2039
        %v2173 = vunpack.c.l.b16 %v2040
        %v2174 = vunpack.c.l.b16 %v2041
        %v2175 = vunpack.c.l.b16 %v2042
        %v2176 = vunpack.c.l.b16 %v2043
        %v2177 = vunpack.c.l.b16 %v2044
        %v2178 = vunpack.c.l.b16 %v2045
        %v2179 = vunpack.c.l.b16 %v2046
        %v2180 = vunpack.c.l.b16 %v2047
        %v2181 = vunpack.c.l.b16 %v2048
        %v2182 = vunpack.c.l.b16 %v2049
        %v2183 = vunpack.c.l.b16 %v2050
        %v2184 = vunpack.c.l.b16 %v2051
        %v2185 = vunpack.c.l.b16 %v2052
        %v2186 = vunpack.c.l.b16 %v2053
        %v2187 = vunpack.c.l.b16 %v2054
        %v2188 = vunpack.c.l.b16 %v2055
        %v2189 = vunpack.c.l.b16 %v2056
        %v2190 = vunpack.c.l.b16 %v2057
        %v2191 = vunpack.c.l.b16 %v2058
        %v2192 = vunpack.c.l.b16 %v2059
        %v2193 = vunpack.c.l.b16 %v2060
        %v2194 = vunpack.c.l.b16 %v2061
        %v2195 = vunpack.c.l.b16 %v2062
        %v2196 = vunpack.c.l.b16 %v2063
        %v2197 = vunpack.c.l.b16 %v2064
        %v2198 = vunpack.c.l.b16 %v2065
        %v2199 = vunpack.c.l.b16 %v2066
        %v2200 = vunpack.c.l.b16 %v2067
        %v2201 = vunpack.c.l.b16 %v2068
        %v2202 = vunpack.c.l.b16 %v2069
        %v2203 = vunpack.c.l.b16 %v2070
        %v2204 = vunpack.c.l.b16 %v2071
        %v2205 = vpack.c.b16 %v2142, %v2141
        %v2206 = vpack.c.b16 %v2144, %v2143
        %v2207 = vpack.c.b16 %v2146, %v2145
        %v2208 = vpack.c.b16 %v2148, %v2147
        %v2209 = vpack.c.b16 %v2150, %v2149
        %v2210 = vpack.c.b16 %v2152, %v2151
        %v2211 = vpack.c.b16 %v2154, %v2153
        %v2212 = vpack.c.b16 %v2156, %v2155
        %v2213 = vpack.c.b16 %v2158, %v2157
        %v2214 = vpack.c.b16 %v2160, %v2159
        %v2215 = vpack.c.b16 %v2162, %v2161
        %v2216 = vpack.c.b16 %v2164, %v2163
        %v2217 = vpack.c.b16 %v2166, %v2165
        %v2218 = vpack.c.b16 %v2168, %v2167
        %v2219 = vpack.c.b16 %v2170, %v2169
        %v2220 = vpack.c.b16 %v2172, %v2171
        %v2221 = vpack.c.b16 %v2174, %v2173
        %v2222 = vpack.c.b16 %v2176, %v2175
        %v2223 = vpack.c.b16 %v2178, %v2177
        %v2224 = vpack.c.b16 %v2180, %v2179
        %v2225 = vpack.c.b16 %v2182, %v2181
        %v2226 = vpack.c.b16 %v2184, %v2183
        %v2227 = vpack.c.b16 %v2186, %v2185
        %v2228 = vpack.c.b16 %v2188, %v2187
        %v2229 = vpack.c.b16 %v2190, %v2189
        %v2230 = vpack.c.b16 %v2192, %v2191
        %v2231 = vpack.c.b16 %v2194, %v2193
        %v2232 = vpack.c.b16 %v2196, %v2195
        %v2233 = vpack.c.b16 %v2198, %v2197
        %v2234 = vpack.c.b16 %v2200, %v2199
        %v2235 = vpack.c.b16 %v2202, %v2201
        %v2236 = vpack.c.b16 %v2204, %v2203
        %2269 = vmatpush.bf16.msra.mxu0 %v2212
        %2270 = vmatpush.bf16.msra.mxu0 %v2211
        %2271 = vmatpush.bf16.msra.mxu0 %v2210
        %2272 = vmatpush.bf16.msra.mxu0 %v2209
        %2273 = vmatpush.bf16.msra.mxu0 %v2208
        %2274 = vmatpush.bf16.msra.mxu0 %v2207
        %2275 = vmatpush.bf16.msra.mxu0 %v2206
        %2276 = vmatpush.bf16.msra.mxu0 %v2205
        %2277 = vmatmul.bf16.gmra.mxu0 %v1991
        %v2278 = vpop.f32.mrf.mxu0
        %v2279 = vadd.f32 %v2075, %v2278
        %v2280 = vpop.f32.mrf.mxu0
        %v2281 = vadd.f32 %v2075, %v2280
        %2282 = vmatmul.bf16.gmra.mxu0 %v1995
        %v2283 = vpop.f32.mrf.mxu0
        %v2284 = vadd.f32 %v2075, %v2283
        %v2285 = vpop.f32.mrf.mxu0
        %v2286 = vadd.f32 %v2075, %v2285
        %2287 = vmatmul.bf16.gmra.mxu0 %v1999
        %v2288 = vpop.f32.mrf.mxu0
        %v2289 = vadd.f32 %v2075, %v2288
        %v2290 = vpop.f32.mrf.mxu0
        %v2291 = vadd.f32 %v2075, %v2290
        %2292 = vmatmul.bf16.gmra.mxu0 %v2003
        %v2293 = vpop.f32.mrf.mxu0
        %v2294 = vadd.f32 %v2075, %v2293
        %v2295 = vpop.f32.mrf.mxu0
        %v2296 = vadd.f32 %v2075, %v2295
        %2297 = vdwg.mxu0
        %2298 = vmatpush.bf16.msra.mxu0 %v2220
        %2299 = vmatpush.bf16.msra.mxu0 %v2219
        %2300 = vmatpush.bf16.msra.mxu0 %v2218
        %2301 = vmatpush.bf16.msra.mxu0 %v2217
        %2302 = vmatpush.bf16.msra.mxu0 %v2216
        %2303 = vmatpush.bf16.msra.mxu0 %v2215
        %2304 = vmatpush.bf16.msra.mxu0 %v2214
        %2305 = vmatpush.bf16.msra.mxu0 %v2213
        %2306 = vmatmul.bf16.gmra.mxu0 %v1992
        %v2307 = vpop.f32.mrf.mxu0
        %v2308 = vadd.f32 %v2279, %v2307
        %v2309 = vpop.f32.mrf.mxu0
        %v2310 = vadd.f32 %v2281, %v2309
        %2311 = vmatmul.bf16.gmra.mxu0 %v1996
        %v2312 = vpop.f32.mrf.mxu0
        %v2313 = vadd.f32 %v2284, %v2312
        %v2314 = vpop.f32.mrf.mxu0
        %v2315 = vadd.f32 %v2286, %v2314
        %2316 = vmatmul.bf16.gmra.mxu0 %v2000
        %v2317 = vpop.f32.mrf.mxu0
        %v2318 = vadd.f32 %v2289, %v2317
        %v2319 = vpop.f32.mrf.mxu0
        %v2320 = vadd.f32 %v2291, %v2319
        %2321 = vmatmul.bf16.gmra.mxu0 %v2004
        %v2322 = vpop.f32.mrf.mxu0
        %v2323 = vadd.f32 %v2294, %v2322
        %v2324 = vpop.f32.mrf.mxu0
        %v2325 = vadd.f32 %v2296, %v2324
        %2326 = vdwg.mxu0
        %2327 = vmatpush.bf16.msra.mxu0 %v2228
        %2328 = vmatpush.bf16.msra.mxu0 %v2227
        %2329 = vmatpush.bf16.msra.mxu0 %v2226
        %2330 = vmatpush.bf16.msra.mxu0 %v2225
        %2331 = vmatpush.bf16.msra.mxu0 %v2224
        %2332 = vmatpush.bf16.msra.mxu0 %v2223
        %2333 = vmatpush.bf16.msra.mxu0 %v2222
        %2334 = vmatpush.bf16.msra.mxu0 %v2221
        %2335 = vmatmul.bf16.gmra.mxu0 %v1993
        %v2336 = vpop.f32.mrf.mxu0
        %v2337 = vadd.f32 %v2308, %v2336
        %v2338 = vpop.f32.mrf.mxu0
        %v2339 = vadd.f32 %v2310, %v2338
        %2340 = vmatmul.bf16.gmra.mxu0 %v1997
        %v2341 = vpop.f32.mrf.mxu0
        %v2342 = vadd.f32 %v2313, %v2341
        %v2343 = vpop.f32.mrf.mxu0
        %v2344 = vadd.f32 %v2315, %v2343
        %2345 = vmatmul.bf16.gmra.mxu0 %v2001
        %v2346 = vpop.f32.mrf.mxu0
        %v2347 = vadd.f32 %v2318, %v2346
        %v2348 = vpop.f32.mrf.mxu0
        %v2349 = vadd.f32 %v2320, %v2348
        %2350 = vmatmul.bf16.gmra.mxu0 %v2005
        %v2351 = vpop.f32.mrf.mxu0
        %v2352 = vadd.f32 %v2323, %v2351
        %v2353 = vpop.f32.mrf.mxu0
        %v2354 = vadd.f32 %v2325, %v2353
        %2355 = vdwg.mxu0
        %2356 = vmatpush.bf16.msra.mxu0 %v2236
        %2357 = vmatpush.bf16.msra.mxu0 %v2235
        %2358 = vmatpush.bf16.msra.mxu0 %v2234
        %2359 = vmatpush.bf16.msra.mxu0 %v2233
        %2360 = vmatpush.bf16.msra.mxu0 %v2232
        %2361 = vmatpush.bf16.msra.mxu0 %v2231
        %2362 = vmatpush.bf16.msra.mxu0 %v2230
        %2363 = vmatpush.bf16.msra.mxu0 %v2229
        %2364 = vmatmul.bf16.gmra.mxu0 %v1994
        %v2365 = vpop.f32.mrf.mxu0
        %v2366 = vadd.f32 %v2337, %v2365
        %v2367 = vpop.f32.mrf.mxu0
        %v2368 = vadd.f32 %v2339, %v2367
        %2369 = vmatmul.bf16.gmra.mxu0 %v1998
        %v2370 = vpop.f32.mrf.mxu0
        %v2371 = vadd.f32 %v2342, %v2370
        %v2372 = vpop.f32.mrf.mxu0
        %v2373 = vadd.f32 %v2344, %v2372
        %2374 = vmatmul.bf16.gmra.mxu0 %v2002
        %v2375 = vpop.f32.mrf.mxu0
        %v2376 = vadd.f32 %v2347, %v2375
        %v2377 = vpop.f32.mrf.mxu0
        %v2378 = vadd.f32 %v2349, %v2377
        %2379 = vmatmul.bf16.gmra.mxu0 %v2006
        %v2380 = vpop.f32.mrf.mxu0
        %v2381 = vadd.f32 %v2352, %v2380
        %v2382 = vpop.f32.mrf.mxu0
        %v2383 = vadd.f32 %v2354, %v2382
        %2384 = vdwg.mxu0
        %v2385 = vmax.f32 %v2366, 0.0
        %v2386 = vmax.f32 %v2368, 0.0
        %v2387 = vmax.f32 %v2371, 0.0
        %v2388 = vmax.f32 %v2373, 0.0
        %v2389 = vmax.f32 %v2376, 0.0
        %v2390 = vmax.f32 %v2378, 0.0
        %v2391 = vmax.f32 %v2381, 0.0
        %v2392 = vmax.f32 %v2383, 0.0
        %v2393 = vrot.slane %v2385, 6
        %v2394 = vrot.slane %v2386, 6
        %v2395 = vrot.slane %v2387, 6
        %v2396 = vrot.slane %v2388, 6
        %v2397 = vrot.slane %v2389, 6
        %v2398 = vrot.slane %v2390, 6
        %v2399 = vrot.slane %v2391, 6
        %v2400 = vrot.slane %v2392, 6
        %v2401 = vsel %vm405, %v2399, %v2400
        %v2402 = vsel %vm405, %v2398, %v2399
        %v2403 = vsel %vm405, %v2397, %v2398
        %v2404 = vsel %vm405, %v2396, %v2397
        %v2405 = vsel %vm405, %v2395, %v2396
        %v2406 = vsel %vm405, %v2394, %v2395
        %v2407 = vsel %vm405, %v2393, %v2394
        %v2408 = vsel %vm405, %v2400, %v2393
        %v2409 = vmul.f32 %v2402, %v414
        %v2410 = vmul.f32 %v2401, %v415
        %v2411 = vmul.f32 %v2408, %v416
        %v2412 = vmul.f32 %v2407, %v417
        %v2413 = vmul.f32 %v2406, %v418
        %v2414 = vmul.f32 %v2405, %v419
        %v2415 = vmul.f32 %v2404, %v420
        %v2416 = vmul.f32 %v2403, %v421
        %v2417 = vrot.slane %v2385, 7
        %v2418 = vrot.slane %v2386, 7
        %v2419 = vrot.slane %v2387, 7
        %v2420 = vrot.slane %v2388, 7
        %v2421 = vrot.slane %v2389, 7
        %v2422 = vrot.slane %v2390, 7
        %v2423 = vrot.slane %v2391, 7
        %v2424 = vrot.slane %v2392, 7
        %v2425 = vsel %vm438, %v2423, %v2424
        %v2426 = vsel %vm438, %v2422, %v2423
        %v2427 = vsel %vm438, %v2421, %v2422
        %v2428 = vsel %vm438, %v2420, %v2421
        %v2429 = vsel %vm438, %v2419, %v2420
        %v2430 = vsel %vm438, %v2418, %v2419
        %v2431 = vsel %vm438, %v2417, %v2418
        %v2432 = vsel %vm438, %v2424, %v2417
        %v2433 = vmul.f32 %v2426, %v448
        %v2434 = vmul.f32 %v2425, %v449
        %v2435 = vmul.f32 %v2432, %v450
        %v2436 = vmul.f32 %v2431, %v451
        %v2437 = vmul.f32 %v2430, %v452
        %v2438 = vmul.f32 %v2429, %v453
        %v2439 = vmul.f32 %v2428, %v454
        %v2440 = vmul.f32 %v2427, %v455
        %v2441 = vmul.f32 %v2391, %v465
        %v2442 = vmul.f32 %v2392, %v466
        %v2443 = vmul.f32 %v2385, %v467
        %v2444 = vmul.f32 %v2386, %v468
        %v2445 = vmul.f32 %v2387, %v469
        %v2446 = vmul.f32 %v2388, %v470
        %v2447 = vmul.f32 %v2389, %v471
        %v2448 = vmul.f32 %v2390, %v472
        %v2449 = vrot.slane %v2385, 1
        %v2450 = vrot.slane %v2386, 1
        %v2451 = vrot.slane %v2387, 1
        %v2452 = vrot.slane %v2388, 1
        %v2453 = vrot.slane %v2389, 1
        %v2454 = vrot.slane %v2390, 1
        %v2455 = vrot.slane %v2391, 1
        %v2456 = vrot.slane %v2392, 1
        %v2457 = vsel %vm489, %v2455, %v2456
        %v2458 = vsel %vm489, %v2454, %v2455
        %v2459 = vsel %vm489, %v2453, %v2454
        %v2460 = vsel %vm489, %v2452, %v2453
        %v2461 = vsel %vm489, %v2451, %v2452
        %v2462 = vsel %vm489, %v2450, %v2451
        %v2463 = vsel %vm489, %v2449, %v2450
        %v2464 = vsel %vm489, %v2456, %v2449
        %v2465 = vmul.f32 %v2457, %v499
        %v2466 = vmul.f32 %v2464, %v500
        %v2467 = vmul.f32 %v2463, %v501
        %v2468 = vmul.f32 %v2462, %v502
        %v2469 = vmul.f32 %v2461, %v503
        %v2470 = vmul.f32 %v2460, %v504
        %v2471 = vmul.f32 %v2459, %v505
        %v2472 = vmul.f32 %v2458, %v506
        %v2473 = vrot.slane %v2385, 2
        %v2474 = vrot.slane %v2386, 2
        %v2475 = vrot.slane %v2387, 2
        %v2476 = vrot.slane %v2388, 2
        %v2477 = vrot.slane %v2389, 2
        %v2478 = vrot.slane %v2390, 2
        %v2479 = vrot.slane %v2391, 2
        %v2480 = vrot.slane %v2392, 2
        %v2481 = vsel %vm523, %v2479, %v2480
        %v2482 = vsel %vm523, %v2478, %v2479
        %v2483 = vsel %vm523, %v2477, %v2478
        %v2484 = vsel %vm523, %v2476, %v2477
        %v2485 = vsel %vm523, %v2475, %v2476
        %v2486 = vsel %vm523, %v2474, %v2475
        %v2487 = vsel %vm523, %v2473, %v2474
        %v2488 = vsel %vm523, %v2480, %v2473
        %v2489 = vmul.f32 %v2481, %v533
        %v2490 = vmul.f32 %v2488, %v534
        %v2491 = vmul.f32 %v2487, %v535
        %v2492 = vmul.f32 %v2486, %v536
        %v2493 = vmul.f32 %v2485, %v537
        %v2494 = vmul.f32 %v2484, %v538
        %v2495 = vmul.f32 %v2483, %v539
        %v2496 = vmul.f32 %v2482, %v540
        %v2497 = vmul.f32 %v2401, %v550
        %v2498 = vmul.f32 %v2408, %v551
        %v2499 = vmul.f32 %v2407, %v552
        %v2500 = vmul.f32 %v2406, %v553
        %v2501 = vmul.f32 %v2405, %v554
        %v2502 = vmul.f32 %v2404, %v555
        %v2503 = vmul.f32 %v2403, %v556
        %v2504 = vmul.f32 %v2402, %v557
        %v2505 = vmul.f32 %v2425, %v567
        %v2506 = vmul.f32 %v2432, %v568
        %v2507 = vmul.f32 %v2431, %v569
        %v2508 = vmul.f32 %v2430, %v570
        %v2509 = vmul.f32 %v2429, %v571
        %v2510 = vmul.f32 %v2428, %v572
        %v2511 = vmul.f32 %v2427, %v573
        %v2512 = vmul.f32 %v2426, %v574
        %v2513 = vmul.f32 %v2392, %v584
        %v2514 = vmul.f32 %v2385, %v585
        %v2515 = vmul.f32 %v2386, %v586
        %v2516 = vmul.f32 %v2387, %v587
        %v2517 = vmul.f32 %v2388, %v588
        %v2518 = vmul.f32 %v2389, %v589
        %v2519 = vmul.f32 %v2390, %v590
        %v2520 = vmul.f32 %v2391, %v591
        %v2521 = vmul.f32 %v2464, %v601
        %v2522 = vmul.f32 %v2463, %v602
        %v2523 = vmul.f32 %v2462, %v603
        %v2524 = vmul.f32 %v2461, %v604
        %v2525 = vmul.f32 %v2460, %v605
        %v2526 = vmul.f32 %v2459, %v606
        %v2527 = vmul.f32 %v2458, %v607
        %v2528 = vmul.f32 %v2457, %v608
        %v2529 = vmul.f32 %v2488, %v618
        %v2530 = vmul.f32 %v2487, %v619
        %v2531 = vmul.f32 %v2486, %v620
        %v2532 = vmul.f32 %v2485, %v621
        %v2533 = vmul.f32 %v2484, %v622
        %v2534 = vmul.f32 %v2483, %v623
        %v2535 = vmul.f32 %v2482, %v624
        %v2536 = vmul.f32 %v2481, %v625
        %v2537 = vmul.f32 %v2408, %v635
        %v2538 = vmul.f32 %v2407, %v636
        %v2539 = vmul.f32 %v2406, %v637
        %v2540 = vmul.f32 %v2405, %v638
        %v2541 = vmul.f32 %v2404, %v639
        %v2542 = vmul.f32 %v2403, %v640
        %v2543 = vmul.f32 %v2402, %v641
        %v2544 = vmul.f32 %v2401, %v642
        %v2545 = vmul.f32 %v2432, %v652
        %v2546 = vmul.f32 %v2431, %v653
        %v2547 = vmul.f32 %v2430, %v654
        %v2548 = vmul.f32 %v2429, %v655
        %v2549 = vmul.f32 %v2428, %v656
        %v2550 = vmul.f32 %v2427, %v657
        %v2551 = vmul.f32 %v2426, %v658
        %v2552 = vmul.f32 %v2425, %v659
        %v2553 = vmul.f32 %v2385, %v669
        %v2554 = vmul.f32 %v2386, %v670
        %v2555 = vmul.f32 %v2387, %v671
        %v2556 = vmul.f32 %v2388, %v672
        %v2557 = vmul.f32 %v2389, %v673
        %v2558 = vmul.f32 %v2390, %v674
        %v2559 = vmul.f32 %v2391, %v675
        %v2560 = vmul.f32 %v2392, %v676
        %2569 = vrot.lane.b32.xlu0 %v2433, 32
        %v2570 = vpop.permute.xlu0 %2569
        %2571 = vrot.lane.b32.xlu0 %v2434, 32
        %v2572 = vpop.permute.xlu0 %2571
        %2573 = vrot.lane.b32.xlu0 %v2435, 32
        %v2574 = vpop.permute.xlu0 %2573
        %2575 = vrot.lane.b32.xlu0 %v2436, 32
        %v2576 = vpop.permute.xlu0 %2575
        %2577 = vrot.lane.b32.xlu0 %v2437, 32
        %v2578 = vpop.permute.xlu0 %2577
        %2579 = vrot.lane.b32.xlu0 %v2438, 32
        %v2580 = vpop.permute.xlu0 %2579
        %2581 = vrot.lane.b32.xlu0 %v2439, 32
        %v2582 = vpop.permute.xlu0 %2581
        %2583 = vrot.lane.b32.xlu0 %v2440, 32
        %v2584 = vpop.permute.xlu0 %2583
        %2601 = vrot.lane.b32.xlu0 %v2441, 64
        %v2602 = vpop.permute.xlu0 %2601
        %2603 = vrot.lane.b32.xlu0 %v2442, 64
        %v2604 = vpop.permute.xlu0 %2603
        %2605 = vrot.lane.b32.xlu0 %v2443, 64
        %v2606 = vpop.permute.xlu0 %2605
        %2607 = vrot.lane.b32.xlu0 %v2444, 64
        %v2608 = vpop.permute.xlu0 %2607
        %2609 = vrot.lane.b32.xlu0 %v2445, 64
        %v2610 = vpop.permute.xlu0 %2609
        %2611 = vrot.lane.b32.xlu0 %v2446, 64
        %v2612 = vpop.permute.xlu0 %2611
        %2613 = vrot.lane.b32.xlu0 %v2447, 64
        %v2614 = vpop.permute.xlu0 %2613
        %2615 = vrot.lane.b32.xlu0 %v2448, 64
        %v2616 = vpop.permute.xlu0 %2615
        %2633 = vrot.lane.b32.xlu0 %v2465, 96
        %v2634 = vpop.permute.xlu0 %2633
        %2635 = vrot.lane.b32.xlu0 %v2466, 96
        %v2636 = vpop.permute.xlu0 %2635
        %2637 = vrot.lane.b32.xlu0 %v2467, 96
        %v2638 = vpop.permute.xlu0 %2637
        %2639 = vrot.lane.b32.xlu0 %v2468, 96
        %v2640 = vpop.permute.xlu0 %2639
        %2641 = vrot.lane.b32.xlu0 %v2469, 96
        %v2642 = vpop.permute.xlu0 %2641
        %2643 = vrot.lane.b32.xlu0 %v2470, 96
        %v2644 = vpop.permute.xlu0 %2643
        %2645 = vrot.lane.b32.xlu0 %v2471, 96
        %v2646 = vpop.permute.xlu0 %2645
        %2647 = vrot.lane.b32.xlu0 %v2472, 96
        %v2648 = vpop.permute.xlu0 %2647
        %2665 = vrot.lane.b32.xlu0 %v2497, 32
        %v2666 = vpop.permute.xlu0 %2665
        %2667 = vrot.lane.b32.xlu0 %v2498, 32
        %v2668 = vpop.permute.xlu0 %2667
        %2669 = vrot.lane.b32.xlu0 %v2499, 32
        %v2670 = vpop.permute.xlu0 %2669
        %2671 = vrot.lane.b32.xlu0 %v2500, 32
        %v2672 = vpop.permute.xlu0 %2671
        %2673 = vrot.lane.b32.xlu0 %v2501, 32
        %v2674 = vpop.permute.xlu0 %2673
        %2675 = vrot.lane.b32.xlu0 %v2502, 32
        %v2676 = vpop.permute.xlu0 %2675
        %2677 = vrot.lane.b32.xlu0 %v2503, 32
        %v2678 = vpop.permute.xlu0 %2677
        %2679 = vrot.lane.b32.xlu0 %v2504, 32
        %v2680 = vpop.permute.xlu0 %2679
        %2697 = vrot.lane.b32.xlu0 %v2505, 64
        %v2698 = vpop.permute.xlu0 %2697
        %2699 = vrot.lane.b32.xlu0 %v2506, 64
        %v2700 = vpop.permute.xlu0 %2699
        %2701 = vrot.lane.b32.xlu0 %v2507, 64
        %v2702 = vpop.permute.xlu0 %2701
        %2703 = vrot.lane.b32.xlu0 %v2508, 64
        %v2704 = vpop.permute.xlu0 %2703
        %2705 = vrot.lane.b32.xlu0 %v2509, 64
        %v2706 = vpop.permute.xlu0 %2705
        %2707 = vrot.lane.b32.xlu0 %v2510, 64
        %v2708 = vpop.permute.xlu0 %2707
        %2709 = vrot.lane.b32.xlu0 %v2511, 64
        %v2710 = vpop.permute.xlu0 %2709
        %2711 = vrot.lane.b32.xlu0 %v2512, 64
        %v2712 = vpop.permute.xlu0 %2711
        %2729 = vrot.lane.b32.xlu0 %v2513, 96
        %v2730 = vpop.permute.xlu0 %2729
        %2731 = vrot.lane.b32.xlu0 %v2514, 96
        %v2732 = vpop.permute.xlu0 %2731
        %2733 = vrot.lane.b32.xlu0 %v2515, 96
        %v2734 = vpop.permute.xlu0 %2733
        %2735 = vrot.lane.b32.xlu0 %v2516, 96
        %v2736 = vpop.permute.xlu0 %2735
        %2737 = vrot.lane.b32.xlu0 %v2517, 96
        %v2738 = vpop.permute.xlu0 %2737
        %2739 = vrot.lane.b32.xlu0 %v2518, 96
        %v2740 = vpop.permute.xlu0 %2739
        %2741 = vrot.lane.b32.xlu0 %v2519, 96
        %v2742 = vpop.permute.xlu0 %2741
        %2743 = vrot.lane.b32.xlu0 %v2520, 96
        %v2744 = vpop.permute.xlu0 %2743
        %2761 = vrot.lane.b32.xlu0 %v2529, 32
        %v2762 = vpop.permute.xlu0 %2761
        %2763 = vrot.lane.b32.xlu0 %v2530, 32
        %v2764 = vpop.permute.xlu0 %2763
        %2765 = vrot.lane.b32.xlu0 %v2531, 32
        %v2766 = vpop.permute.xlu0 %2765
        %2767 = vrot.lane.b32.xlu0 %v2532, 32
        %v2768 = vpop.permute.xlu0 %2767
        %2769 = vrot.lane.b32.xlu0 %v2533, 32
        %v2770 = vpop.permute.xlu0 %2769
        %2771 = vrot.lane.b32.xlu0 %v2534, 32
        %v2772 = vpop.permute.xlu0 %2771
        %2773 = vrot.lane.b32.xlu0 %v2535, 32
        %v2774 = vpop.permute.xlu0 %2773
        %2775 = vrot.lane.b32.xlu0 %v2536, 32
        %v2776 = vpop.permute.xlu0 %2775
        %2793 = vrot.lane.b32.xlu0 %v2537, 64
        %v2794 = vpop.permute.xlu0 %2793
        %2795 = vrot.lane.b32.xlu0 %v2538, 64
        %v2796 = vpop.permute.xlu0 %2795
        %2797 = vrot.lane.b32.xlu0 %v2539, 64
        %v2798 = vpop.permute.xlu0 %2797
        %2799 = vrot.lane.b32.xlu0 %v2540, 64
        %v2800 = vpop.permute.xlu0 %2799
        %2801 = vrot.lane.b32.xlu0 %v2541, 64
        %v2802 = vpop.permute.xlu0 %2801
        %2803 = vrot.lane.b32.xlu0 %v2542, 64
        %v2804 = vpop.permute.xlu0 %2803
        %2805 = vrot.lane.b32.xlu0 %v2543, 64
        %v2806 = vpop.permute.xlu0 %2805
        %2807 = vrot.lane.b32.xlu0 %v2544, 64
        %v2808 = vpop.permute.xlu0 %2807
        %2825 = vrot.lane.b32.xlu0 %v2545, 96
        %v2826 = vpop.permute.xlu0 %2825
        %2827 = vrot.lane.b32.xlu0 %v2546, 96
        %v2828 = vpop.permute.xlu0 %2827
        %2829 = vrot.lane.b32.xlu0 %v2547, 96
        %v2830 = vpop.permute.xlu0 %2829
        %2831 = vrot.lane.b32.xlu0 %v2548, 96
        %v2832 = vpop.permute.xlu0 %2831
        %2833 = vrot.lane.b32.xlu0 %v2549, 96
        %v2834 = vpop.permute.xlu0 %2833
        %2835 = vrot.lane.b32.xlu0 %v2550, 96
        %v2836 = vpop.permute.xlu0 %2835
        %2837 = vrot.lane.b32.xlu0 %v2551, 96
        %v2838 = vpop.permute.xlu0 %2837
        %2839 = vrot.lane.b32.xlu0 %v2552, 96
        %v2840 = vpop.permute.xlu0 %2839
        %v2849 = vsel %vm973, %v2409, %v2570
        %v2850 = vsel %vm973, %v2410, %v2572
        %v2851 = vsel %vm973, %v2411, %v2574
        %v2852 = vsel %vm973, %v2412, %v2576
        %v2853 = vsel %vm973, %v2413, %v2578
        %v2854 = vsel %vm973, %v2414, %v2580
        %v2855 = vsel %vm973, %v2415, %v2582
        %v2856 = vsel %vm973, %v2416, %v2584
        %v2857 = vsel %vm353, %v2849, %v2602
        %v2858 = vsel %vm353, %v2850, %v2604
        %v2859 = vsel %vm353, %v2851, %v2606
        %v2860 = vsel %vm353, %v2852, %v2608
        %v2861 = vsel %vm353, %v2853, %v2610
        %v2862 = vsel %vm353, %v2854, %v2612
        %v2863 = vsel %vm353, %v2855, %v2614
        %v2864 = vsel %vm353, %v2856, %v2616
        %v2865 = vsel %vm990, %v2857, %v2634
        %v2866 = vsel %vm990, %v2858, %v2636
        %v2867 = vsel %vm990, %v2859, %v2638
        %v2868 = vsel %vm990, %v2860, %v2640
        %v2869 = vsel %vm990, %v2861, %v2642
        %v2870 = vsel %vm990, %v2862, %v2644
        %v2871 = vsel %vm990, %v2863, %v2646
        %v2872 = vsel %vm990, %v2864, %v2648
        %v2873 = vsel %vm973, %v2489, %v2666
        %v2874 = vsel %vm973, %v2490, %v2668
        %v2875 = vsel %vm973, %v2491, %v2670
        %v2876 = vsel %vm973, %v2492, %v2672
        %v2877 = vsel %vm973, %v2493, %v2674
        %v2878 = vsel %vm973, %v2494, %v2676
        %v2879 = vsel %vm973, %v2495, %v2678
        %v2880 = vsel %vm973, %v2496, %v2680
        %v2881 = vsel %vm353, %v2873, %v2698
        %v2882 = vsel %vm353, %v2874, %v2700
        %v2883 = vsel %vm353, %v2875, %v2702
        %v2884 = vsel %vm353, %v2876, %v2704
        %v2885 = vsel %vm353, %v2877, %v2706
        %v2886 = vsel %vm353, %v2878, %v2708
        %v2887 = vsel %vm353, %v2879, %v2710
        %v2888 = vsel %vm353, %v2880, %v2712
        %v2889 = vsel %vm990, %v2881, %v2730
        %v2890 = vsel %vm990, %v2882, %v2732
        %v2891 = vsel %vm990, %v2883, %v2734
        %v2892 = vsel %vm990, %v2884, %v2736
        %v2893 = vsel %vm990, %v2885, %v2738
        %v2894 = vsel %vm990, %v2886, %v2740
        %v2895 = vsel %vm990, %v2887, %v2742
        %v2896 = vsel %vm990, %v2888, %v2744
        %v2897 = vsel %vm973, %v2521, %v2762
        %v2898 = vsel %vm973, %v2522, %v2764
        %v2899 = vsel %vm973, %v2523, %v2766
        %v2900 = vsel %vm973, %v2524, %v2768
        %v2901 = vsel %vm973, %v2525, %v2770
        %v2902 = vsel %vm973, %v2526, %v2772
        %v2903 = vsel %vm973, %v2527, %v2774
        %v2904 = vsel %vm973, %v2528, %v2776
        %v2905 = vsel %vm353, %v2897, %v2794
        %v2906 = vsel %vm353, %v2898, %v2796
        %v2907 = vsel %vm353, %v2899, %v2798
        %v2908 = vsel %vm353, %v2900, %v2800
        %v2909 = vsel %vm353, %v2901, %v2802
        %v2910 = vsel %vm353, %v2902, %v2804
        %v2911 = vsel %vm353, %v2903, %v2806
        %v2912 = vsel %vm353, %v2904, %v2808
        %v2913 = vsel %vm990, %v2905, %v2826
        %v2914 = vsel %vm990, %v2906, %v2828
        %v2915 = vsel %vm990, %v2907, %v2830
        %v2916 = vsel %vm990, %v2908, %v2832
        %v2917 = vsel %vm990, %v2909, %v2834
        %v2918 = vsel %vm990, %v2910, %v2836
        %v2919 = vsel %vm990, %v2911, %v2838
        %v2920 = vsel %vm990, %v2912, %v2840
        %v2921 = vsel %vm973, %v2553, 0.0
        %v2922 = vsel %vm973, %v2554, 0.0
        %v2923 = vsel %vm973, %v2555, 0.0
        %v2924 = vsel %vm973, %v2556, 0.0
        %v2925 = vsel %vm973, %v2557, 0.0
        %v2926 = vsel %vm973, %v2558, 0.0
        %v2927 = vsel %vm973, %v2559, 0.0
        %v2928 = vsel %vm973, %v2560, 0.0
        %v2929 = vpack.c.bf16 %v2866, %v2865
        %v2930 = vpack.c.bf16 %v2890, %v2889
        %v2931 = vpack.c.bf16 %v2914, %v2913
        %v2932 = vpack.c.bf16 %v2922, %v2921
        %v2933 = vpack.c.bf16 %v2868, %v2867
        %v2934 = vpack.c.bf16 %v2892, %v2891
        %v2935 = vpack.c.bf16 %v2916, %v2915
        %v2936 = vpack.c.bf16 %v2924, %v2923
        %v2937 = vpack.c.bf16 %v2870, %v2869
        %v2938 = vpack.c.bf16 %v2894, %v2893
        %v2939 = vpack.c.bf16 %v2918, %v2917
        %v2940 = vpack.c.bf16 %v2926, %v2925
        %v2941 = vpack.c.bf16 %v2872, %v2871
        %v2942 = vpack.c.bf16 %v2896, %v2895
        %v2943 = vpack.c.bf16 %v2920, %v2919
        %v2944 = vpack.c.bf16 %v2928, %v2927
        %s2945 = scalar_lea.vmem %s4, 512
        %v2946 = vld [vmem:[%s2945] sm:$0xf]
        %v2947 = vld [vmem:[%s2945 + $0x4] sm:$0xf]
        %v2948 = vld [vmem:[%s2945 + $0x8] sm:$0xf]
        %v2949 = vld [vmem:[%s2945 + $0xc] sm:$0xf]
        %v2950 = vld [vmem:[%s2945 + $0x10] sm:$0xf]
        %v2951 = vld [vmem:[%s2945 + $0x14] sm:$0xf]
        %v2952 = vld [vmem:[%s2945 + $0x18] sm:$0xf]
        %v2953 = vld [vmem:[%s2945 + $0x1c] sm:$0xf]
        %v2954 = vld [vmem:[%s2945 + $0x20] sm:$0xf]
        %v2955 = vld [vmem:[%s2945 + $0x24] sm:$0xf]
        %v2956 = vld [vmem:[%s2945 + $0x28] sm:$0xf]
        %v2957 = vld [vmem:[%s2945 + $0x2c] sm:$0xf]
        %v2958 = vld [vmem:[%s2945 + $0x30] sm:$0xf]
        %v2959 = vld [vmem:[%s2945 + $0x34] sm:$0xf]
        %v2960 = vld [vmem:[%s2945 + $0x38] sm:$0xf]
        %v2961 = vld [vmem:[%s2945 + $0x3c] sm:$0xf]
        %v2962 = vld [vmem:[%s2945 + $0x40] sm:$0xf]
        %v2963 = vld [vmem:[%s2945 + $0x44] sm:$0xf]
        %v2964 = vld [vmem:[%s2945 + $0x48] sm:$0xf]
        %v2965 = vld [vmem:[%s2945 + $0x4c] sm:$0xf]
        %v2966 = vld [vmem:[%s2945 + $0x50] sm:$0xf]
        %v2967 = vld [vmem:[%s2945 + $0x54] sm:$0xf]
        %v2968 = vld [vmem:[%s2945 + $0x58] sm:$0xf]
        %v2969 = vld [vmem:[%s2945 + $0x5c] sm:$0xf]
        %v2970 = vld [vmem:[%s2945 + $0x60] sm:$0xf]
        %v2971 = vld [vmem:[%s2945 + $0x64] sm:$0xf]
        %v2972 = vld [vmem:[%s2945 + $0x68] sm:$0xf]
        %v2973 = vld [vmem:[%s2945 + $0x6c] sm:$0xf]
        %v2974 = vld [vmem:[%s2945 + $0x70] sm:$0xf]
        %v2975 = vld [vmem:[%s2945 + $0x74] sm:$0xf]
        %v2976 = vld [vmem:[%s2945 + $0x78] sm:$0xf]
        %v2977 = vld [vmem:[%s2945 + $0x7c] sm:$0xf]
        %v2978 = vld [vmem:[%s2945 + $0x80] sm:$0xf]
        %v2979 = vld [vmem:[%s2945 + $0x84] sm:$0xf]
        %v2980 = vld [vmem:[%s2945 + $0x88] sm:$0xf]
        %v2981 = vld [vmem:[%s2945 + $0x8c] sm:$0xf]
        %v2982 = vld [vmem:[%s2945 + $0x90] sm:$0xf]
        %v2983 = vld [vmem:[%s2945 + $0x94] sm:$0xf]
        %v2984 = vld [vmem:[%s2945 + $0x98] sm:$0xf]
        %v2985 = vld [vmem:[%s2945 + $0x9c] sm:$0xf]
        %v2986 = vld [vmem:[%s2945 + $0xa0] sm:$0xf]
        %v2987 = vld [vmem:[%s2945 + $0xa4] sm:$0xf]
        %v2988 = vld [vmem:[%s2945 + $0xa8] sm:$0xf]
        %v2989 = vld [vmem:[%s2945 + $0xac] sm:$0xf]
        %v2990 = vld [vmem:[%s2945 + $0xb0] sm:$0xf]
        %v2991 = vld [vmem:[%s2945 + $0xb4] sm:$0xf]
        %v2992 = vld [vmem:[%s2945 + $0xb8] sm:$0xf]
        %v2993 = vld [vmem:[%s2945 + $0xbc] sm:$0xf]
        %v2994 = vld [vmem:[%s2945 + $0xc0] sm:$0xf]
        %v2995 = vld [vmem:[%s2945 + $0xc4] sm:$0xf]
        %v2996 = vld [vmem:[%s2945 + $0xc8] sm:$0xf]
        %v2997 = vld [vmem:[%s2945 + $0xcc] sm:$0xf]
        %v2998 = vld [vmem:[%s2945 + $0xd0] sm:$0xf]
        %v2999 = vld [vmem:[%s2945 + $0xd4] sm:$0xf]
        %v3000 = vld [vmem:[%s2945 + $0xd8] sm:$0xf]
        %v3001 = vld [vmem:[%s2945 + $0xdc] sm:$0xf]
        %v3002 = vld [vmem:[%s2945 + $0xe0] sm:$0xf]
        %v3003 = vld [vmem:[%s2945 + $0xe4] sm:$0xf]
        %v3004 = vld [vmem:[%s2945 + $0xe8] sm:$0xf]
        %v3005 = vld [vmem:[%s2945 + $0xec] sm:$0xf]
        %v3006 = vld [vmem:[%s2945 + $0xf0] sm:$0xf]
        %v3007 = vld [vmem:[%s2945 + $0xf4] sm:$0xf]
        %v3008 = vld [vmem:[%s2945 + $0xf8] sm:$0xf]
        %v3009 = vld [vmem:[%s2945 + $0xfc] sm:$0xf]
        %s3010 = scalar_lea.vmem %s5, 2
        %v3011 = vld [vmem:[%s3010] sm:$0x1]
        %v3013 = vperm.slane %v3011, 0
        %v3079 = vunpack.c.l.b16 %v2946
        %v3080 = vunpack.c.l.b16 %v2947
        %v3081 = vunpack.c.l.b16 %v2948
        %v3082 = vunpack.c.l.b16 %v2949
        %v3083 = vunpack.c.l.b16 %v2950
        %v3084 = vunpack.c.l.b16 %v2951
        %v3085 = vunpack.c.l.b16 %v2952
        %v3086 = vunpack.c.l.b16 %v2953
        %v3087 = vunpack.c.l.b16 %v2954
        %v3088 = vunpack.c.l.b16 %v2955
        %v3089 = vunpack.c.l.b16 %v2956
        %v3090 = vunpack.c.l.b16 %v2957
        %v3091 = vunpack.c.l.b16 %v2958
        %v3092 = vunpack.c.l.b16 %v2959
        %v3093 = vunpack.c.l.b16 %v2960
        %v3094 = vunpack.c.l.b16 %v2961
        %v3095 = vunpack.c.l.b16 %v2962
        %v3096 = vunpack.c.l.b16 %v2963
        %v3097 = vunpack.c.l.b16 %v2964
        %v3098 = vunpack.c.l.b16 %v2965
        %v3099 = vunpack.c.l.b16 %v2966
        %v3100 = vunpack.c.l.b16 %v2967
        %v3101 = vunpack.c.l.b16 %v2968
        %v3102 = vunpack.c.l.b16 %v2969
        %v3103 = vunpack.c.l.b16 %v2970
        %v3104 = vunpack.c.l.b16 %v2971
        %v3105 = vunpack.c.l.b16 %v2972
        %v3106 = vunpack.c.l.b16 %v2973
        %v3107 = vunpack.c.l.b16 %v2974
        %v3108 = vunpack.c.l.b16 %v2975
        %v3109 = vunpack.c.l.b16 %v2976
        %v3110 = vunpack.c.l.b16 %v2977
        %v3111 = vunpack.c.l.b16 %v2978
        %v3112 = vunpack.c.l.b16 %v2979
        %v3113 = vunpack.c.l.b16 %v2980
        %v3114 = vunpack.c.l.b16 %v2981
        %v3115 = vunpack.c.l.b16 %v2982
        %v3116 = vunpack.c.l.b16 %v2983
        %v3117 = vunpack.c.l.b16 %v2984
        %v3118 = vunpack.c.l.b16 %v2985
        %v3119 = vunpack.c.l.b16 %v2986
        %v3120 = vunpack.c.l.b16 %v2987
        %v3121 = vunpack.c.l.b16 %v2988
        %v3122 = vunpack.c.l.b16 %v2989
        %v3123 = vunpack.c.l.b16 %v2990
        %v3124 = vunpack.c.l.b16 %v2991
        %v3125 = vunpack.c.l.b16 %v2992
        %v3126 = vunpack.c.l.b16 %v2993
        %v3127 = vunpack.c.l.b16 %v2994
        %v3128 = vunpack.c.l.b16 %v2995
        %v3129 = vunpack.c.l.b16 %v2996
        %v3130 = vunpack.c.l.b16 %v2997
        %v3131 = vunpack.c.l.b16 %v2998
        %v3132 = vunpack.c.l.b16 %v2999
        %v3133 = vunpack.c.l.b16 %v3000
        %v3134 = vunpack.c.l.b16 %v3001
        %v3135 = vunpack.c.l.b16 %v3002
        %v3136 = vunpack.c.l.b16 %v3003
        %v3137 = vunpack.c.l.b16 %v3004
        %v3138 = vunpack.c.l.b16 %v3005
        %v3139 = vunpack.c.l.b16 %v3006
        %v3140 = vunpack.c.l.b16 %v3007
        %v3141 = vunpack.c.l.b16 %v3008
        %v3142 = vunpack.c.l.b16 %v3009
        %v3143 = vpack.c.b16 %v3080, %v3079
        %v3144 = vpack.c.b16 %v3082, %v3081
        %v3145 = vpack.c.b16 %v3084, %v3083
        %v3146 = vpack.c.b16 %v3086, %v3085
        %v3147 = vpack.c.b16 %v3088, %v3087
        %v3148 = vpack.c.b16 %v3090, %v3089
        %v3149 = vpack.c.b16 %v3092, %v3091
        %v3150 = vpack.c.b16 %v3094, %v3093
        %v3151 = vpack.c.b16 %v3096, %v3095
        %v3152 = vpack.c.b16 %v3098, %v3097
        %v3153 = vpack.c.b16 %v3100, %v3099
        %v3154 = vpack.c.b16 %v3102, %v3101
        %v3155 = vpack.c.b16 %v3104, %v3103
        %v3156 = vpack.c.b16 %v3106, %v3105
        %v3157 = vpack.c.b16 %v3108, %v3107
        %v3158 = vpack.c.b16 %v3110, %v3109
        %v3159 = vpack.c.b16 %v3112, %v3111
        %v3160 = vpack.c.b16 %v3114, %v3113
        %v3161 = vpack.c.b16 %v3116, %v3115
        %v3162 = vpack.c.b16 %v3118, %v3117
        %v3163 = vpack.c.b16 %v3120, %v3119
        %v3164 = vpack.c.b16 %v3122, %v3121
        %v3165 = vpack.c.b16 %v3124, %v3123
        %v3166 = vpack.c.b16 %v3126, %v3125
        %v3167 = vpack.c.b16 %v3128, %v3127
        %v3168 = vpack.c.b16 %v3130, %v3129
        %v3169 = vpack.c.b16 %v3132, %v3131
        %v3170 = vpack.c.b16 %v3134, %v3133
        %v3171 = vpack.c.b16 %v3136, %v3135
        %v3172 = vpack.c.b16 %v3138, %v3137
        %v3173 = vpack.c.b16 %v3140, %v3139
        %v3174 = vpack.c.b16 %v3142, %v3141
        %3207 = vmatpush.bf16.msra.mxu0 %v3150
        %3208 = vmatpush.bf16.msra.mxu0 %v3149
        %3209 = vmatpush.bf16.msra.mxu0 %v3148
        %3210 = vmatpush.bf16.msra.mxu0 %v3147
        %3211 = vmatpush.bf16.msra.mxu0 %v3146
        %3212 = vmatpush.bf16.msra.mxu0 %v3145
        %3213 = vmatpush.bf16.msra.mxu0 %v3144
        %3214 = vmatpush.bf16.msra.mxu0 %v3143
        %3215 = vmatmul.bf16.gmra.mxu0 %v2929
        %v3216 = vpop.f32.mrf.mxu0
        %v3217 = vadd.f32 %v3013, %v3216
        %v3218 = vpop.f32.mrf.mxu0
        %v3219 = vadd.f32 %v3013, %v3218
        %3220 = vmatmul.bf16.gmra.mxu0 %v2933
        %v3221 = vpop.f32.mrf.mxu0
        %v3222 = vadd.f32 %v3013, %v3221
        %v3223 = vpop.f32.mrf.mxu0
        %v3224 = vadd.f32 %v3013, %v3223
        %3225 = vmatmul.bf16.gmra.mxu0 %v2937
        %v3226 = vpop.f32.mrf.mxu0
        %v3227 = vadd.f32 %v3013, %v3226
        %v3228 = vpop.f32.mrf.mxu0
        %v3229 = vadd.f32 %v3013, %v3228
        %3230 = vmatmul.bf16.gmra.mxu0 %v2941
        %v3231 = vpop.f32.mrf.mxu0
        %v3232 = vadd.f32 %v3013, %v3231
        %v3233 = vpop.f32.mrf.mxu0
        %v3234 = vadd.f32 %v3013, %v3233
        %3235 = vdwg.mxu0
        %3236 = vmatpush.bf16.msra.mxu0 %v3158
        %3237 = vmatpush.bf16.msra.mxu0 %v3157
        %3238 = vmatpush.bf16.msra.mxu0 %v3156
        %3239 = vmatpush.bf16.msra.mxu0 %v3155
        %3240 = vmatpush.bf16.msra.mxu0 %v3154
        %3241 = vmatpush.bf16.msra.mxu0 %v3153
        %3242 = vmatpush.bf16.msra.mxu0 %v3152
        %3243 = vmatpush.bf16.msra.mxu0 %v3151
        %3244 = vmatmul.bf16.gmra.mxu0 %v2930
        %v3245 = vpop.f32.mrf.mxu0
        %v3246 = vadd.f32 %v3217, %v3245
        %v3247 = vpop.f32.mrf.mxu0
        %v3248 = vadd.f32 %v3219, %v3247
        %3249 = vmatmul.bf16.gmra.mxu0 %v2934
        %v3250 = vpop.f32.mrf.mxu0
        %v3251 = vadd.f32 %v3222, %v3250
        %v3252 = vpop.f32.mrf.mxu0
        %v3253 = vadd.f32 %v3224, %v3252
        %3254 = vmatmul.bf16.gmra.mxu0 %v2938
        %v3255 = vpop.f32.mrf.mxu0
        %v3256 = vadd.f32 %v3227, %v3255
        %v3257 = vpop.f32.mrf.mxu0
        %v3258 = vadd.f32 %v3229, %v3257
        %3259 = vmatmul.bf16.gmra.mxu0 %v2942
        %v3260 = vpop.f32.mrf.mxu0
        %v3261 = vadd.f32 %v3232, %v3260
        %v3262 = vpop.f32.mrf.mxu0
        %v3263 = vadd.f32 %v3234, %v3262
        %3264 = vdwg.mxu0
        %3265 = vmatpush.bf16.msra.mxu0 %v3166
        %3266 = vmatpush.bf16.msra.mxu0 %v3165
        %3267 = vmatpush.bf16.msra.mxu0 %v3164
        %3268 = vmatpush.bf16.msra.mxu0 %v3163
        %3269 = vmatpush.bf16.msra.mxu0 %v3162
        %3270 = vmatpush.bf16.msra.mxu0 %v3161
        %3271 = vmatpush.bf16.msra.mxu0 %v3160
        %3272 = vmatpush.bf16.msra.mxu0 %v3159
        %3273 = vmatmul.bf16.gmra.mxu0 %v2931
        %v3274 = vpop.f32.mrf.mxu0
        %v3275 = vadd.f32 %v3246, %v3274
        %v3276 = vpop.f32.mrf.mxu0
        %v3277 = vadd.f32 %v3248, %v3276
        %3278 = vmatmul.bf16.gmra.mxu0 %v2935
        %v3279 = vpop.f32.mrf.mxu0
        %v3280 = vadd.f32 %v3251, %v3279
        %v3281 = vpop.f32.mrf.mxu0
        %v3282 = vadd.f32 %v3253, %v3281
        %3283 = vmatmul.bf16.gmra.mxu0 %v2939
        %v3284 = vpop.f32.mrf.mxu0
        %v3285 = vadd.f32 %v3256, %v3284
        %v3286 = vpop.f32.mrf.mxu0
        %v3287 = vadd.f32 %v3258, %v3286
        %3288 = vmatmul.bf16.gmra.mxu0 %v2943
        %v3289 = vpop.f32.mrf.mxu0
        %v3290 = vadd.f32 %v3261, %v3289
        %v3291 = vpop.f32.mrf.mxu0
        %v3292 = vadd.f32 %v3263, %v3291
        %3293 = vdwg.mxu0
        %3294 = vmatpush.bf16.msra.mxu0 %v3174
        %3295 = vmatpush.bf16.msra.mxu0 %v3173
        %3296 = vmatpush.bf16.msra.mxu0 %v3172
        %3297 = vmatpush.bf16.msra.mxu0 %v3171
        %3298 = vmatpush.bf16.msra.mxu0 %v3170
        %3299 = vmatpush.bf16.msra.mxu0 %v3169
        %3300 = vmatpush.bf16.msra.mxu0 %v3168
        %3301 = vmatpush.bf16.msra.mxu0 %v3167
        %3302 = vmatmul.bf16.gmra.mxu0 %v2932
        %v3303 = vpop.f32.mrf.mxu0
        %v3304 = vadd.f32 %v3275, %v3303
        %v3305 = vpop.f32.mrf.mxu0
        %v3306 = vadd.f32 %v3277, %v3305
        %3307 = vmatmul.bf16.gmra.mxu0 %v2936
        %v3308 = vpop.f32.mrf.mxu0
        %v3309 = vadd.f32 %v3280, %v3308
        %v3310 = vpop.f32.mrf.mxu0
        %v3311 = vadd.f32 %v3282, %v3310
        %3312 = vmatmul.bf16.gmra.mxu0 %v2940
        %v3313 = vpop.f32.mrf.mxu0
        %v3314 = vadd.f32 %v3285, %v3313
        %v3315 = vpop.f32.mrf.mxu0
        %v3316 = vadd.f32 %v3287, %v3315
        %3317 = vmatmul.bf16.gmra.mxu0 %v2944
        %v3318 = vpop.f32.mrf.mxu0
        %v3319 = vadd.f32 %v3290, %v3318
        %v3320 = vpop.f32.mrf.mxu0
        %v3321 = vadd.f32 %v3292, %v3320
        %3322 = vdwg.mxu0
        %v3323 = vmax.f32 %v3304, 0.0
        %v3324 = vmax.f32 %v3306, 0.0
        %v3325 = vmax.f32 %v3309, 0.0
        %v3326 = vmax.f32 %v3311, 0.0
        %v3327 = vmax.f32 %v3314, 0.0
        %v3328 = vmax.f32 %v3316, 0.0
        %v3329 = vmax.f32 %v3319, 0.0
        %v3330 = vmax.f32 %v3321, 0.0
        %v3331 = vrot.slane %v3323, 6
        %v3332 = vrot.slane %v3324, 6
        %v3333 = vrot.slane %v3325, 6
        %v3334 = vrot.slane %v3326, 6
        %v3335 = vrot.slane %v3327, 6
        %v3336 = vrot.slane %v3328, 6
        %v3337 = vrot.slane %v3329, 6
        %v3338 = vrot.slane %v3330, 6
        %v3339 = vsel %vm405, %v3337, %v3338
        %v3340 = vsel %vm405, %v3336, %v3337
        %v3341 = vsel %vm405, %v3335, %v3336
        %v3342 = vsel %vm405, %v3334, %v3335
        %v3343 = vsel %vm405, %v3333, %v3334
        %v3344 = vsel %vm405, %v3332, %v3333
        %v3345 = vsel %vm405, %v3331, %v3332
        %v3346 = vsel %vm405, %v3338, %v3331
        %v3347 = vmul.f32 %v3340, %v414
        %v3348 = vmul.f32 %v3339, %v415
        %v3349 = vmul.f32 %v3346, %v416
        %v3350 = vmul.f32 %v3345, %v417
        %v3351 = vmul.f32 %v3344, %v418
        %v3352 = vmul.f32 %v3343, %v419
        %v3353 = vmul.f32 %v3342, %v420
        %v3354 = vmul.f32 %v3341, %v421
        %v3355 = vrot.slane %v3323, 7
        %v3356 = vrot.slane %v3324, 7
        %v3357 = vrot.slane %v3325, 7
        %v3358 = vrot.slane %v3326, 7
        %v3359 = vrot.slane %v3327, 7
        %v3360 = vrot.slane %v3328, 7
        %v3361 = vrot.slane %v3329, 7
        %v3362 = vrot.slane %v3330, 7
        %v3363 = vsel %vm438, %v3361, %v3362
        %v3364 = vsel %vm438, %v3360, %v3361
        %v3365 = vsel %vm438, %v3359, %v3360
        %v3366 = vsel %vm438, %v3358, %v3359
        %v3367 = vsel %vm438, %v3357, %v3358
        %v3368 = vsel %vm438, %v3356, %v3357
        %v3369 = vsel %vm438, %v3355, %v3356
        %v3370 = vsel %vm438, %v3362, %v3355
        %v3371 = vmul.f32 %v3364, %v448
        %v3372 = vmul.f32 %v3363, %v449
        %v3373 = vmul.f32 %v3370, %v450
        %v3374 = vmul.f32 %v3369, %v451
        %v3375 = vmul.f32 %v3368, %v452
        %v3376 = vmul.f32 %v3367, %v453
        %v3377 = vmul.f32 %v3366, %v454
        %v3378 = vmul.f32 %v3365, %v455
        %v3379 = vmul.f32 %v3329, %v465
        %v3380 = vmul.f32 %v3330, %v466
        %v3381 = vmul.f32 %v3323, %v467
        %v3382 = vmul.f32 %v3324, %v468
        %v3383 = vmul.f32 %v3325, %v469
        %v3384 = vmul.f32 %v3326, %v470
        %v3385 = vmul.f32 %v3327, %v471
        %v3386 = vmul.f32 %v3328, %v472
        %v3387 = vrot.slane %v3323, 1
        %v3388 = vrot.slane %v3324, 1
        %v3389 = vrot.slane %v3325, 1
        %v3390 = vrot.slane %v3326, 1
        %v3391 = vrot.slane %v3327, 1
        %v3392 = vrot.slane %v3328, 1
        %v3393 = vrot.slane %v3329, 1
        %v3394 = vrot.slane %v3330, 1
        %v3395 = vsel %vm489, %v3393, %v3394
        %v3396 = vsel %vm489, %v3392, %v3393
        %v3397 = vsel %vm489, %v3391, %v3392
        %v3398 = vsel %vm489, %v3390, %v3391
        %v3399 = vsel %vm489, %v3389, %v3390
        %v3400 = vsel %vm489, %v3388, %v3389
        %v3401 = vsel %vm489, %v3387, %v3388
        %v3402 = vsel %vm489, %v3394, %v3387
        %v3403 = vmul.f32 %v3395, %v499
        %v3404 = vmul.f32 %v3402, %v500
        %v3405 = vmul.f32 %v3401, %v501
        %v3406 = vmul.f32 %v3400, %v502
        %v3407 = vmul.f32 %v3399, %v503
        %v3408 = vmul.f32 %v3398, %v504
        %v3409 = vmul.f32 %v3397, %v505
        %v3410 = vmul.f32 %v3396, %v506
        %v3411 = vrot.slane %v3323, 2
        %v3412 = vrot.slane %v3324, 2
        %v3413 = vrot.slane %v3325, 2
        %v3414 = vrot.slane %v3326, 2
        %v3415 = vrot.slane %v3327, 2
        %v3416 = vrot.slane %v3328, 2
        %v3417 = vrot.slane %v3329, 2
        %v3418 = vrot.slane %v3330, 2
        %v3419 = vsel %vm523, %v3417, %v3418
        %v3420 = vsel %vm523, %v3416, %v3417
        %v3421 = vsel %vm523, %v3415, %v3416
        %v3422 = vsel %vm523, %v3414, %v3415
        %v3423 = vsel %vm523, %v3413, %v3414
        %v3424 = vsel %vm523, %v3412, %v3413
        %v3425 = vsel %vm523, %v3411, %v3412
        %v3426 = vsel %vm523, %v3418, %v3411
        %v3427 = vmul.f32 %v3419, %v533
        %v3428 = vmul.f32 %v3426, %v534
        %v3429 = vmul.f32 %v3425, %v535
        %v3430 = vmul.f32 %v3424, %v536
        %v3431 = vmul.f32 %v3423, %v537
        %v3432 = vmul.f32 %v3422, %v538
        %v3433 = vmul.f32 %v3421, %v539
        %v3434 = vmul.f32 %v3420, %v540
        %v3435 = vmul.f32 %v3339, %v550
        %v3436 = vmul.f32 %v3346, %v551
        %v3437 = vmul.f32 %v3345, %v552
        %v3438 = vmul.f32 %v3344, %v553
        %v3439 = vmul.f32 %v3343, %v554
        %v3440 = vmul.f32 %v3342, %v555
        %v3441 = vmul.f32 %v3341, %v556
        %v3442 = vmul.f32 %v3340, %v557
        %v3443 = vmul.f32 %v3363, %v567
        %v3444 = vmul.f32 %v3370, %v568
        %v3445 = vmul.f32 %v3369, %v569
        %v3446 = vmul.f32 %v3368, %v570
        %v3447 = vmul.f32 %v3367, %v571
        %v3448 = vmul.f32 %v3366, %v572
        %v3449 = vmul.f32 %v3365, %v573
        %v3450 = vmul.f32 %v3364, %v574
        %v3451 = vmul.f32 %v3330, %v584
        %v3452 = vmul.f32 %v3323, %v585
        %v3453 = vmul.f32 %v3324, %v586
        %v3454 = vmul.f32 %v3325, %v587
        %v3455 = vmul.f32 %v3326, %v588
        %v3456 = vmul.f32 %v3327, %v589
        %v3457 = vmul.f32 %v3328, %v590
        %v3458 = vmul.f32 %v3329, %v591
        %v3459 = vmul.f32 %v3402, %v601
        %v3460 = vmul.f32 %v3401, %v602
        %v3461 = vmul.f32 %v3400, %v603
        %v3462 = vmul.f32 %v3399, %v604
        %v3463 = vmul.f32 %v3398, %v605
        %v3464 = vmul.f32 %v3397, %v606
        %v3465 = vmul.f32 %v3396, %v607
        %v3466 = vmul.f32 %v3395, %v608
        %v3467 = vmul.f32 %v3426, %v618
        %v3468 = vmul.f32 %v3425, %v619
        %v3469 = vmul.f32 %v3424, %v620
        %v3470 = vmul.f32 %v3423, %v621
        %v3471 = vmul.f32 %v3422, %v622
        %v3472 = vmul.f32 %v3421, %v623
        %v3473 = vmul.f32 %v3420, %v624
        %v3474 = vmul.f32 %v3419, %v625
        %v3475 = vmul.f32 %v3346, %v635
        %v3476 = vmul.f32 %v3345, %v636
        %v3477 = vmul.f32 %v3344, %v637
        %v3478 = vmul.f32 %v3343, %v638
        %v3479 = vmul.f32 %v3342, %v639
        %v3480 = vmul.f32 %v3341, %v640
        %v3481 = vmul.f32 %v3340, %v641
        %v3482 = vmul.f32 %v3339, %v642
        %v3483 = vmul.f32 %v3370, %v652
        %v3484 = vmul.f32 %v3369, %v653
        %v3485 = vmul.f32 %v3368, %v654
        %v3486 = vmul.f32 %v3367, %v655
        %v3487 = vmul.f32 %v3366, %v656
        %v3488 = vmul.f32 %v3365, %v657
        %v3489 = vmul.f32 %v3364, %v658
        %v3490 = vmul.f32 %v3363, %v659
        %v3491 = vmul.f32 %v3323, %v669
        %v3492 = vmul.f32 %v3324, %v670
        %v3493 = vmul.f32 %v3325, %v671
        %v3494 = vmul.f32 %v3326, %v672
        %v3495 = vmul.f32 %v3327, %v673
        %v3496 = vmul.f32 %v3328, %v674
        %v3497 = vmul.f32 %v3329, %v675
        %v3498 = vmul.f32 %v3330, %v676
        %3507 = vrot.lane.b32.xlu0 %v3371, 32
        %v3508 = vpop.permute.xlu0 %3507
        %3509 = vrot.lane.b32.xlu0 %v3372, 32
        %v3510 = vpop.permute.xlu0 %3509
        %3511 = vrot.lane.b32.xlu0 %v3373, 32
        %v3512 = vpop.permute.xlu0 %3511
        %3513 = vrot.lane.b32.xlu0 %v3374, 32
        %v3514 = vpop.permute.xlu0 %3513
        %3515 = vrot.lane.b32.xlu0 %v3375, 32
        %v3516 = vpop.permute.xlu0 %3515
        %3517 = vrot.lane.b32.xlu0 %v3376, 32
        %v3518 = vpop.permute.xlu0 %3517
        %3519 = vrot.lane.b32.xlu0 %v3377, 32
        %v3520 = vpop.permute.xlu0 %3519
        %3521 = vrot.lane.b32.xlu0 %v3378, 32
        %v3522 = vpop.permute.xlu0 %3521
        %3539 = vrot.lane.b32.xlu0 %v3379, 64
        %v3540 = vpop.permute.xlu0 %3539
        %3541 = vrot.lane.b32.xlu0 %v3380, 64
        %v3542 = vpop.permute.xlu0 %3541
        %3543 = vrot.lane.b32.xlu0 %v3381, 64
        %v3544 = vpop.permute.xlu0 %3543
        %3545 = vrot.lane.b32.xlu0 %v3382, 64
        %v3546 = vpop.permute.xlu0 %3545
        %3547 = vrot.lane.b32.xlu0 %v3383, 64
        %v3548 = vpop.permute.xlu0 %3547
        %3549 = vrot.lane.b32.xlu0 %v3384, 64
        %v3550 = vpop.permute.xlu0 %3549
        %3551 = vrot.lane.b32.xlu0 %v3385, 64
        %v3552 = vpop.permute.xlu0 %3551
        %3553 = vrot.lane.b32.xlu0 %v3386, 64
        %v3554 = vpop.permute.xlu0 %3553
        %3571 = vrot.lane.b32.xlu0 %v3403, 96
        %v3572 = vpop.permute.xlu0 %3571
        %3573 = vrot.lane.b32.xlu0 %v3404, 96
        %v3574 = vpop.permute.xlu0 %3573
        %3575 = vrot.lane.b32.xlu0 %v3405, 96
        %v3576 = vpop.permute.xlu0 %3575
        %3577 = vrot.lane.b32.xlu0 %v3406, 96
        %v3578 = vpop.permute.xlu0 %3577
        %3579 = vrot.lane.b32.xlu0 %v3407, 96
        %v3580 = vpop.permute.xlu0 %3579
        %3581 = vrot.lane.b32.xlu0 %v3408, 96
        %v3582 = vpop.permute.xlu0 %3581
        %3583 = vrot.lane.b32.xlu0 %v3409, 96
        %v3584 = vpop.permute.xlu0 %3583
        %3585 = vrot.lane.b32.xlu0 %v3410, 96
        %v3586 = vpop.permute.xlu0 %3585
        %3603 = vrot.lane.b32.xlu0 %v3435, 32
        %v3604 = vpop.permute.xlu0 %3603
        %3605 = vrot.lane.b32.xlu0 %v3436, 32
        %v3606 = vpop.permute.xlu0 %3605
        %3607 = vrot.lane.b32.xlu0 %v3437, 32
        %v3608 = vpop.permute.xlu0 %3607
        %3609 = vrot.lane.b32.xlu0 %v3438, 32
        %v3610 = vpop.permute.xlu0 %3609
        %3611 = vrot.lane.b32.xlu0 %v3439, 32
        %v3612 = vpop.permute.xlu0 %3611
        %3613 = vrot.lane.b32.xlu0 %v3440, 32
        %v3614 = vpop.permute.xlu0 %3613
        %3615 = vrot.lane.b32.xlu0 %v3441, 32
        %v3616 = vpop.permute.xlu0 %3615
        %3617 = vrot.lane.b32.xlu0 %v3442, 32
        %v3618 = vpop.permute.xlu0 %3617
        %3635 = vrot.lane.b32.xlu0 %v3443, 64
        %v3636 = vpop.permute.xlu0 %3635
        %3637 = vrot.lane.b32.xlu0 %v3444, 64
        %v3638 = vpop.permute.xlu0 %3637
        %3639 = vrot.lane.b32.xlu0 %v3445, 64
        %v3640 = vpop.permute.xlu0 %3639
        %3641 = vrot.lane.b32.xlu0 %v3446, 64
        %v3642 = vpop.permute.xlu0 %3641
        %3643 = vrot.lane.b32.xlu0 %v3447, 64
        %v3644 = vpop.permute.xlu0 %3643
        %3645 = vrot.lane.b32.xlu0 %v3448, 64
        %v3646 = vpop.permute.xlu0 %3645
        %3647 = vrot.lane.b32.xlu0 %v3449, 64
        %v3648 = vpop.permute.xlu0 %3647
        %3649 = vrot.lane.b32.xlu0 %v3450, 64
        %v3650 = vpop.permute.xlu0 %3649
        %3667 = vrot.lane.b32.xlu0 %v3451, 96
        %v3668 = vpop.permute.xlu0 %3667
        %3669 = vrot.lane.b32.xlu0 %v3452, 96
        %v3670 = vpop.permute.xlu0 %3669
        %3671 = vrot.lane.b32.xlu0 %v3453, 96
        %v3672 = vpop.permute.xlu0 %3671
        %3673 = vrot.lane.b32.xlu0 %v3454, 96
        %v3674 = vpop.permute.xlu0 %3673
        %3675 = vrot.lane.b32.xlu0 %v3455, 96
        %v3676 = vpop.permute.xlu0 %3675
        %3677 = vrot.lane.b32.xlu0 %v3456, 96
        %v3678 = vpop.permute.xlu0 %3677
        %3679 = vrot.lane.b32.xlu0 %v3457, 96
        %v3680 = vpop.permute.xlu0 %3679
        %3681 = vrot.lane.b32.xlu0 %v3458, 96
        %v3682 = vpop.permute.xlu0 %3681
        %3699 = vrot.lane.b32.xlu0 %v3467, 32
        %v3700 = vpop.permute.xlu0 %3699
        %3701 = vrot.lane.b32.xlu0 %v3468, 32
        %v3702 = vpop.permute.xlu0 %3701
        %3703 = vrot.lane.b32.xlu0 %v3469, 32
        %v3704 = vpop.permute.xlu0 %3703
        %3705 = vrot.lane.b32.xlu0 %v3470, 32
        %v3706 = vpop.permute.xlu0 %3705
        %3707 = vrot.lane.b32.xlu0 %v3471, 32
        %v3708 = vpop.permute.xlu0 %3707
        %3709 = vrot.lane.b32.xlu0 %v3472, 32
        %v3710 = vpop.permute.xlu0 %3709
        %3711 = vrot.lane.b32.xlu0 %v3473, 32
        %v3712 = vpop.permute.xlu0 %3711
        %3713 = vrot.lane.b32.xlu0 %v3474, 32
        %v3714 = vpop.permute.xlu0 %3713
        %3731 = vrot.lane.b32.xlu0 %v3475, 64
        %v3732 = vpop.permute.xlu0 %3731
        %3733 = vrot.lane.b32.xlu0 %v3476, 64
        %v3734 = vpop.permute.xlu0 %3733
        %3735 = vrot.lane.b32.xlu0 %v3477, 64
        %v3736 = vpop.permute.xlu0 %3735
        %3737 = vrot.lane.b32.xlu0 %v3478, 64
        %v3738 = vpop.permute.xlu0 %3737
        %3739 = vrot.lane.b32.xlu0 %v3479, 64
        %v3740 = vpop.permute.xlu0 %3739
        %3741 = vrot.lane.b32.xlu0 %v3480, 64
        %v3742 = vpop.permute.xlu0 %3741
        %3743 = vrot.lane.b32.xlu0 %v3481, 64
        %v3744 = vpop.permute.xlu0 %3743
        %3745 = vrot.lane.b32.xlu0 %v3482, 64
        %v3746 = vpop.permute.xlu0 %3745
        %3763 = vrot.lane.b32.xlu0 %v3483, 96
        %v3764 = vpop.permute.xlu0 %3763
        %3765 = vrot.lane.b32.xlu0 %v3484, 96
        %v3766 = vpop.permute.xlu0 %3765
        %3767 = vrot.lane.b32.xlu0 %v3485, 96
        %v3768 = vpop.permute.xlu0 %3767
        %3769 = vrot.lane.b32.xlu0 %v3486, 96
        %v3770 = vpop.permute.xlu0 %3769
        %3771 = vrot.lane.b32.xlu0 %v3487, 96
        %v3772 = vpop.permute.xlu0 %3771
        %3773 = vrot.lane.b32.xlu0 %v3488, 96
        %v3774 = vpop.permute.xlu0 %3773
        %3775 = vrot.lane.b32.xlu0 %v3489, 96
        %v3776 = vpop.permute.xlu0 %3775
        %3777 = vrot.lane.b32.xlu0 %v3490, 96
        %v3778 = vpop.permute.xlu0 %3777
        %v3787 = vsel %vm973, %v3347, %v3508
        %v3788 = vsel %vm973, %v3348, %v3510
        %v3789 = vsel %vm973, %v3349, %v3512
        %v3790 = vsel %vm973, %v3350, %v3514
        %v3791 = vsel %vm973, %v3351, %v3516
        %v3792 = vsel %vm973, %v3352, %v3518
        %v3793 = vsel %vm973, %v3353, %v3520
        %v3794 = vsel %vm973, %v3354, %v3522
        %v3795 = vsel %vm353, %v3787, %v3540
        %v3796 = vsel %vm353, %v3788, %v3542
        %v3797 = vsel %vm353, %v3789, %v3544
        %v3798 = vsel %vm353, %v3790, %v3546
        %v3799 = vsel %vm353, %v3791, %v3548
        %v3800 = vsel %vm353, %v3792, %v3550
        %v3801 = vsel %vm353, %v3793, %v3552
        %v3802 = vsel %vm353, %v3794, %v3554
        %v3803 = vsel %vm990, %v3795, %v3572
        %v3804 = vsel %vm990, %v3796, %v3574
        %v3805 = vsel %vm990, %v3797, %v3576
        %v3806 = vsel %vm990, %v3798, %v3578
        %v3807 = vsel %vm990, %v3799, %v3580
        %v3808 = vsel %vm990, %v3800, %v3582
        %v3809 = vsel %vm990, %v3801, %v3584
        %v3810 = vsel %vm990, %v3802, %v3586
        %v3811 = vsel %vm973, %v3427, %v3604
        %v3812 = vsel %vm973, %v3428, %v3606
        %v3813 = vsel %vm973, %v3429, %v3608
        %v3814 = vsel %vm973, %v3430, %v3610
        %v3815 = vsel %vm973, %v3431, %v3612
        %v3816 = vsel %vm973, %v3432, %v3614
        %v3817 = vsel %vm973, %v3433, %v3616
        %v3818 = vsel %vm973, %v3434, %v3618
        %v3819 = vsel %vm353, %v3811, %v3636
        %v3820 = vsel %vm353, %v3812, %v3638
        %v3821 = vsel %vm353, %v3813, %v3640
        %v3822 = vsel %vm353, %v3814, %v3642
        %v3823 = vsel %vm353, %v3815, %v3644
        %v3824 = vsel %vm353, %v3816, %v3646
        %v3825 = vsel %vm353, %v3817, %v3648
        %v3826 = vsel %vm353, %v3818, %v3650
        %v3827 = vsel %vm990, %v3819, %v3668
        %v3828 = vsel %vm990, %v3820, %v3670
        %v3829 = vsel %vm990, %v3821, %v3672
        %v3830 = vsel %vm990, %v3822, %v3674
        %v3831 = vsel %vm990, %v3823, %v3676
        %v3832 = vsel %vm990, %v3824, %v3678
        %v3833 = vsel %vm990, %v3825, %v3680
        %v3834 = vsel %vm990, %v3826, %v3682
        %v3835 = vsel %vm973, %v3459, %v3700
        %v3836 = vsel %vm973, %v3460, %v3702
        %v3837 = vsel %vm973, %v3461, %v3704
        %v3838 = vsel %vm973, %v3462, %v3706
        %v3839 = vsel %vm973, %v3463, %v3708
        %v3840 = vsel %vm973, %v3464, %v3710
        %v3841 = vsel %vm973, %v3465, %v3712
        %v3842 = vsel %vm973, %v3466, %v3714
        %v3843 = vsel %vm353, %v3835, %v3732
        %v3844 = vsel %vm353, %v3836, %v3734
        %v3845 = vsel %vm353, %v3837, %v3736
        %v3846 = vsel %vm353, %v3838, %v3738
        %v3847 = vsel %vm353, %v3839, %v3740
        %v3848 = vsel %vm353, %v3840, %v3742
        %v3849 = vsel %vm353, %v3841, %v3744
        %v3850 = vsel %vm353, %v3842, %v3746
        %v3851 = vsel %vm990, %v3843, %v3764
        %v3852 = vsel %vm990, %v3844, %v3766
        %v3853 = vsel %vm990, %v3845, %v3768
        %v3854 = vsel %vm990, %v3846, %v3770
        %v3855 = vsel %vm990, %v3847, %v3772
        %v3856 = vsel %vm990, %v3848, %v3774
        %v3857 = vsel %vm990, %v3849, %v3776
        %v3858 = vsel %vm990, %v3850, %v3778
        %v3859 = vsel %vm973, %v3491, 0.0
        %v3860 = vsel %vm973, %v3492, 0.0
        %v3861 = vsel %vm973, %v3493, 0.0
        %v3862 = vsel %vm973, %v3494, 0.0
        %v3863 = vsel %vm973, %v3495, 0.0
        %v3864 = vsel %vm973, %v3496, 0.0
        %v3865 = vsel %vm973, %v3497, 0.0
        %v3866 = vsel %vm973, %v3498, 0.0
        %v3867 = vpack.c.bf16 %v3804, %v3803
        %v3868 = vpack.c.bf16 %v3828, %v3827
        %v3869 = vpack.c.bf16 %v3852, %v3851
        %v3870 = vpack.c.bf16 %v3860, %v3859
        %v3871 = vpack.c.bf16 %v3806, %v3805
        %v3872 = vpack.c.bf16 %v3830, %v3829
        %v3873 = vpack.c.bf16 %v3854, %v3853
        %v3874 = vpack.c.bf16 %v3862, %v3861
        %v3875 = vpack.c.bf16 %v3808, %v3807
        %v3876 = vpack.c.bf16 %v3832, %v3831
        %v3877 = vpack.c.bf16 %v3856, %v3855
        %v3878 = vpack.c.bf16 %v3864, %v3863
        %v3879 = vpack.c.bf16 %v3810, %v3809
        %v3880 = vpack.c.bf16 %v3834, %v3833
        %v3881 = vpack.c.bf16 %v3858, %v3857
        %v3882 = vpack.c.bf16 %v3866, %v3865
        %s3883 = scalar_lea.vmem %s4, 768
        %v3884 = vld [vmem:[%s3883] sm:$0xf]
        %v3885 = vld [vmem:[%s3883 + $0x4] sm:$0xf]
        %v3886 = vld [vmem:[%s3883 + $0x8] sm:$0xf]
        %v3887 = vld [vmem:[%s3883 + $0xc] sm:$0xf]
        %v3888 = vld [vmem:[%s3883 + $0x10] sm:$0xf]
        %v3889 = vld [vmem:[%s3883 + $0x14] sm:$0xf]
        %v3890 = vld [vmem:[%s3883 + $0x18] sm:$0xf]
        %v3891 = vld [vmem:[%s3883 + $0x1c] sm:$0xf]
        %v3892 = vld [vmem:[%s3883 + $0x20] sm:$0xf]
        %v3893 = vld [vmem:[%s3883 + $0x24] sm:$0xf]
        %v3894 = vld [vmem:[%s3883 + $0x28] sm:$0xf]
        %v3895 = vld [vmem:[%s3883 + $0x2c] sm:$0xf]
        %v3896 = vld [vmem:[%s3883 + $0x30] sm:$0xf]
        %v3897 = vld [vmem:[%s3883 + $0x34] sm:$0xf]
        %v3898 = vld [vmem:[%s3883 + $0x38] sm:$0xf]
        %v3899 = vld [vmem:[%s3883 + $0x3c] sm:$0xf]
        %v3900 = vld [vmem:[%s3883 + $0x40] sm:$0xf]
        %v3901 = vld [vmem:[%s3883 + $0x44] sm:$0xf]
        %v3902 = vld [vmem:[%s3883 + $0x48] sm:$0xf]
        %v3903 = vld [vmem:[%s3883 + $0x4c] sm:$0xf]
        %v3904 = vld [vmem:[%s3883 + $0x50] sm:$0xf]
        %v3905 = vld [vmem:[%s3883 + $0x54] sm:$0xf]
        %v3906 = vld [vmem:[%s3883 + $0x58] sm:$0xf]
        %v3907 = vld [vmem:[%s3883 + $0x5c] sm:$0xf]
        %v3908 = vld [vmem:[%s3883 + $0x60] sm:$0xf]
        %v3909 = vld [vmem:[%s3883 + $0x64] sm:$0xf]
        %v3910 = vld [vmem:[%s3883 + $0x68] sm:$0xf]
        %v3911 = vld [vmem:[%s3883 + $0x6c] sm:$0xf]
        %v3912 = vld [vmem:[%s3883 + $0x70] sm:$0xf]
        %v3913 = vld [vmem:[%s3883 + $0x74] sm:$0xf]
        %v3914 = vld [vmem:[%s3883 + $0x78] sm:$0xf]
        %v3915 = vld [vmem:[%s3883 + $0x7c] sm:$0xf]
        %v3916 = vld [vmem:[%s3883 + $0x80] sm:$0xf]
        %v3917 = vld [vmem:[%s3883 + $0x84] sm:$0xf]
        %v3918 = vld [vmem:[%s3883 + $0x88] sm:$0xf]
        %v3919 = vld [vmem:[%s3883 + $0x8c] sm:$0xf]
        %v3920 = vld [vmem:[%s3883 + $0x90] sm:$0xf]
        %v3921 = vld [vmem:[%s3883 + $0x94] sm:$0xf]
        %v3922 = vld [vmem:[%s3883 + $0x98] sm:$0xf]
        %v3923 = vld [vmem:[%s3883 + $0x9c] sm:$0xf]
        %v3924 = vld [vmem:[%s3883 + $0xa0] sm:$0xf]
        %v3925 = vld [vmem:[%s3883 + $0xa4] sm:$0xf]
        %v3926 = vld [vmem:[%s3883 + $0xa8] sm:$0xf]
        %v3927 = vld [vmem:[%s3883 + $0xac] sm:$0xf]
        %v3928 = vld [vmem:[%s3883 + $0xb0] sm:$0xf]
        %v3929 = vld [vmem:[%s3883 + $0xb4] sm:$0xf]
        %v3930 = vld [vmem:[%s3883 + $0xb8] sm:$0xf]
        %v3931 = vld [vmem:[%s3883 + $0xbc] sm:$0xf]
        %v3932 = vld [vmem:[%s3883 + $0xc0] sm:$0xf]
        %v3933 = vld [vmem:[%s3883 + $0xc4] sm:$0xf]
        %v3934 = vld [vmem:[%s3883 + $0xc8] sm:$0xf]
        %v3935 = vld [vmem:[%s3883 + $0xcc] sm:$0xf]
        %v3936 = vld [vmem:[%s3883 + $0xd0] sm:$0xf]
        %v3937 = vld [vmem:[%s3883 + $0xd4] sm:$0xf]
        %v3938 = vld [vmem:[%s3883 + $0xd8] sm:$0xf]
        %v3939 = vld [vmem:[%s3883 + $0xdc] sm:$0xf]
        %v3940 = vld [vmem:[%s3883 + $0xe0] sm:$0xf]
        %v3941 = vld [vmem:[%s3883 + $0xe4] sm:$0xf]
        %v3942 = vld [vmem:[%s3883 + $0xe8] sm:$0xf]
        %v3943 = vld [vmem:[%s3883 + $0xec] sm:$0xf]
        %v3944 = vld [vmem:[%s3883 + $0xf0] sm:$0xf]
        %v3945 = vld [vmem:[%s3883 + $0xf4] sm:$0xf]
        %v3946 = vld [vmem:[%s3883 + $0xf8] sm:$0xf]
        %v3947 = vld [vmem:[%s3883 + $0xfc] sm:$0xf]
        %s3948 = scalar_lea.vmem %s5, 3
        %v3949 = vld [vmem:[%s3948] sm:$0x1]
        %v3951 = vperm.slane %v3949, 0
        %v4017 = vunpack.c.l.b16 %v3884
        %v4018 = vunpack.c.l.b16 %v3885
        %v4019 = vunpack.c.l.b16 %v3886
        %v4020 = vunpack.c.l.b16 %v3887
        %v4021 = vunpack.c.l.b16 %v3888
        %v4022 = vunpack.c.l.b16 %v3889
        %v4023 = vunpack.c.l.b16 %v3890
        %v4024 = vunpack.c.l.b16 %v3891
        %v4025 = vunpack.c.l.b16 %v3892
        %v4026 = vunpack.c.l.b16 %v3893
        %v4027 = vunpack.c.l.b16 %v3894
        %v4028 = vunpack.c.l.b16 %v3895
        %v4029 = vunpack.c.l.b16 %v3896
        %v4030 = vunpack.c.l.b16 %v3897
        %v4031 = vunpack.c.l.b16 %v3898
        %v4032 = vunpack.c.l.b16 %v3899
        %v4033 = vunpack.c.l.b16 %v3900
        %v4034 = vunpack.c.l.b16 %v3901
        %v4035 = vunpack.c.l.b16 %v3902
        %v4036 = vunpack.c.l.b16 %v3903
        %v4037 = vunpack.c.l.b16 %v3904
        %v4038 = vunpack.c.l.b16 %v3905
        %v4039 = vunpack.c.l.b16 %v3906
        %v4040 = vunpack.c.l.b16 %v3907
        %v4041 = vunpack.c.l.b16 %v3908
        %v4042 = vunpack.c.l.b16 %v3909
        %v4043 = vunpack.c.l.b16 %v3910
        %v4044 = vunpack.c.l.b16 %v3911
        %v4045 = vunpack.c.l.b16 %v3912
        %v4046 = vunpack.c.l.b16 %v3913
        %v4047 = vunpack.c.l.b16 %v3914
        %v4048 = vunpack.c.l.b16 %v3915
        %v4049 = vunpack.c.l.b16 %v3916
        %v4050 = vunpack.c.l.b16 %v3917
        %v4051 = vunpack.c.l.b16 %v3918
        %v4052 = vunpack.c.l.b16 %v3919
        %v4053 = vunpack.c.l.b16 %v3920
        %v4054 = vunpack.c.l.b16 %v3921
        %v4055 = vunpack.c.l.b16 %v3922
        %v4056 = vunpack.c.l.b16 %v3923
        %v4057 = vunpack.c.l.b16 %v3924
        %v4058 = vunpack.c.l.b16 %v3925
        %v4059 = vunpack.c.l.b16 %v3926
        %v4060 = vunpack.c.l.b16 %v3927
        %v4061 = vunpack.c.l.b16 %v3928
        %v4062 = vunpack.c.l.b16 %v3929
        %v4063 = vunpack.c.l.b16 %v3930
        %v4064 = vunpack.c.l.b16 %v3931
        %v4065 = vunpack.c.l.b16 %v3932
        %v4066 = vunpack.c.l.b16 %v3933
        %v4067 = vunpack.c.l.b16 %v3934
        %v4068 = vunpack.c.l.b16 %v3935
        %v4069 = vunpack.c.l.b16 %v3936
        %v4070 = vunpack.c.l.b16 %v3937
        %v4071 = vunpack.c.l.b16 %v3938
        %v4072 = vunpack.c.l.b16 %v3939
        %v4073 = vunpack.c.l.b16 %v3940
        %v4074 = vunpack.c.l.b16 %v3941
        %v4075 = vunpack.c.l.b16 %v3942
        %v4076 = vunpack.c.l.b16 %v3943
        %v4077 = vunpack.c.l.b16 %v3944
        %v4078 = vunpack.c.l.b16 %v3945
        %v4079 = vunpack.c.l.b16 %v3946
        %v4080 = vunpack.c.l.b16 %v3947
        %v4081 = vpack.c.b16 %v4018, %v4017
        %v4082 = vpack.c.b16 %v4020, %v4019
        %v4083 = vpack.c.b16 %v4022, %v4021
        %v4084 = vpack.c.b16 %v4024, %v4023
        %v4085 = vpack.c.b16 %v4026, %v4025
        %v4086 = vpack.c.b16 %v4028, %v4027
        %v4087 = vpack.c.b16 %v4030, %v4029
        %v4088 = vpack.c.b16 %v4032, %v4031
        %v4089 = vpack.c.b16 %v4034, %v4033
        %v4090 = vpack.c.b16 %v4036, %v4035
        %v4091 = vpack.c.b16 %v4038, %v4037
        %v4092 = vpack.c.b16 %v4040, %v4039
        %v4093 = vpack.c.b16 %v4042, %v4041
        %v4094 = vpack.c.b16 %v4044, %v4043
        %v4095 = vpack.c.b16 %v4046, %v4045
        %v4096 = vpack.c.b16 %v4048, %v4047
        %v4097 = vpack.c.b16 %v4050, %v4049
        %v4098 = vpack.c.b16 %v4052, %v4051
        %v4099 = vpack.c.b16 %v4054, %v4053
        %v4100 = vpack.c.b16 %v4056, %v4055
        %v4101 = vpack.c.b16 %v4058, %v4057
        %v4102 = vpack.c.b16 %v4060, %v4059
        %v4103 = vpack.c.b16 %v4062, %v4061
        %v4104 = vpack.c.b16 %v4064, %v4063
        %v4105 = vpack.c.b16 %v4066, %v4065
        %v4106 = vpack.c.b16 %v4068, %v4067
        %v4107 = vpack.c.b16 %v4070, %v4069
        %v4108 = vpack.c.b16 %v4072, %v4071
        %v4109 = vpack.c.b16 %v4074, %v4073
        %v4110 = vpack.c.b16 %v4076, %v4075
        %v4111 = vpack.c.b16 %v4078, %v4077
        %v4112 = vpack.c.b16 %v4080, %v4079
        %4145 = vmatpush.bf16.msra.mxu0 %v4088
        %4146 = vmatpush.bf16.msra.mxu0 %v4087
        %4147 = vmatpush.bf16.msra.mxu0 %v4086
        %4148 = vmatpush.bf16.msra.mxu0 %v4085
        %4149 = vmatpush.bf16.msra.mxu0 %v4084
        %4150 = vmatpush.bf16.msra.mxu0 %v4083
        %4151 = vmatpush.bf16.msra.mxu0 %v4082
        %4152 = vmatpush.bf16.msra.mxu0 %v4081
        %4153 = vmatmul.bf16.gmra.mxu0 %v3867
        %v4154 = vpop.f32.mrf.mxu0
        %v4155 = vadd.f32 %v3951, %v4154
        %v4156 = vpop.f32.mrf.mxu0
        %v4157 = vadd.f32 %v3951, %v4156
        %4158 = vmatmul.bf16.gmra.mxu0 %v3871
        %v4159 = vpop.f32.mrf.mxu0
        %v4160 = vadd.f32 %v3951, %v4159
        %v4161 = vpop.f32.mrf.mxu0
        %v4162 = vadd.f32 %v3951, %v4161
        %4163 = vmatmul.bf16.gmra.mxu0 %v3875
        %v4164 = vpop.f32.mrf.mxu0
        %v4165 = vadd.f32 %v3951, %v4164
        %v4166 = vpop.f32.mrf.mxu0
        %v4167 = vadd.f32 %v3951, %v4166
        %4168 = vmatmul.bf16.gmra.mxu0 %v3879
        %v4169 = vpop.f32.mrf.mxu0
        %v4170 = vadd.f32 %v3951, %v4169
        %v4171 = vpop.f32.mrf.mxu0
        %v4172 = vadd.f32 %v3951, %v4171
        %4173 = vdwg.mxu0
        %4174 = vmatpush.bf16.msra.mxu0 %v4096
        %4175 = vmatpush.bf16.msra.mxu0 %v4095
        %4176 = vmatpush.bf16.msra.mxu0 %v4094
        %4177 = vmatpush.bf16.msra.mxu0 %v4093
        %4178 = vmatpush.bf16.msra.mxu0 %v4092
        %4179 = vmatpush.bf16.msra.mxu0 %v4091
        %4180 = vmatpush.bf16.msra.mxu0 %v4090
        %4181 = vmatpush.bf16.msra.mxu0 %v4089
        %4182 = vmatmul.bf16.gmra.mxu0 %v3868
        %v4183 = vpop.f32.mrf.mxu0
        %v4184 = vadd.f32 %v4155, %v4183
        %v4185 = vpop.f32.mrf.mxu0
        %v4186 = vadd.f32 %v4157, %v4185
        %4187 = vmatmul.bf16.gmra.mxu0 %v3872
        %v4188 = vpop.f32.mrf.mxu0
        %v4189 = vadd.f32 %v4160, %v4188
        %v4190 = vpop.f32.mrf.mxu0
        %v4191 = vadd.f32 %v4162, %v4190
        %4192 = vmatmul.bf16.gmra.mxu0 %v3876
        %v4193 = vpop.f32.mrf.mxu0
        %v4194 = vadd.f32 %v4165, %v4193
        %v4195 = vpop.f32.mrf.mxu0
        %v4196 = vadd.f32 %v4167, %v4195
        %4197 = vmatmul.bf16.gmra.mxu0 %v3880
        %v4198 = vpop.f32.mrf.mxu0
        %v4199 = vadd.f32 %v4170, %v4198
        %v4200 = vpop.f32.mrf.mxu0
        %v4201 = vadd.f32 %v4172, %v4200
        %4202 = vdwg.mxu0
        %4203 = vmatpush.bf16.msra.mxu0 %v4104
        %4204 = vmatpush.bf16.msra.mxu0 %v4103
        %4205 = vmatpush.bf16.msra.mxu0 %v4102
        %4206 = vmatpush.bf16.msra.mxu0 %v4101
        %4207 = vmatpush.bf16.msra.mxu0 %v4100
        %4208 = vmatpush.bf16.msra.mxu0 %v4099
        %4209 = vmatpush.bf16.msra.mxu0 %v4098
        %4210 = vmatpush.bf16.msra.mxu0 %v4097
        %4211 = vmatmul.bf16.gmra.mxu0 %v3869
        %v4212 = vpop.f32.mrf.mxu0
        %v4213 = vadd.f32 %v4184, %v4212
        %v4214 = vpop.f32.mrf.mxu0
        %v4215 = vadd.f32 %v4186, %v4214
        %4216 = vmatmul.bf16.gmra.mxu0 %v3873
        %v4217 = vpop.f32.mrf.mxu0
        %v4218 = vadd.f32 %v4189, %v4217
        %v4219 = vpop.f32.mrf.mxu0
        %v4220 = vadd.f32 %v4191, %v4219
        %4221 = vmatmul.bf16.gmra.mxu0 %v3877
        %v4222 = vpop.f32.mrf.mxu0
        %v4223 = vadd.f32 %v4194, %v4222
        %v4224 = vpop.f32.mrf.mxu0
        %v4225 = vadd.f32 %v4196, %v4224
        %4226 = vmatmul.bf16.gmra.mxu0 %v3881
        %v4227 = vpop.f32.mrf.mxu0
        %v4228 = vadd.f32 %v4199, %v4227
        %v4229 = vpop.f32.mrf.mxu0
        %v4230 = vadd.f32 %v4201, %v4229
        %4231 = vdwg.mxu0
        %4232 = vmatpush.bf16.msra.mxu0 %v4112
        %4233 = vmatpush.bf16.msra.mxu0 %v4111
        %4234 = vmatpush.bf16.msra.mxu0 %v4110
        %4235 = vmatpush.bf16.msra.mxu0 %v4109
        %4236 = vmatpush.bf16.msra.mxu0 %v4108
        %4237 = vmatpush.bf16.msra.mxu0 %v4107
        %4238 = vmatpush.bf16.msra.mxu0 %v4106
        %4239 = vmatpush.bf16.msra.mxu0 %v4105
        %4240 = vmatmul.bf16.gmra.mxu0 %v3870
        %v4241 = vpop.f32.mrf.mxu0
        %v4242 = vadd.f32 %v4213, %v4241
        %v4243 = vpop.f32.mrf.mxu0
        %v4244 = vadd.f32 %v4215, %v4243
        %4245 = vmatmul.bf16.gmra.mxu0 %v3874
        %v4246 = vpop.f32.mrf.mxu0
        %v4247 = vadd.f32 %v4218, %v4246
        %v4248 = vpop.f32.mrf.mxu0
        %v4249 = vadd.f32 %v4220, %v4248
        %4250 = vmatmul.bf16.gmra.mxu0 %v3878
        %v4251 = vpop.f32.mrf.mxu0
        %v4252 = vadd.f32 %v4223, %v4251
        %v4253 = vpop.f32.mrf.mxu0
        %v4254 = vadd.f32 %v4225, %v4253
        %4255 = vmatmul.bf16.gmra.mxu0 %v3882
        %v4256 = vpop.f32.mrf.mxu0
        %v4257 = vadd.f32 %v4228, %v4256
        %v4258 = vpop.f32.mrf.mxu0
        %v4259 = vadd.f32 %v4230, %v4258
        %4260 = vdwg.mxu0
        %v4261 = vmax.f32 %v4242, 0.0
        %v4262 = vmax.f32 %v4244, 0.0
        %v4263 = vmax.f32 %v4247, 0.0
        %v4264 = vmax.f32 %v4249, 0.0
        %v4265 = vmax.f32 %v4252, 0.0
        %v4266 = vmax.f32 %v4254, 0.0
        %v4267 = vmax.f32 %v4257, 0.0
        %v4268 = vmax.f32 %v4259, 0.0
        %v4269 = vrot.slane %v4261, 6
        %v4270 = vrot.slane %v4262, 6
        %v4271 = vrot.slane %v4263, 6
        %v4272 = vrot.slane %v4264, 6
        %v4273 = vrot.slane %v4265, 6
        %v4274 = vrot.slane %v4266, 6
        %v4275 = vrot.slane %v4267, 6
        %v4276 = vrot.slane %v4268, 6
        %v4277 = vsel %vm405, %v4275, %v4276
        %v4278 = vsel %vm405, %v4274, %v4275
        %v4279 = vsel %vm405, %v4273, %v4274
        %v4280 = vsel %vm405, %v4272, %v4273
        %v4281 = vsel %vm405, %v4271, %v4272
        %v4282 = vsel %vm405, %v4270, %v4271
        %v4283 = vsel %vm405, %v4269, %v4270
        %v4284 = vsel %vm405, %v4276, %v4269
        %v4285 = vmul.f32 %v4278, %v414
        %v4286 = vmul.f32 %v4277, %v415
        %v4287 = vmul.f32 %v4284, %v416
        %v4288 = vmul.f32 %v4283, %v417
        %v4289 = vmul.f32 %v4282, %v418
        %v4290 = vmul.f32 %v4281, %v419
        %v4291 = vmul.f32 %v4280, %v420
        %v4292 = vmul.f32 %v4279, %v421
        %v4293 = vrot.slane %v4261, 7
        %v4294 = vrot.slane %v4262, 7
        %v4295 = vrot.slane %v4263, 7
        %v4296 = vrot.slane %v4264, 7
        %v4297 = vrot.slane %v4265, 7
        %v4298 = vrot.slane %v4266, 7
        %v4299 = vrot.slane %v4267, 7
        %v4300 = vrot.slane %v4268, 7
        %v4301 = vsel %vm438, %v4299, %v4300
        %v4302 = vsel %vm438, %v4298, %v4299
        %v4303 = vsel %vm438, %v4297, %v4298
        %v4304 = vsel %vm438, %v4296, %v4297
        %v4305 = vsel %vm438, %v4295, %v4296
        %v4306 = vsel %vm438, %v4294, %v4295
        %v4307 = vsel %vm438, %v4293, %v4294
        %v4308 = vsel %vm438, %v4300, %v4293
        %v4309 = vmul.f32 %v4302, %v448
        %v4310 = vmul.f32 %v4301, %v449
        %v4311 = vmul.f32 %v4308, %v450
        %v4312 = vmul.f32 %v4307, %v451
        %v4313 = vmul.f32 %v4306, %v452
        %v4314 = vmul.f32 %v4305, %v453
        %v4315 = vmul.f32 %v4304, %v454
        %v4316 = vmul.f32 %v4303, %v455
        %v4317 = vmul.f32 %v4267, %v465
        %v4318 = vmul.f32 %v4268, %v466
        %v4319 = vmul.f32 %v4261, %v467
        %v4320 = vmul.f32 %v4262, %v468
        %v4321 = vmul.f32 %v4263, %v469
        %v4322 = vmul.f32 %v4264, %v470
        %v4323 = vmul.f32 %v4265, %v471
        %v4324 = vmul.f32 %v4266, %v472
        %v4325 = vrot.slane %v4261, 1
        %v4326 = vrot.slane %v4262, 1
        %v4327 = vrot.slane %v4263, 1
        %v4328 = vrot.slane %v4264, 1
        %v4329 = vrot.slane %v4265, 1
        %v4330 = vrot.slane %v4266, 1
        %v4331 = vrot.slane %v4267, 1
        %v4332 = vrot.slane %v4268, 1
        %v4333 = vsel %vm489, %v4331, %v4332
        %v4334 = vsel %vm489, %v4330, %v4331
        %v4335 = vsel %vm489, %v4329, %v4330
        %v4336 = vsel %vm489, %v4328, %v4329
        %v4337 = vsel %vm489, %v4327, %v4328
        %v4338 = vsel %vm489, %v4326, %v4327
        %v4339 = vsel %vm489, %v4325, %v4326
        %v4340 = vsel %vm489, %v4332, %v4325
        %v4341 = vmul.f32 %v4333, %v499
        %v4342 = vmul.f32 %v4340, %v500
        %v4343 = vmul.f32 %v4339, %v501
        %v4344 = vmul.f32 %v4338, %v502
        %v4345 = vmul.f32 %v4337, %v503
        %v4346 = vmul.f32 %v4336, %v504
        %v4347 = vmul.f32 %v4335, %v505
        %v4348 = vmul.f32 %v4334, %v506
        %v4349 = vrot.slane %v4261, 2
        %v4350 = vrot.slane %v4262, 2
        %v4351 = vrot.slane %v4263, 2
        %v4352 = vrot.slane %v4264, 2
        %v4353 = vrot.slane %v4265, 2
        %v4354 = vrot.slane %v4266, 2
        %v4355 = vrot.slane %v4267, 2
        %v4356 = vrot.slane %v4268, 2
        %v4357 = vsel %vm523, %v4355, %v4356
        %v4358 = vsel %vm523, %v4354, %v4355
        %v4359 = vsel %vm523, %v4353, %v4354
        %v4360 = vsel %vm523, %v4352, %v4353
        %v4361 = vsel %vm523, %v4351, %v4352
        %v4362 = vsel %vm523, %v4350, %v4351
        %v4363 = vsel %vm523, %v4349, %v4350
        %v4364 = vsel %vm523, %v4356, %v4349
        %v4365 = vmul.f32 %v4357, %v533
        %v4366 = vmul.f32 %v4364, %v534
        %v4367 = vmul.f32 %v4363, %v535
        %v4368 = vmul.f32 %v4362, %v536
        %v4369 = vmul.f32 %v4361, %v537
        %v4370 = vmul.f32 %v4360, %v538
        %v4371 = vmul.f32 %v4359, %v539
        %v4372 = vmul.f32 %v4358, %v540
        %v4373 = vmul.f32 %v4277, %v550
        %v4374 = vmul.f32 %v4284, %v551
        %v4375 = vmul.f32 %v4283, %v552
        %v4376 = vmul.f32 %v4282, %v553
        %v4377 = vmul.f32 %v4281, %v554
        %v4378 = vmul.f32 %v4280, %v555
        %v4379 = vmul.f32 %v4279, %v556
        %v4380 = vmul.f32 %v4278, %v557
        %v4381 = vmul.f32 %v4301, %v567
        %v4382 = vmul.f32 %v4308, %v568
        %v4383 = vmul.f32 %v4307, %v569
        %v4384 = vmul.f32 %v4306, %v570
        %v4385 = vmul.f32 %v4305, %v571
        %v4386 = vmul.f32 %v4304, %v572
        %v4387 = vmul.f32 %v4303, %v573
        %v4388 = vmul.f32 %v4302, %v574
        %v4389 = vmul.f32 %v4268, %v584
        %v4390 = vmul.f32 %v4261, %v585
        %v4391 = vmul.f32 %v4262, %v586
        %v4392 = vmul.f32 %v4263, %v587
        %v4393 = vmul.f32 %v4264, %v588
        %v4394 = vmul.f32 %v4265, %v589
        %v4395 = vmul.f32 %v4266, %v590
        %v4396 = vmul.f32 %v4267, %v591
        %v4397 = vmul.f32 %v4340, %v601
        %v4398 = vmul.f32 %v4339, %v602
        %v4399 = vmul.f32 %v4338, %v603
        %v4400 = vmul.f32 %v4337, %v604
        %v4401 = vmul.f32 %v4336, %v605
        %v4402 = vmul.f32 %v4335, %v606
        %v4403 = vmul.f32 %v4334, %v607
        %v4404 = vmul.f32 %v4333, %v608
        %v4405 = vmul.f32 %v4364, %v618
        %v4406 = vmul.f32 %v4363, %v619
        %v4407 = vmul.f32 %v4362, %v620
        %v4408 = vmul.f32 %v4361, %v621
        %v4409 = vmul.f32 %v4360, %v622
        %v4410 = vmul.f32 %v4359, %v623
        %v4411 = vmul.f32 %v4358, %v624
        %v4412 = vmul.f32 %v4357, %v625
        %v4413 = vmul.f32 %v4284, %v635
        %v4414 = vmul.f32 %v4283, %v636
        %v4415 = vmul.f32 %v4282, %v637
        %v4416 = vmul.f32 %v4281, %v638
        %v4417 = vmul.f32 %v4280, %v639
        %v4418 = vmul.f32 %v4279, %v640
        %v4419 = vmul.f32 %v4278, %v641
        %v4420 = vmul.f32 %v4277, %v642
        %v4421 = vmul.f32 %v4308, %v652
        %v4422 = vmul.f32 %v4307, %v653
        %v4423 = vmul.f32 %v4306, %v654
        %v4424 = vmul.f32 %v4305, %v655
        %v4425 = vmul.f32 %v4304, %v656
        %v4426 = vmul.f32 %v4303, %v657
        %v4427 = vmul.f32 %v4302, %v658
        %v4428 = vmul.f32 %v4301, %v659
        %v4429 = vmul.f32 %v4261, %v669
        %v4430 = vmul.f32 %v4262, %v670
        %v4431 = vmul.f32 %v4263, %v671
        %v4432 = vmul.f32 %v4264, %v672
        %v4433 = vmul.f32 %v4265, %v673
        %v4434 = vmul.f32 %v4266, %v674
        %v4435 = vmul.f32 %v4267, %v675
        %v4436 = vmul.f32 %v4268, %v676
        %4445 = vrot.lane.b32.xlu0 %v4309, 32
        %v4446 = vpop.permute.xlu0 %4445
        %4447 = vrot.lane.b32.xlu0 %v4310, 32
        %v4448 = vpop.permute.xlu0 %4447
        %4449 = vrot.lane.b32.xlu0 %v4311, 32
        %v4450 = vpop.permute.xlu0 %4449
        %4451 = vrot.lane.b32.xlu0 %v4312, 32
        %v4452 = vpop.permute.xlu0 %4451
        %4453 = vrot.lane.b32.xlu0 %v4313, 32
        %v4454 = vpop.permute.xlu0 %4453
        %4455 = vrot.lane.b32.xlu0 %v4314, 32
        %v4456 = vpop.permute.xlu0 %4455
        %4457 = vrot.lane.b32.xlu0 %v4315, 32
        %v4458 = vpop.permute.xlu0 %4457
        %4459 = vrot.lane.b32.xlu0 %v4316, 32
        %v4460 = vpop.permute.xlu0 %4459
        %4477 = vrot.lane.b32.xlu0 %v4317, 64
        %v4478 = vpop.permute.xlu0 %4477
        %4479 = vrot.lane.b32.xlu0 %v4318, 64
        %v4480 = vpop.permute.xlu0 %4479
        %4481 = vrot.lane.b32.xlu0 %v4319, 64
        %v4482 = vpop.permute.xlu0 %4481
        %4483 = vrot.lane.b32.xlu0 %v4320, 64
        %v4484 = vpop.permute.xlu0 %4483
        %4485 = vrot.lane.b32.xlu0 %v4321, 64
        %v4486 = vpop.permute.xlu0 %4485
        %4487 = vrot.lane.b32.xlu0 %v4322, 64
        %v4488 = vpop.permute.xlu0 %4487
        %4489 = vrot.lane.b32.xlu0 %v4323, 64
        %v4490 = vpop.permute.xlu0 %4489
        %4491 = vrot.lane.b32.xlu0 %v4324, 64
        %v4492 = vpop.permute.xlu0 %4491
        %4509 = vrot.lane.b32.xlu0 %v4341, 96
        %v4510 = vpop.permute.xlu0 %4509
        %4511 = vrot.lane.b32.xlu0 %v4342, 96
        %v4512 = vpop.permute.xlu0 %4511
        %4513 = vrot.lane.b32.xlu0 %v4343, 96
        %v4514 = vpop.permute.xlu0 %4513
        %4515 = vrot.lane.b32.xlu0 %v4344, 96
        %v4516 = vpop.permute.xlu0 %4515
        %4517 = vrot.lane.b32.xlu0 %v4345, 96
        %v4518 = vpop.permute.xlu0 %4517
        %4519 = vrot.lane.b32.xlu0 %v4346, 96
        %v4520 = vpop.permute.xlu0 %4519
        %4521 = vrot.lane.b32.xlu0 %v4347, 96
        %v4522 = vpop.permute.xlu0 %4521
        %4523 = vrot.lane.b32.xlu0 %v4348, 96
        %v4524 = vpop.permute.xlu0 %4523
        %4541 = vrot.lane.b32.xlu0 %v4373, 32
        %v4542 = vpop.permute.xlu0 %4541
        %4543 = vrot.lane.b32.xlu0 %v4374, 32
        %v4544 = vpop.permute.xlu0 %4543
        %4545 = vrot.lane.b32.xlu0 %v4375, 32
        %v4546 = vpop.permute.xlu0 %4545
        %4547 = vrot.lane.b32.xlu0 %v4376, 32
        %v4548 = vpop.permute.xlu0 %4547
        %4549 = vrot.lane.b32.xlu0 %v4377, 32
        %v4550 = vpop.permute.xlu0 %4549
        %4551 = vrot.lane.b32.xlu0 %v4378, 32
        %v4552 = vpop.permute.xlu0 %4551
        %4553 = vrot.lane.b32.xlu0 %v4379, 32
        %v4554 = vpop.permute.xlu0 %4553
        %4555 = vrot.lane.b32.xlu0 %v4380, 32
        %v4556 = vpop.permute.xlu0 %4555
        %4573 = vrot.lane.b32.xlu0 %v4381, 64
        %v4574 = vpop.permute.xlu0 %4573
        %4575 = vrot.lane.b32.xlu0 %v4382, 64
        %v4576 = vpop.permute.xlu0 %4575
        %4577 = vrot.lane.b32.xlu0 %v4383, 64
        %v4578 = vpop.permute.xlu0 %4577
        %4579 = vrot.lane.b32.xlu0 %v4384, 64
        %v4580 = vpop.permute.xlu0 %4579
        %4581 = vrot.lane.b32.xlu0 %v4385, 64
        %v4582 = vpop.permute.xlu0 %4581
        %4583 = vrot.lane.b32.xlu0 %v4386, 64
        %v4584 = vpop.permute.xlu0 %4583
        %4585 = vrot.lane.b32.xlu0 %v4387, 64
        %v4586 = vpop.permute.xlu0 %4585
        %4587 = vrot.lane.b32.xlu0 %v4388, 64
        %v4588 = vpop.permute.xlu0 %4587
        %4605 = vrot.lane.b32.xlu0 %v4389, 96
        %v4606 = vpop.permute.xlu0 %4605
        %4607 = vrot.lane.b32.xlu0 %v4390, 96
        %v4608 = vpop.permute.xlu0 %4607
        %4609 = vrot.lane.b32.xlu0 %v4391, 96
        %v4610 = vpop.permute.xlu0 %4609
        %4611 = vrot.lane.b32.xlu0 %v4392, 96
        %v4612 = vpop.permute.xlu0 %4611
        %4613 = vrot.lane.b32.xlu0 %v4393, 96
        %v4614 = vpop.permute.xlu0 %4613
        %4615 = vrot.lane.b32.xlu0 %v4394, 96
        %v4616 = vpop.permute.xlu0 %4615
        %4617 = vrot.lane.b32.xlu0 %v4395, 96
        %v4618 = vpop.permute.xlu0 %4617
        %4619 = vrot.lane.b32.xlu0 %v4396, 96
        %v4620 = vpop.permute.xlu0 %4619
        %4637 = vrot.lane.b32.xlu0 %v4405, 32
        %v4638 = vpop.permute.xlu0 %4637
        %4639 = vrot.lane.b32.xlu0 %v4406, 32
        %v4640 = vpop.permute.xlu0 %4639
        %4641 = vrot.lane.b32.xlu0 %v4407, 32
        %v4642 = vpop.permute.xlu0 %4641
        %4643 = vrot.lane.b32.xlu0 %v4408, 32
        %v4644 = vpop.permute.xlu0 %4643
        %4645 = vrot.lane.b32.xlu0 %v4409, 32
        %v4646 = vpop.permute.xlu0 %4645
        %4647 = vrot.lane.b32.xlu0 %v4410, 32
        %v4648 = vpop.permute.xlu0 %4647
        %4649 = vrot.lane.b32.xlu0 %v4411, 32
        %v4650 = vpop.permute.xlu0 %4649
        %4651 = vrot.lane.b32.xlu0 %v4412, 32
        %v4652 = vpop.permute.xlu0 %4651
        %4669 = vrot.lane.b32.xlu0 %v4413, 64
        %v4670 = vpop.permute.xlu0 %4669
        %4671 = vrot.lane.b32.xlu0 %v4414, 64
        %v4672 = vpop.permute.xlu0 %4671
        %4673 = vrot.lane.b32.xlu0 %v4415, 64
        %v4674 = vpop.permute.xlu0 %4673
        %4675 = vrot.lane.b32.xlu0 %v4416, 64
        %v4676 = vpop.permute.xlu0 %4675
        %4677 = vrot.lane.b32.xlu0 %v4417, 64
        %v4678 = vpop.permute.xlu0 %4677
        %4679 = vrot.lane.b32.xlu0 %v4418, 64
        %v4680 = vpop.permute.xlu0 %4679
        %4681 = vrot.lane.b32.xlu0 %v4419, 64
        %v4682 = vpop.permute.xlu0 %4681
        %4683 = vrot.lane.b32.xlu0 %v4420, 64
        %v4684 = vpop.permute.xlu0 %4683
        %4701 = vrot.lane.b32.xlu0 %v4421, 96
        %v4702 = vpop.permute.xlu0 %4701
        %4703 = vrot.lane.b32.xlu0 %v4422, 96
        %v4704 = vpop.permute.xlu0 %4703
        %4705 = vrot.lane.b32.xlu0 %v4423, 96
        %v4706 = vpop.permute.xlu0 %4705
        %4707 = vrot.lane.b32.xlu0 %v4424, 96
        %v4708 = vpop.permute.xlu0 %4707
        %4709 = vrot.lane.b32.xlu0 %v4425, 96
        %v4710 = vpop.permute.xlu0 %4709
        %4711 = vrot.lane.b32.xlu0 %v4426, 96
        %v4712 = vpop.permute.xlu0 %4711
        %4713 = vrot.lane.b32.xlu0 %v4427, 96
        %v4714 = vpop.permute.xlu0 %4713
        %4715 = vrot.lane.b32.xlu0 %v4428, 96
        %v4716 = vpop.permute.xlu0 %4715
        %v4725 = vsel %vm973, %v4285, %v4446
        %v4726 = vsel %vm973, %v4286, %v4448
        %v4727 = vsel %vm973, %v4287, %v4450
        %v4728 = vsel %vm973, %v4288, %v4452
        %v4729 = vsel %vm973, %v4289, %v4454
        %v4730 = vsel %vm973, %v4290, %v4456
        %v4731 = vsel %vm973, %v4291, %v4458
        %v4732 = vsel %vm973, %v4292, %v4460
        %v4733 = vsel %vm353, %v4725, %v4478
        %v4734 = vsel %vm353, %v4726, %v4480
        %v4735 = vsel %vm353, %v4727, %v4482
        %v4736 = vsel %vm353, %v4728, %v4484
        %v4737 = vsel %vm353, %v4729, %v4486
        %v4738 = vsel %vm353, %v4730, %v4488
        %v4739 = vsel %vm353, %v4731, %v4490
        %v4740 = vsel %vm353, %v4732, %v4492
        %v4741 = vsel %vm990, %v4733, %v4510
        %v4742 = vsel %vm990, %v4734, %v4512
        %v4743 = vsel %vm990, %v4735, %v4514
        %v4744 = vsel %vm990, %v4736, %v4516
        %v4745 = vsel %vm990, %v4737, %v4518
        %v4746 = vsel %vm990, %v4738, %v4520
        %v4747 = vsel %vm990, %v4739, %v4522
        %v4748 = vsel %vm990, %v4740, %v4524
        %v4749 = vsel %vm973, %v4365, %v4542
        %v4750 = vsel %vm973, %v4366, %v4544
        %v4751 = vsel %vm973, %v4367, %v4546
        %v4752 = vsel %vm973, %v4368, %v4548
        %v4753 = vsel %vm973, %v4369, %v4550
        %v4754 = vsel %vm973, %v4370, %v4552
        %v4755 = vsel %vm973, %v4371, %v4554
        %v4756 = vsel %vm973, %v4372, %v4556
        %v4757 = vsel %vm353, %v4749, %v4574
        %v4758 = vsel %vm353, %v4750, %v4576
        %v4759 = vsel %vm353, %v4751, %v4578
        %v4760 = vsel %vm353, %v4752, %v4580
        %v4761 = vsel %vm353, %v4753, %v4582
        %v4762 = vsel %vm353, %v4754, %v4584
        %v4763 = vsel %vm353, %v4755, %v4586
        %v4764 = vsel %vm353, %v4756, %v4588
        %v4765 = vsel %vm990, %v4757, %v4606
        %v4766 = vsel %vm990, %v4758, %v4608
        %v4767 = vsel %vm990, %v4759, %v4610
        %v4768 = vsel %vm990, %v4760, %v4612
        %v4769 = vsel %vm990, %v4761, %v4614
        %v4770 = vsel %vm990, %v4762, %v4616
        %v4771 = vsel %vm990, %v4763, %v4618
        %v4772 = vsel %vm990, %v4764, %v4620
        %v4773 = vsel %vm973, %v4397, %v4638
        %v4774 = vsel %vm973, %v4398, %v4640
        %v4775 = vsel %vm973, %v4399, %v4642
        %v4776 = vsel %vm973, %v4400, %v4644
        %v4777 = vsel %vm973, %v4401, %v4646
        %v4778 = vsel %vm973, %v4402, %v4648
        %v4779 = vsel %vm973, %v4403, %v4650
        %v4780 = vsel %vm973, %v4404, %v4652
        %v4781 = vsel %vm353, %v4773, %v4670
        %v4782 = vsel %vm353, %v4774, %v4672
        %v4783 = vsel %vm353, %v4775, %v4674
        %v4784 = vsel %vm353, %v4776, %v4676
        %v4785 = vsel %vm353, %v4777, %v4678
        %v4786 = vsel %vm353, %v4778, %v4680
        %v4787 = vsel %vm353, %v4779, %v4682
        %v4788 = vsel %vm353, %v4780, %v4684
        %v4789 = vsel %vm990, %v4781, %v4702
        %v4790 = vsel %vm990, %v4782, %v4704
        %v4791 = vsel %vm990, %v4783, %v4706
        %v4792 = vsel %vm990, %v4784, %v4708
        %v4793 = vsel %vm990, %v4785, %v4710
        %v4794 = vsel %vm990, %v4786, %v4712
        %v4795 = vsel %vm990, %v4787, %v4714
        %v4796 = vsel %vm990, %v4788, %v4716
        %v4797 = vsel %vm973, %v4429, 0.0
        %v4798 = vsel %vm973, %v4430, 0.0
        %v4799 = vsel %vm973, %v4431, 0.0
        %v4800 = vsel %vm973, %v4432, 0.0
        %v4801 = vsel %vm973, %v4433, 0.0
        %v4802 = vsel %vm973, %v4434, 0.0
        %v4803 = vsel %vm973, %v4435, 0.0
        %v4804 = vsel %vm973, %v4436, 0.0
        %v4805 = vpack.c.bf16 %v4742, %v4741
        %v4806 = vpack.c.bf16 %v4766, %v4765
        %v4807 = vpack.c.bf16 %v4790, %v4789
        %v4808 = vpack.c.bf16 %v4798, %v4797
        %v4809 = vpack.c.bf16 %v4744, %v4743
        %v4810 = vpack.c.bf16 %v4768, %v4767
        %v4811 = vpack.c.bf16 %v4792, %v4791
        %v4812 = vpack.c.bf16 %v4800, %v4799
        %v4813 = vpack.c.bf16 %v4746, %v4745
        %v4814 = vpack.c.bf16 %v4770, %v4769
        %v4815 = vpack.c.bf16 %v4794, %v4793
        %v4816 = vpack.c.bf16 %v4802, %v4801
        %v4817 = vpack.c.bf16 %v4748, %v4747
        %v4818 = vpack.c.bf16 %v4772, %v4771
        %v4819 = vpack.c.bf16 %v4796, %v4795
        %v4820 = vpack.c.bf16 %v4804, %v4803
        %s4821 = scalar_lea.vmem %s4, 1024
        %v4822 = vld [vmem:[%s4821] sm:$0xf]
        %v4823 = vld [vmem:[%s4821 + $0x4] sm:$0xf]
        %v4824 = vld [vmem:[%s4821 + $0x8] sm:$0xf]
        %v4825 = vld [vmem:[%s4821 + $0xc] sm:$0xf]
        %v4826 = vld [vmem:[%s4821 + $0x10] sm:$0xf]
        %v4827 = vld [vmem:[%s4821 + $0x14] sm:$0xf]
        %v4828 = vld [vmem:[%s4821 + $0x18] sm:$0xf]
        %v4829 = vld [vmem:[%s4821 + $0x1c] sm:$0xf]
        %v4830 = vld [vmem:[%s4821 + $0x20] sm:$0xf]
        %v4831 = vld [vmem:[%s4821 + $0x24] sm:$0xf]
        %v4832 = vld [vmem:[%s4821 + $0x28] sm:$0xf]
        %v4833 = vld [vmem:[%s4821 + $0x2c] sm:$0xf]
        %v4834 = vld [vmem:[%s4821 + $0x30] sm:$0xf]
        %v4835 = vld [vmem:[%s4821 + $0x34] sm:$0xf]
        %v4836 = vld [vmem:[%s4821 + $0x38] sm:$0xf]
        %v4837 = vld [vmem:[%s4821 + $0x3c] sm:$0xf]
        %v4838 = vld [vmem:[%s4821 + $0x40] sm:$0xf]
        %v4839 = vld [vmem:[%s4821 + $0x44] sm:$0xf]
        %v4840 = vld [vmem:[%s4821 + $0x48] sm:$0xf]
        %v4841 = vld [vmem:[%s4821 + $0x4c] sm:$0xf]
        %v4842 = vld [vmem:[%s4821 + $0x50] sm:$0xf]
        %v4843 = vld [vmem:[%s4821 + $0x54] sm:$0xf]
        %v4844 = vld [vmem:[%s4821 + $0x58] sm:$0xf]
        %v4845 = vld [vmem:[%s4821 + $0x5c] sm:$0xf]
        %v4846 = vld [vmem:[%s4821 + $0x60] sm:$0xf]
        %v4847 = vld [vmem:[%s4821 + $0x64] sm:$0xf]
        %v4848 = vld [vmem:[%s4821 + $0x68] sm:$0xf]
        %v4849 = vld [vmem:[%s4821 + $0x6c] sm:$0xf]
        %v4850 = vld [vmem:[%s4821 + $0x70] sm:$0xf]
        %v4851 = vld [vmem:[%s4821 + $0x74] sm:$0xf]
        %v4852 = vld [vmem:[%s4821 + $0x78] sm:$0xf]
        %v4853 = vld [vmem:[%s4821 + $0x7c] sm:$0xf]
        %v4854 = vld [vmem:[%s4821 + $0x80] sm:$0xf]
        %v4855 = vld [vmem:[%s4821 + $0x84] sm:$0xf]
        %v4856 = vld [vmem:[%s4821 + $0x88] sm:$0xf]
        %v4857 = vld [vmem:[%s4821 + $0x8c] sm:$0xf]
        %v4858 = vld [vmem:[%s4821 + $0x90] sm:$0xf]
        %v4859 = vld [vmem:[%s4821 + $0x94] sm:$0xf]
        %v4860 = vld [vmem:[%s4821 + $0x98] sm:$0xf]
        %v4861 = vld [vmem:[%s4821 + $0x9c] sm:$0xf]
        %v4862 = vld [vmem:[%s4821 + $0xa0] sm:$0xf]
        %v4863 = vld [vmem:[%s4821 + $0xa4] sm:$0xf]
        %v4864 = vld [vmem:[%s4821 + $0xa8] sm:$0xf]
        %v4865 = vld [vmem:[%s4821 + $0xac] sm:$0xf]
        %v4866 = vld [vmem:[%s4821 + $0xb0] sm:$0xf]
        %v4867 = vld [vmem:[%s4821 + $0xb4] sm:$0xf]
        %v4868 = vld [vmem:[%s4821 + $0xb8] sm:$0xf]
        %v4869 = vld [vmem:[%s4821 + $0xbc] sm:$0xf]
        %v4870 = vld [vmem:[%s4821 + $0xc0] sm:$0xf]
        %v4871 = vld [vmem:[%s4821 + $0xc4] sm:$0xf]
        %v4872 = vld [vmem:[%s4821 + $0xc8] sm:$0xf]
        %v4873 = vld [vmem:[%s4821 + $0xcc] sm:$0xf]
        %v4874 = vld [vmem:[%s4821 + $0xd0] sm:$0xf]
        %v4875 = vld [vmem:[%s4821 + $0xd4] sm:$0xf]
        %v4876 = vld [vmem:[%s4821 + $0xd8] sm:$0xf]
        %v4877 = vld [vmem:[%s4821 + $0xdc] sm:$0xf]
        %v4878 = vld [vmem:[%s4821 + $0xe0] sm:$0xf]
        %v4879 = vld [vmem:[%s4821 + $0xe4] sm:$0xf]
        %v4880 = vld [vmem:[%s4821 + $0xe8] sm:$0xf]
        %v4881 = vld [vmem:[%s4821 + $0xec] sm:$0xf]
        %v4882 = vld [vmem:[%s4821 + $0xf0] sm:$0xf]
        %v4883 = vld [vmem:[%s4821 + $0xf4] sm:$0xf]
        %v4884 = vld [vmem:[%s4821 + $0xf8] sm:$0xf]
        %v4885 = vld [vmem:[%s4821 + $0xfc] sm:$0xf]
        %s4886 = scalar_lea.vmem %s5, 4
        %v4887 = vld [vmem:[%s4886] sm:$0x1]
        %v4889 = vperm.slane %v4887, 0
        %v4955 = vunpack.c.l.b16 %v4822
        %v4956 = vunpack.c.l.b16 %v4823
        %v4957 = vunpack.c.l.b16 %v4824
        %v4958 = vunpack.c.l.b16 %v4825
        %v4959 = vunpack.c.l.b16 %v4826
        %v4960 = vunpack.c.l.b16 %v4827
        %v4961 = vunpack.c.l.b16 %v4828
        %v4962 = vunpack.c.l.b16 %v4829
        %v4963 = vunpack.c.l.b16 %v4830
        %v4964 = vunpack.c.l.b16 %v4831
        %v4965 = vunpack.c.l.b16 %v4832
        %v4966 = vunpack.c.l.b16 %v4833
        %v4967 = vunpack.c.l.b16 %v4834
        %v4968 = vunpack.c.l.b16 %v4835
        %v4969 = vunpack.c.l.b16 %v4836
        %v4970 = vunpack.c.l.b16 %v4837
        %v4971 = vunpack.c.l.b16 %v4838
        %v4972 = vunpack.c.l.b16 %v4839
        %v4973 = vunpack.c.l.b16 %v4840
        %v4974 = vunpack.c.l.b16 %v4841
        %v4975 = vunpack.c.l.b16 %v4842
        %v4976 = vunpack.c.l.b16 %v4843
        %v4977 = vunpack.c.l.b16 %v4844
        %v4978 = vunpack.c.l.b16 %v4845
        %v4979 = vunpack.c.l.b16 %v4846
        %v4980 = vunpack.c.l.b16 %v4847
        %v4981 = vunpack.c.l.b16 %v4848
        %v4982 = vunpack.c.l.b16 %v4849
        %v4983 = vunpack.c.l.b16 %v4850
        %v4984 = vunpack.c.l.b16 %v4851
        %v4985 = vunpack.c.l.b16 %v4852
        %v4986 = vunpack.c.l.b16 %v4853
        %v4987 = vunpack.c.l.b16 %v4854
        %v4988 = vunpack.c.l.b16 %v4855
        %v4989 = vunpack.c.l.b16 %v4856
        %v4990 = vunpack.c.l.b16 %v4857
        %v4991 = vunpack.c.l.b16 %v4858
        %v4992 = vunpack.c.l.b16 %v4859
        %v4993 = vunpack.c.l.b16 %v4860
        %v4994 = vunpack.c.l.b16 %v4861
        %v4995 = vunpack.c.l.b16 %v4862
        %v4996 = vunpack.c.l.b16 %v4863
        %v4997 = vunpack.c.l.b16 %v4864
        %v4998 = vunpack.c.l.b16 %v4865
        %v4999 = vunpack.c.l.b16 %v4866
        %v5000 = vunpack.c.l.b16 %v4867
        %v5001 = vunpack.c.l.b16 %v4868
        %v5002 = vunpack.c.l.b16 %v4869
        %v5003 = vunpack.c.l.b16 %v4870
        %v5004 = vunpack.c.l.b16 %v4871
        %v5005 = vunpack.c.l.b16 %v4872
        %v5006 = vunpack.c.l.b16 %v4873
        %v5007 = vunpack.c.l.b16 %v4874
        %v5008 = vunpack.c.l.b16 %v4875
        %v5009 = vunpack.c.l.b16 %v4876
        %v5010 = vunpack.c.l.b16 %v4877
        %v5011 = vunpack.c.l.b16 %v4878
        %v5012 = vunpack.c.l.b16 %v4879
        %v5013 = vunpack.c.l.b16 %v4880
        %v5014 = vunpack.c.l.b16 %v4881
        %v5015 = vunpack.c.l.b16 %v4882
        %v5016 = vunpack.c.l.b16 %v4883
        %v5017 = vunpack.c.l.b16 %v4884
        %v5018 = vunpack.c.l.b16 %v4885
        %v5019 = vpack.c.b16 %v4956, %v4955
        %v5020 = vpack.c.b16 %v4958, %v4957
        %v5021 = vpack.c.b16 %v4960, %v4959
        %v5022 = vpack.c.b16 %v4962, %v4961
        %v5023 = vpack.c.b16 %v4964, %v4963
        %v5024 = vpack.c.b16 %v4966, %v4965
        %v5025 = vpack.c.b16 %v4968, %v4967
        %v5026 = vpack.c.b16 %v4970, %v4969
        %v5027 = vpack.c.b16 %v4972, %v4971
        %v5028 = vpack.c.b16 %v4974, %v4973
        %v5029 = vpack.c.b16 %v4976, %v4975
        %v5030 = vpack.c.b16 %v4978, %v4977
        %v5031 = vpack.c.b16 %v4980, %v4979
        %v5032 = vpack.c.b16 %v4982, %v4981
        %v5033 = vpack.c.b16 %v4984, %v4983
        %v5034 = vpack.c.b16 %v4986, %v4985
        %v5035 = vpack.c.b16 %v4988, %v4987
        %v5036 = vpack.c.b16 %v4990, %v4989
        %v5037 = vpack.c.b16 %v4992, %v4991
        %v5038 = vpack.c.b16 %v4994, %v4993
        %v5039 = vpack.c.b16 %v4996, %v4995
        %v5040 = vpack.c.b16 %v4998, %v4997
        %v5041 = vpack.c.b16 %v5000, %v4999
        %v5042 = vpack.c.b16 %v5002, %v5001
        %v5043 = vpack.c.b16 %v5004, %v5003
        %v5044 = vpack.c.b16 %v5006, %v5005
        %v5045 = vpack.c.b16 %v5008, %v5007
        %v5046 = vpack.c.b16 %v5010, %v5009
        %v5047 = vpack.c.b16 %v5012, %v5011
        %v5048 = vpack.c.b16 %v5014, %v5013
        %v5049 = vpack.c.b16 %v5016, %v5015
        %v5050 = vpack.c.b16 %v5018, %v5017
        %5083 = vmatpush.bf16.msra.mxu0 %v5026
        %5084 = vmatpush.bf16.msra.mxu0 %v5025
        %5085 = vmatpush.bf16.msra.mxu0 %v5024
        %5086 = vmatpush.bf16.msra.mxu0 %v5023
        %5087 = vmatpush.bf16.msra.mxu0 %v5022
        %5088 = vmatpush.bf16.msra.mxu0 %v5021
        %5089 = vmatpush.bf16.msra.mxu0 %v5020
        %5090 = vmatpush.bf16.msra.mxu0 %v5019
        %5091 = vmatmul.bf16.gmra.mxu0 %v4805
        %v5092 = vpop.f32.mrf.mxu0
        %v5093 = vadd.f32 %v4889, %v5092
        %v5094 = vpop.f32.mrf.mxu0
        %v5095 = vadd.f32 %v4889, %v5094
        %5096 = vmatmul.bf16.gmra.mxu0 %v4809
        %v5097 = vpop.f32.mrf.mxu0
        %v5098 = vadd.f32 %v4889, %v5097
        %v5099 = vpop.f32.mrf.mxu0
        %v5100 = vadd.f32 %v4889, %v5099
        %5101 = vmatmul.bf16.gmra.mxu0 %v4813
        %v5102 = vpop.f32.mrf.mxu0
        %v5103 = vadd.f32 %v4889, %v5102
        %v5104 = vpop.f32.mrf.mxu0
        %v5105 = vadd.f32 %v4889, %v5104
        %5106 = vmatmul.bf16.gmra.mxu0 %v4817
        %v5107 = vpop.f32.mrf.mxu0
        %v5108 = vadd.f32 %v4889, %v5107
        %v5109 = vpop.f32.mrf.mxu0
        %v5110 = vadd.f32 %v4889, %v5109
        %5111 = vdwg.mxu0
        %5112 = vmatpush.bf16.msra.mxu0 %v5034
        %5113 = vmatpush.bf16.msra.mxu0 %v5033
        %5114 = vmatpush.bf16.msra.mxu0 %v5032
        %5115 = vmatpush.bf16.msra.mxu0 %v5031
        %5116 = vmatpush.bf16.msra.mxu0 %v5030
        %5117 = vmatpush.bf16.msra.mxu0 %v5029
        %5118 = vmatpush.bf16.msra.mxu0 %v5028
        %5119 = vmatpush.bf16.msra.mxu0 %v5027
        %5120 = vmatmul.bf16.gmra.mxu0 %v4806
        %v5121 = vpop.f32.mrf.mxu0
        %v5122 = vadd.f32 %v5093, %v5121
        %v5123 = vpop.f32.mrf.mxu0
        %v5124 = vadd.f32 %v5095, %v5123
        %5125 = vmatmul.bf16.gmra.mxu0 %v4810
        %v5126 = vpop.f32.mrf.mxu0
        %v5127 = vadd.f32 %v5098, %v5126
        %v5128 = vpop.f32.mrf.mxu0
        %v5129 = vadd.f32 %v5100, %v5128
        %5130 = vmatmul.bf16.gmra.mxu0 %v4814
        %v5131 = vpop.f32.mrf.mxu0
        %v5132 = vadd.f32 %v5103, %v5131
        %v5133 = vpop.f32.mrf.mxu0
        %v5134 = vadd.f32 %v5105, %v5133
        %5135 = vmatmul.bf16.gmra.mxu0 %v4818
        %v5136 = vpop.f32.mrf.mxu0
        %v5137 = vadd.f32 %v5108, %v5136
        %v5138 = vpop.f32.mrf.mxu0
        %v5139 = vadd.f32 %v5110, %v5138
        %5140 = vdwg.mxu0
        %5141 = vmatpush.bf16.msra.mxu0 %v5042
        %5142 = vmatpush.bf16.msra.mxu0 %v5041
        %5143 = vmatpush.bf16.msra.mxu0 %v5040
        %5144 = vmatpush.bf16.msra.mxu0 %v5039
        %5145 = vmatpush.bf16.msra.mxu0 %v5038
        %5146 = vmatpush.bf16.msra.mxu0 %v5037
        %5147 = vmatpush.bf16.msra.mxu0 %v5036
        %5148 = vmatpush.bf16.msra.mxu0 %v5035
        %5149 = vmatmul.bf16.gmra.mxu0 %v4807
        %v5150 = vpop.f32.mrf.mxu0
        %v5151 = vadd.f32 %v5122, %v5150
        %v5152 = vpop.f32.mrf.mxu0
        %v5153 = vadd.f32 %v5124, %v5152
        %5154 = vmatmul.bf16.gmra.mxu0 %v4811
        %v5155 = vpop.f32.mrf.mxu0
        %v5156 = vadd.f32 %v5127, %v5155
        %v5157 = vpop.f32.mrf.mxu0
        %v5158 = vadd.f32 %v5129, %v5157
        %5159 = vmatmul.bf16.gmra.mxu0 %v4815
        %v5160 = vpop.f32.mrf.mxu0
        %v5161 = vadd.f32 %v5132, %v5160
        %v5162 = vpop.f32.mrf.mxu0
        %v5163 = vadd.f32 %v5134, %v5162
        %5164 = vmatmul.bf16.gmra.mxu0 %v4819
        %v5165 = vpop.f32.mrf.mxu0
        %v5166 = vadd.f32 %v5137, %v5165
        %v5167 = vpop.f32.mrf.mxu0
        %v5168 = vadd.f32 %v5139, %v5167
        %5169 = vdwg.mxu0
        %5170 = vmatpush.bf16.msra.mxu0 %v5050
        %5171 = vmatpush.bf16.msra.mxu0 %v5049
        %5172 = vmatpush.bf16.msra.mxu0 %v5048
        %5173 = vmatpush.bf16.msra.mxu0 %v5047
        %5174 = vmatpush.bf16.msra.mxu0 %v5046
        %5175 = vmatpush.bf16.msra.mxu0 %v5045
        %5176 = vmatpush.bf16.msra.mxu0 %v5044
        %5177 = vmatpush.bf16.msra.mxu0 %v5043
        %5178 = vmatmul.bf16.gmra.mxu0 %v4808
        %v5179 = vpop.f32.mrf.mxu0
        %v5180 = vadd.f32 %v5151, %v5179
        %v5181 = vpop.f32.mrf.mxu0
        %v5182 = vadd.f32 %v5153, %v5181
        %5183 = vmatmul.bf16.gmra.mxu0 %v4812
        %v5184 = vpop.f32.mrf.mxu0
        %v5185 = vadd.f32 %v5156, %v5184
        %v5186 = vpop.f32.mrf.mxu0
        %v5187 = vadd.f32 %v5158, %v5186
        %5188 = vmatmul.bf16.gmra.mxu0 %v4816
        %v5189 = vpop.f32.mrf.mxu0
        %v5190 = vadd.f32 %v5161, %v5189
        %v5191 = vpop.f32.mrf.mxu0
        %v5192 = vadd.f32 %v5163, %v5191
        %5193 = vmatmul.bf16.gmra.mxu0 %v4820
        %v5194 = vpop.f32.mrf.mxu0
        %v5195 = vadd.f32 %v5166, %v5194
        %v5196 = vpop.f32.mrf.mxu0
        %v5197 = vadd.f32 %v5168, %v5196
        %5198 = vdwg.mxu0
        %v5199 = vmax.f32 %v5180, 0.0
        %v5200 = vmax.f32 %v5182, 0.0
        %v5201 = vmax.f32 %v5185, 0.0
        %v5202 = vmax.f32 %v5187, 0.0
        %v5203 = vmax.f32 %v5190, 0.0
        %v5204 = vmax.f32 %v5192, 0.0
        %v5205 = vmax.f32 %v5195, 0.0
        %v5206 = vmax.f32 %v5197, 0.0
        %v5207 = vrot.slane %v5199, 6
        %v5208 = vrot.slane %v5200, 6
        %v5209 = vrot.slane %v5201, 6
        %v5210 = vrot.slane %v5202, 6
        %v5211 = vrot.slane %v5203, 6
        %v5212 = vrot.slane %v5204, 6
        %v5213 = vrot.slane %v5205, 6
        %v5214 = vrot.slane %v5206, 6
        %v5215 = vsel %vm405, %v5213, %v5214
        %v5216 = vsel %vm405, %v5212, %v5213
        %v5217 = vsel %vm405, %v5211, %v5212
        %v5218 = vsel %vm405, %v5210, %v5211
        %v5219 = vsel %vm405, %v5209, %v5210
        %v5220 = vsel %vm405, %v5208, %v5209
        %v5221 = vsel %vm405, %v5207, %v5208
        %v5222 = vsel %vm405, %v5214, %v5207
        %v5223 = vmul.f32 %v5216, %v414
        %v5224 = vmul.f32 %v5215, %v415
        %v5225 = vmul.f32 %v5222, %v416
        %v5226 = vmul.f32 %v5221, %v417
        %v5227 = vmul.f32 %v5220, %v418
        %v5228 = vmul.f32 %v5219, %v419
        %v5229 = vmul.f32 %v5218, %v420
        %v5230 = vmul.f32 %v5217, %v421
        %v5231 = vrot.slane %v5199, 7
        %v5232 = vrot.slane %v5200, 7
        %v5233 = vrot.slane %v5201, 7
        %v5234 = vrot.slane %v5202, 7
        %v5235 = vrot.slane %v5203, 7
        %v5236 = vrot.slane %v5204, 7
        %v5237 = vrot.slane %v5205, 7
        %v5238 = vrot.slane %v5206, 7
        %v5239 = vsel %vm438, %v5237, %v5238
        %v5240 = vsel %vm438, %v5236, %v5237
        %v5241 = vsel %vm438, %v5235, %v5236
        %v5242 = vsel %vm438, %v5234, %v5235
        %v5243 = vsel %vm438, %v5233, %v5234
        %v5244 = vsel %vm438, %v5232, %v5233
        %v5245 = vsel %vm438, %v5231, %v5232
        %v5246 = vsel %vm438, %v5238, %v5231
        %v5247 = vmul.f32 %v5240, %v448
        %v5248 = vmul.f32 %v5239, %v449
        %v5249 = vmul.f32 %v5246, %v450
        %v5250 = vmul.f32 %v5245, %v451
        %v5251 = vmul.f32 %v5244, %v452
        %v5252 = vmul.f32 %v5243, %v453
        %v5253 = vmul.f32 %v5242, %v454
        %v5254 = vmul.f32 %v5241, %v455
        %v5255 = vmul.f32 %v5205, %v465
        %v5256 = vmul.f32 %v5206, %v466
        %v5257 = vmul.f32 %v5199, %v467
        %v5258 = vmul.f32 %v5200, %v468
        %v5259 = vmul.f32 %v5201, %v469
        %v5260 = vmul.f32 %v5202, %v470
        %v5261 = vmul.f32 %v5203, %v471
        %v5262 = vmul.f32 %v5204, %v472
        %v5263 = vrot.slane %v5199, 1
        %v5264 = vrot.slane %v5200, 1
        %v5265 = vrot.slane %v5201, 1
        %v5266 = vrot.slane %v5202, 1
        %v5267 = vrot.slane %v5203, 1
        %v5268 = vrot.slane %v5204, 1
        %v5269 = vrot.slane %v5205, 1
        %v5270 = vrot.slane %v5206, 1
        %v5271 = vsel %vm489, %v5269, %v5270
        %v5272 = vsel %vm489, %v5268, %v5269
        %v5273 = vsel %vm489, %v5267, %v5268
        %v5274 = vsel %vm489, %v5266, %v5267
        %v5275 = vsel %vm489, %v5265, %v5266
        %v5276 = vsel %vm489, %v5264, %v5265
        %v5277 = vsel %vm489, %v5263, %v5264
        %v5278 = vsel %vm489, %v5270, %v5263
        %v5279 = vmul.f32 %v5271, %v499
        %v5280 = vmul.f32 %v5278, %v500
        %v5281 = vmul.f32 %v5277, %v501
        %v5282 = vmul.f32 %v5276, %v502
        %v5283 = vmul.f32 %v5275, %v503
        %v5284 = vmul.f32 %v5274, %v504
        %v5285 = vmul.f32 %v5273, %v505
        %v5286 = vmul.f32 %v5272, %v506
        %v5287 = vrot.slane %v5199, 2
        %v5288 = vrot.slane %v5200, 2
        %v5289 = vrot.slane %v5201, 2
        %v5290 = vrot.slane %v5202, 2
        %v5291 = vrot.slane %v5203, 2
        %v5292 = vrot.slane %v5204, 2
        %v5293 = vrot.slane %v5205, 2
        %v5294 = vrot.slane %v5206, 2
        %v5295 = vsel %vm523, %v5293, %v5294
        %v5296 = vsel %vm523, %v5292, %v5293
        %v5297 = vsel %vm523, %v5291, %v5292
        %v5298 = vsel %vm523, %v5290, %v5291
        %v5299 = vsel %vm523, %v5289, %v5290
        %v5300 = vsel %vm523, %v5288, %v5289
        %v5301 = vsel %vm523, %v5287, %v5288
        %v5302 = vsel %vm523, %v5294, %v5287
        %v5303 = vmul.f32 %v5295, %v533
        %v5304 = vmul.f32 %v5302, %v534
        %v5305 = vmul.f32 %v5301, %v535
        %v5306 = vmul.f32 %v5300, %v536
        %v5307 = vmul.f32 %v5299, %v537
        %v5308 = vmul.f32 %v5298, %v538
        %v5309 = vmul.f32 %v5297, %v539
        %v5310 = vmul.f32 %v5296, %v540
        %v5311 = vmul.f32 %v5215, %v550
        %v5312 = vmul.f32 %v5222, %v551
        %v5313 = vmul.f32 %v5221, %v552
        %v5314 = vmul.f32 %v5220, %v553
        %v5315 = vmul.f32 %v5219, %v554
        %v5316 = vmul.f32 %v5218, %v555
        %v5317 = vmul.f32 %v5217, %v556
        %v5318 = vmul.f32 %v5216, %v557
        %v5319 = vmul.f32 %v5239, %v567
        %v5320 = vmul.f32 %v5246, %v568
        %v5321 = vmul.f32 %v5245, %v569
        %v5322 = vmul.f32 %v5244, %v570
        %v5323 = vmul.f32 %v5243, %v571
        %v5324 = vmul.f32 %v5242, %v572
        %v5325 = vmul.f32 %v5241, %v573
        %v5326 = vmul.f32 %v5240, %v574
        %v5327 = vmul.f32 %v5206, %v584
        %v5328 = vmul.f32 %v5199, %v585
        %v5329 = vmul.f32 %v5200, %v586
        %v5330 = vmul.f32 %v5201, %v587
        %v5331 = vmul.f32 %v5202, %v588
        %v5332 = vmul.f32 %v5203, %v589
        %v5333 = vmul.f32 %v5204, %v590
        %v5334 = vmul.f32 %v5205, %v591
        %v5335 = vmul.f32 %v5278, %v601
        %v5336 = vmul.f32 %v5277, %v602
        %v5337 = vmul.f32 %v5276, %v603
        %v5338 = vmul.f32 %v5275, %v604
        %v5339 = vmul.f32 %v5274, %v605
        %v5340 = vmul.f32 %v5273, %v606
        %v5341 = vmul.f32 %v5272, %v607
        %v5342 = vmul.f32 %v5271, %v608
        %v5343 = vmul.f32 %v5302, %v618
        %v5344 = vmul.f32 %v5301, %v619
        %v5345 = vmul.f32 %v5300, %v620
        %v5346 = vmul.f32 %v5299, %v621
        %v5347 = vmul.f32 %v5298, %v622
        %v5348 = vmul.f32 %v5297, %v623
        %v5349 = vmul.f32 %v5296, %v624
        %v5350 = vmul.f32 %v5295, %v625
        %v5351 = vmul.f32 %v5222, %v635
        %v5352 = vmul.f32 %v5221, %v636
        %v5353 = vmul.f32 %v5220, %v637
        %v5354 = vmul.f32 %v5219, %v638
        %v5355 = vmul.f32 %v5218, %v639
        %v5356 = vmul.f32 %v5217, %v640
        %v5357 = vmul.f32 %v5216, %v641
        %v5358 = vmul.f32 %v5215, %v642
        %v5359 = vmul.f32 %v5246, %v652
        %v5360 = vmul.f32 %v5245, %v653
        %v5361 = vmul.f32 %v5244, %v654
        %v5362 = vmul.f32 %v5243, %v655
        %v5363 = vmul.f32 %v5242, %v656
        %v5364 = vmul.f32 %v5241, %v657
        %v5365 = vmul.f32 %v5240, %v658
        %v5366 = vmul.f32 %v5239, %v659
        %v5367 = vmul.f32 %v5199, %v669
        %v5368 = vmul.f32 %v5200, %v670
        %v5369 = vmul.f32 %v5201, %v671
        %v5370 = vmul.f32 %v5202, %v672
        %v5371 = vmul.f32 %v5203, %v673
        %v5372 = vmul.f32 %v5204, %v674
        %v5373 = vmul.f32 %v5205, %v675
        %v5374 = vmul.f32 %v5206, %v676
        %5383 = vrot.lane.b32.xlu0 %v5247, 32
        %v5384 = vpop.permute.xlu0 %5383
        %5385 = vrot.lane.b32.xlu0 %v5248, 32
        %v5386 = vpop.permute.xlu0 %5385
        %5387 = vrot.lane.b32.xlu0 %v5249, 32
        %v5388 = vpop.permute.xlu0 %5387
        %5389 = vrot.lane.b32.xlu0 %v5250, 32
        %v5390 = vpop.permute.xlu0 %5389
        %5391 = vrot.lane.b32.xlu0 %v5251, 32
        %v5392 = vpop.permute.xlu0 %5391
        %5393 = vrot.lane.b32.xlu0 %v5252, 32
        %v5394 = vpop.permute.xlu0 %5393
        %5395 = vrot.lane.b32.xlu0 %v5253, 32
        %v5396 = vpop.permute.xlu0 %5395
        %5397 = vrot.lane.b32.xlu0 %v5254, 32
        %v5398 = vpop.permute.xlu0 %5397
        %5415 = vrot.lane.b32.xlu0 %v5255, 64
        %v5416 = vpop.permute.xlu0 %5415
        %5417 = vrot.lane.b32.xlu0 %v5256, 64
        %v5418 = vpop.permute.xlu0 %5417
        %5419 = vrot.lane.b32.xlu0 %v5257, 64
        %v5420 = vpop.permute.xlu0 %5419
        %5421 = vrot.lane.b32.xlu0 %v5258, 64
        %v5422 = vpop.permute.xlu0 %5421
        %5423 = vrot.lane.b32.xlu0 %v5259, 64
        %v5424 = vpop.permute.xlu0 %5423
        %5425 = vrot.lane.b32.xlu0 %v5260, 64
        %v5426 = vpop.permute.xlu0 %5425
        %5427 = vrot.lane.b32.xlu0 %v5261, 64
        %v5428 = vpop.permute.xlu0 %5427
        %5429 = vrot.lane.b32.xlu0 %v5262, 64
        %v5430 = vpop.permute.xlu0 %5429
        %5447 = vrot.lane.b32.xlu0 %v5279, 96
        %v5448 = vpop.permute.xlu0 %5447
        %5449 = vrot.lane.b32.xlu0 %v5280, 96
        %v5450 = vpop.permute.xlu0 %5449
        %5451 = vrot.lane.b32.xlu0 %v5281, 96
        %v5452 = vpop.permute.xlu0 %5451
        %5453 = vrot.lane.b32.xlu0 %v5282, 96
        %v5454 = vpop.permute.xlu0 %5453
        %5455 = vrot.lane.b32.xlu0 %v5283, 96
        %v5456 = vpop.permute.xlu0 %5455
        %5457 = vrot.lane.b32.xlu0 %v5284, 96
        %v5458 = vpop.permute.xlu0 %5457
        %5459 = vrot.lane.b32.xlu0 %v5285, 96
        %v5460 = vpop.permute.xlu0 %5459
        %5461 = vrot.lane.b32.xlu0 %v5286, 96
        %v5462 = vpop.permute.xlu0 %5461
        %5479 = vrot.lane.b32.xlu0 %v5311, 32
        %v5480 = vpop.permute.xlu0 %5479
        %5481 = vrot.lane.b32.xlu0 %v5312, 32
        %v5482 = vpop.permute.xlu0 %5481
        %5483 = vrot.lane.b32.xlu0 %v5313, 32
        %v5484 = vpop.permute.xlu0 %5483
        %5485 = vrot.lane.b32.xlu0 %v5314, 32
        %v5486 = vpop.permute.xlu0 %5485
        %5487 = vrot.lane.b32.xlu0 %v5315, 32
        %v5488 = vpop.permute.xlu0 %5487
        %5489 = vrot.lane.b32.xlu0 %v5316, 32
        %v5490 = vpop.permute.xlu0 %5489
        %5491 = vrot.lane.b32.xlu0 %v5317, 32
        %v5492 = vpop.permute.xlu0 %5491
        %5493 = vrot.lane.b32.xlu0 %v5318, 32
        %v5494 = vpop.permute.xlu0 %5493
        %5511 = vrot.lane.b32.xlu0 %v5319, 64
        %v5512 = vpop.permute.xlu0 %5511
        %5513 = vrot.lane.b32.xlu0 %v5320, 64
        %v5514 = vpop.permute.xlu0 %5513
        %5515 = vrot.lane.b32.xlu0 %v5321, 64
        %v5516 = vpop.permute.xlu0 %5515
        %5517 = vrot.lane.b32.xlu0 %v5322, 64
        %v5518 = vpop.permute.xlu0 %5517
        %5519 = vrot.lane.b32.xlu0 %v5323, 64
        %v5520 = vpop.permute.xlu0 %5519
        %5521 = vrot.lane.b32.xlu0 %v5324, 64
        %v5522 = vpop.permute.xlu0 %5521
        %5523 = vrot.lane.b32.xlu0 %v5325, 64
        %v5524 = vpop.permute.xlu0 %5523
        %5525 = vrot.lane.b32.xlu0 %v5326, 64
        %v5526 = vpop.permute.xlu0 %5525
        %5543 = vrot.lane.b32.xlu0 %v5327, 96
        %v5544 = vpop.permute.xlu0 %5543
        %5545 = vrot.lane.b32.xlu0 %v5328, 96
        %v5546 = vpop.permute.xlu0 %5545
        %5547 = vrot.lane.b32.xlu0 %v5329, 96
        %v5548 = vpop.permute.xlu0 %5547
        %5549 = vrot.lane.b32.xlu0 %v5330, 96
        %v5550 = vpop.permute.xlu0 %5549
        %5551 = vrot.lane.b32.xlu0 %v5331, 96
        %v5552 = vpop.permute.xlu0 %5551
        %5553 = vrot.lane.b32.xlu0 %v5332, 96
        %v5554 = vpop.permute.xlu0 %5553
        %5555 = vrot.lane.b32.xlu0 %v5333, 96
        %v5556 = vpop.permute.xlu0 %5555
        %5557 = vrot.lane.b32.xlu0 %v5334, 96
        %v5558 = vpop.permute.xlu0 %5557
        %5575 = vrot.lane.b32.xlu0 %v5343, 32
        %v5576 = vpop.permute.xlu0 %5575
        %5577 = vrot.lane.b32.xlu0 %v5344, 32
        %v5578 = vpop.permute.xlu0 %5577
        %5579 = vrot.lane.b32.xlu0 %v5345, 32
        %v5580 = vpop.permute.xlu0 %5579
        %5581 = vrot.lane.b32.xlu0 %v5346, 32
        %v5582 = vpop.permute.xlu0 %5581
        %5583 = vrot.lane.b32.xlu0 %v5347, 32
        %v5584 = vpop.permute.xlu0 %5583
        %5585 = vrot.lane.b32.xlu0 %v5348, 32
        %v5586 = vpop.permute.xlu0 %5585
        %5587 = vrot.lane.b32.xlu0 %v5349, 32
        %v5588 = vpop.permute.xlu0 %5587
        %5589 = vrot.lane.b32.xlu0 %v5350, 32
        %v5590 = vpop.permute.xlu0 %5589
        %5607 = vrot.lane.b32.xlu0 %v5351, 64
        %v5608 = vpop.permute.xlu0 %5607
        %5609 = vrot.lane.b32.xlu0 %v5352, 64
        %v5610 = vpop.permute.xlu0 %5609
        %5611 = vrot.lane.b32.xlu0 %v5353, 64
        %v5612 = vpop.permute.xlu0 %5611
        %5613 = vrot.lane.b32.xlu0 %v5354, 64
        %v5614 = vpop.permute.xlu0 %5613
        %5615 = vrot.lane.b32.xlu0 %v5355, 64
        %v5616 = vpop.permute.xlu0 %5615
        %5617 = vrot.lane.b32.xlu0 %v5356, 64
        %v5618 = vpop.permute.xlu0 %5617
        %5619 = vrot.lane.b32.xlu0 %v5357, 64
        %v5620 = vpop.permute.xlu0 %5619
        %5621 = vrot.lane.b32.xlu0 %v5358, 64
        %v5622 = vpop.permute.xlu0 %5621
        %5639 = vrot.lane.b32.xlu0 %v5359, 96
        %v5640 = vpop.permute.xlu0 %5639
        %5641 = vrot.lane.b32.xlu0 %v5360, 96
        %v5642 = vpop.permute.xlu0 %5641
        %5643 = vrot.lane.b32.xlu0 %v5361, 96
        %v5644 = vpop.permute.xlu0 %5643
        %5645 = vrot.lane.b32.xlu0 %v5362, 96
        %v5646 = vpop.permute.xlu0 %5645
        %5647 = vrot.lane.b32.xlu0 %v5363, 96
        %v5648 = vpop.permute.xlu0 %5647
        %5649 = vrot.lane.b32.xlu0 %v5364, 96
        %v5650 = vpop.permute.xlu0 %5649
        %5651 = vrot.lane.b32.xlu0 %v5365, 96
        %v5652 = vpop.permute.xlu0 %5651
        %5653 = vrot.lane.b32.xlu0 %v5366, 96
        %v5654 = vpop.permute.xlu0 %5653
        %v5663 = vsel %vm973, %v5223, %v5384
        %v5664 = vsel %vm973, %v5224, %v5386
        %v5665 = vsel %vm973, %v5225, %v5388
        %v5666 = vsel %vm973, %v5226, %v5390
        %v5667 = vsel %vm973, %v5227, %v5392
        %v5668 = vsel %vm973, %v5228, %v5394
        %v5669 = vsel %vm973, %v5229, %v5396
        %v5670 = vsel %vm973, %v5230, %v5398
        %v5671 = vsel %vm353, %v5663, %v5416
        %v5672 = vsel %vm353, %v5664, %v5418
        %v5673 = vsel %vm353, %v5665, %v5420
        %v5674 = vsel %vm353, %v5666, %v5422
        %v5675 = vsel %vm353, %v5667, %v5424
        %v5676 = vsel %vm353, %v5668, %v5426
        %v5677 = vsel %vm353, %v5669, %v5428
        %v5678 = vsel %vm353, %v5670, %v5430
        %v5679 = vsel %vm990, %v5671, %v5448
        %v5680 = vsel %vm990, %v5672, %v5450
        %v5681 = vsel %vm990, %v5673, %v5452
        %v5682 = vsel %vm990, %v5674, %v5454
        %v5683 = vsel %vm990, %v5675, %v5456
        %v5684 = vsel %vm990, %v5676, %v5458
        %v5685 = vsel %vm990, %v5677, %v5460
        %v5686 = vsel %vm990, %v5678, %v5462
        %v5687 = vsel %vm973, %v5303, %v5480
        %v5688 = vsel %vm973, %v5304, %v5482
        %v5689 = vsel %vm973, %v5305, %v5484
        %v5690 = vsel %vm973, %v5306, %v5486
        %v5691 = vsel %vm973, %v5307, %v5488
        %v5692 = vsel %vm973, %v5308, %v5490
        %v5693 = vsel %vm973, %v5309, %v5492
        %v5694 = vsel %vm973, %v5310, %v5494
        %v5695 = vsel %vm353, %v5687, %v5512
        %v5696 = vsel %vm353, %v5688, %v5514
        %v5697 = vsel %vm353, %v5689, %v5516
        %v5698 = vsel %vm353, %v5690, %v5518
        %v5699 = vsel %vm353, %v5691, %v5520
        %v5700 = vsel %vm353, %v5692, %v5522
        %v5701 = vsel %vm353, %v5693, %v5524
        %v5702 = vsel %vm353, %v5694, %v5526
        %v5703 = vsel %vm990, %v5695, %v5544
        %v5704 = vsel %vm990, %v5696, %v5546
        %v5705 = vsel %vm990, %v5697, %v5548
        %v5706 = vsel %vm990, %v5698, %v5550
        %v5707 = vsel %vm990, %v5699, %v5552
        %v5708 = vsel %vm990, %v5700, %v5554
        %v5709 = vsel %vm990, %v5701, %v5556
        %v5710 = vsel %vm990, %v5702, %v5558
        %v5711 = vsel %vm973, %v5335, %v5576
        %v5712 = vsel %vm973, %v5336, %v5578
        %v5713 = vsel %vm973, %v5337, %v5580
        %v5714 = vsel %vm973, %v5338, %v5582
        %v5715 = vsel %vm973, %v5339, %v5584
        %v5716 = vsel %vm973, %v5340, %v5586
        %v5717 = vsel %vm973, %v5341, %v5588
        %v5718 = vsel %vm973, %v5342, %v5590
        %v5719 = vsel %vm353, %v5711, %v5608
        %v5720 = vsel %vm353, %v5712, %v5610
        %v5721 = vsel %vm353, %v5713, %v5612
        %v5722 = vsel %vm353, %v5714, %v5614
        %v5723 = vsel %vm353, %v5715, %v5616
        %v5724 = vsel %vm353, %v5716, %v5618
        %v5725 = vsel %vm353, %v5717, %v5620
        %v5726 = vsel %vm353, %v5718, %v5622
        %v5727 = vsel %vm990, %v5719, %v5640
        %v5728 = vsel %vm990, %v5720, %v5642
        %v5729 = vsel %vm990, %v5721, %v5644
        %v5730 = vsel %vm990, %v5722, %v5646
        %v5731 = vsel %vm990, %v5723, %v5648
        %v5732 = vsel %vm990, %v5724, %v5650
        %v5733 = vsel %vm990, %v5725, %v5652
        %v5734 = vsel %vm990, %v5726, %v5654
        %v5735 = vsel %vm973, %v5367, 0.0
        %v5736 = vsel %vm973, %v5368, 0.0
        %v5737 = vsel %vm973, %v5369, 0.0
        %v5738 = vsel %vm973, %v5370, 0.0
        %v5739 = vsel %vm973, %v5371, 0.0
        %v5740 = vsel %vm973, %v5372, 0.0
        %v5741 = vsel %vm973, %v5373, 0.0
        %v5742 = vsel %vm973, %v5374, 0.0
        %v5743 = vpack.c.bf16 %v5680, %v5679
        %v5744 = vpack.c.bf16 %v5704, %v5703
        %v5745 = vpack.c.bf16 %v5728, %v5727
        %v5746 = vpack.c.bf16 %v5736, %v5735
        %v5747 = vpack.c.bf16 %v5682, %v5681
        %v5748 = vpack.c.bf16 %v5706, %v5705
        %v5749 = vpack.c.bf16 %v5730, %v5729
        %v5750 = vpack.c.bf16 %v5738, %v5737
        %v5751 = vpack.c.bf16 %v5684, %v5683
        %v5752 = vpack.c.bf16 %v5708, %v5707
        %v5753 = vpack.c.bf16 %v5732, %v5731
        %v5754 = vpack.c.bf16 %v5740, %v5739
        %v5755 = vpack.c.bf16 %v5686, %v5685
        %v5756 = vpack.c.bf16 %v5710, %v5709
        %v5757 = vpack.c.bf16 %v5734, %v5733
        %v5758 = vpack.c.bf16 %v5742, %v5741
        %s5759 = scalar_lea.vmem %s4, 1280
        %v5760 = vld [vmem:[%s5759] sm:$0xf]
        %v5761 = vld [vmem:[%s5759 + $0x4] sm:$0xf]
        %v5762 = vld [vmem:[%s5759 + $0x8] sm:$0xf]
        %v5763 = vld [vmem:[%s5759 + $0xc] sm:$0xf]
        %v5764 = vld [vmem:[%s5759 + $0x10] sm:$0xf]
        %v5765 = vld [vmem:[%s5759 + $0x14] sm:$0xf]
        %v5766 = vld [vmem:[%s5759 + $0x18] sm:$0xf]
        %v5767 = vld [vmem:[%s5759 + $0x1c] sm:$0xf]
        %v5768 = vld [vmem:[%s5759 + $0x20] sm:$0xf]
        %v5769 = vld [vmem:[%s5759 + $0x24] sm:$0xf]
        %v5770 = vld [vmem:[%s5759 + $0x28] sm:$0xf]
        %v5771 = vld [vmem:[%s5759 + $0x2c] sm:$0xf]
        %v5772 = vld [vmem:[%s5759 + $0x30] sm:$0xf]
        %v5773 = vld [vmem:[%s5759 + $0x34] sm:$0xf]
        %v5774 = vld [vmem:[%s5759 + $0x38] sm:$0xf]
        %v5775 = vld [vmem:[%s5759 + $0x3c] sm:$0xf]
        %v5776 = vld [vmem:[%s5759 + $0x40] sm:$0xf]
        %v5777 = vld [vmem:[%s5759 + $0x44] sm:$0xf]
        %v5778 = vld [vmem:[%s5759 + $0x48] sm:$0xf]
        %v5779 = vld [vmem:[%s5759 + $0x4c] sm:$0xf]
        %v5780 = vld [vmem:[%s5759 + $0x50] sm:$0xf]
        %v5781 = vld [vmem:[%s5759 + $0x54] sm:$0xf]
        %v5782 = vld [vmem:[%s5759 + $0x58] sm:$0xf]
        %v5783 = vld [vmem:[%s5759 + $0x5c] sm:$0xf]
        %v5784 = vld [vmem:[%s5759 + $0x60] sm:$0xf]
        %v5785 = vld [vmem:[%s5759 + $0x64] sm:$0xf]
        %v5786 = vld [vmem:[%s5759 + $0x68] sm:$0xf]
        %v5787 = vld [vmem:[%s5759 + $0x6c] sm:$0xf]
        %v5788 = vld [vmem:[%s5759 + $0x70] sm:$0xf]
        %v5789 = vld [vmem:[%s5759 + $0x74] sm:$0xf]
        %v5790 = vld [vmem:[%s5759 + $0x78] sm:$0xf]
        %v5791 = vld [vmem:[%s5759 + $0x7c] sm:$0xf]
        %v5792 = vld [vmem:[%s5759 + $0x80] sm:$0xf]
        %v5793 = vld [vmem:[%s5759 + $0x84] sm:$0xf]
        %v5794 = vld [vmem:[%s5759 + $0x88] sm:$0xf]
        %v5795 = vld [vmem:[%s5759 + $0x8c] sm:$0xf]
        %v5796 = vld [vmem:[%s5759 + $0x90] sm:$0xf]
        %v5797 = vld [vmem:[%s5759 + $0x94] sm:$0xf]
        %v5798 = vld [vmem:[%s5759 + $0x98] sm:$0xf]
        %v5799 = vld [vmem:[%s5759 + $0x9c] sm:$0xf]
        %v5800 = vld [vmem:[%s5759 + $0xa0] sm:$0xf]
        %v5801 = vld [vmem:[%s5759 + $0xa4] sm:$0xf]
        %v5802 = vld [vmem:[%s5759 + $0xa8] sm:$0xf]
        %v5803 = vld [vmem:[%s5759 + $0xac] sm:$0xf]
        %v5804 = vld [vmem:[%s5759 + $0xb0] sm:$0xf]
        %v5805 = vld [vmem:[%s5759 + $0xb4] sm:$0xf]
        %v5806 = vld [vmem:[%s5759 + $0xb8] sm:$0xf]
        %v5807 = vld [vmem:[%s5759 + $0xbc] sm:$0xf]
        %v5808 = vld [vmem:[%s5759 + $0xc0] sm:$0xf]
        %v5809 = vld [vmem:[%s5759 + $0xc4] sm:$0xf]
        %v5810 = vld [vmem:[%s5759 + $0xc8] sm:$0xf]
        %v5811 = vld [vmem:[%s5759 + $0xcc] sm:$0xf]
        %v5812 = vld [vmem:[%s5759 + $0xd0] sm:$0xf]
        %v5813 = vld [vmem:[%s5759 + $0xd4] sm:$0xf]
        %v5814 = vld [vmem:[%s5759 + $0xd8] sm:$0xf]
        %v5815 = vld [vmem:[%s5759 + $0xdc] sm:$0xf]
        %v5816 = vld [vmem:[%s5759 + $0xe0] sm:$0xf]
        %v5817 = vld [vmem:[%s5759 + $0xe4] sm:$0xf]
        %v5818 = vld [vmem:[%s5759 + $0xe8] sm:$0xf]
        %v5819 = vld [vmem:[%s5759 + $0xec] sm:$0xf]
        %v5820 = vld [vmem:[%s5759 + $0xf0] sm:$0xf]
        %v5821 = vld [vmem:[%s5759 + $0xf4] sm:$0xf]
        %v5822 = vld [vmem:[%s5759 + $0xf8] sm:$0xf]
        %v5823 = vld [vmem:[%s5759 + $0xfc] sm:$0xf]
        %s5824 = scalar_lea.vmem %s5, 5
        %v5825 = vld [vmem:[%s5824] sm:$0x1]
        %v5827 = vperm.slane %v5825, 0
        %v5893 = vunpack.c.l.b16 %v5760
        %v5894 = vunpack.c.l.b16 %v5761
        %v5895 = vunpack.c.l.b16 %v5762
        %v5896 = vunpack.c.l.b16 %v5763
        %v5897 = vunpack.c.l.b16 %v5764
        %v5898 = vunpack.c.l.b16 %v5765
        %v5899 = vunpack.c.l.b16 %v5766
        %v5900 = vunpack.c.l.b16 %v5767
        %v5901 = vunpack.c.l.b16 %v5768
        %v5902 = vunpack.c.l.b16 %v5769
        %v5903 = vunpack.c.l.b16 %v5770
        %v5904 = vunpack.c.l.b16 %v5771
        %v5905 = vunpack.c.l.b16 %v5772
        %v5906 = vunpack.c.l.b16 %v5773
        %v5907 = vunpack.c.l.b16 %v5774
        %v5908 = vunpack.c.l.b16 %v5775
        %v5909 = vunpack.c.l.b16 %v5776
        %v5910 = vunpack.c.l.b16 %v5777
        %v5911 = vunpack.c.l.b16 %v5778
        %v5912 = vunpack.c.l.b16 %v5779
        %v5913 = vunpack.c.l.b16 %v5780
        %v5914 = vunpack.c.l.b16 %v5781
        %v5915 = vunpack.c.l.b16 %v5782
        %v5916 = vunpack.c.l.b16 %v5783
        %v5917 = vunpack.c.l.b16 %v5784
        %v5918 = vunpack.c.l.b16 %v5785
        %v5919 = vunpack.c.l.b16 %v5786
        %v5920 = vunpack.c.l.b16 %v5787
        %v5921 = vunpack.c.l.b16 %v5788
        %v5922 = vunpack.c.l.b16 %v5789
        %v5923 = vunpack.c.l.b16 %v5790
        %v5924 = vunpack.c.l.b16 %v5791
        %v5925 = vunpack.c.l.b16 %v5792
        %v5926 = vunpack.c.l.b16 %v5793
        %v5927 = vunpack.c.l.b16 %v5794
        %v5928 = vunpack.c.l.b16 %v5795
        %v5929 = vunpack.c.l.b16 %v5796
        %v5930 = vunpack.c.l.b16 %v5797
        %v5931 = vunpack.c.l.b16 %v5798
        %v5932 = vunpack.c.l.b16 %v5799
        %v5933 = vunpack.c.l.b16 %v5800
        %v5934 = vunpack.c.l.b16 %v5801
        %v5935 = vunpack.c.l.b16 %v5802
        %v5936 = vunpack.c.l.b16 %v5803
        %v5937 = vunpack.c.l.b16 %v5804
        %v5938 = vunpack.c.l.b16 %v5805
        %v5939 = vunpack.c.l.b16 %v5806
        %v5940 = vunpack.c.l.b16 %v5807
        %v5941 = vunpack.c.l.b16 %v5808
        %v5942 = vunpack.c.l.b16 %v5809
        %v5943 = vunpack.c.l.b16 %v5810
        %v5944 = vunpack.c.l.b16 %v5811
        %v5945 = vunpack.c.l.b16 %v5812
        %v5946 = vunpack.c.l.b16 %v5813
        %v5947 = vunpack.c.l.b16 %v5814
        %v5948 = vunpack.c.l.b16 %v5815
        %v5949 = vunpack.c.l.b16 %v5816
        %v5950 = vunpack.c.l.b16 %v5817
        %v5951 = vunpack.c.l.b16 %v5818
        %v5952 = vunpack.c.l.b16 %v5819
        %v5953 = vunpack.c.l.b16 %v5820
        %v5954 = vunpack.c.l.b16 %v5821
        %v5955 = vunpack.c.l.b16 %v5822
        %v5956 = vunpack.c.l.b16 %v5823
        %v5957 = vpack.c.b16 %v5894, %v5893
        %v5958 = vpack.c.b16 %v5896, %v5895
        %v5959 = vpack.c.b16 %v5898, %v5897
        %v5960 = vpack.c.b16 %v5900, %v5899
        %v5961 = vpack.c.b16 %v5902, %v5901
        %v5962 = vpack.c.b16 %v5904, %v5903
        %v5963 = vpack.c.b16 %v5906, %v5905
        %v5964 = vpack.c.b16 %v5908, %v5907
        %v5965 = vpack.c.b16 %v5910, %v5909
        %v5966 = vpack.c.b16 %v5912, %v5911
        %v5967 = vpack.c.b16 %v5914, %v5913
        %v5968 = vpack.c.b16 %v5916, %v5915
        %v5969 = vpack.c.b16 %v5918, %v5917
        %v5970 = vpack.c.b16 %v5920, %v5919
        %v5971 = vpack.c.b16 %v5922, %v5921
        %v5972 = vpack.c.b16 %v5924, %v5923
        %v5973 = vpack.c.b16 %v5926, %v5925
        %v5974 = vpack.c.b16 %v5928, %v5927
        %v5975 = vpack.c.b16 %v5930, %v5929
        %v5976 = vpack.c.b16 %v5932, %v5931
        %v5977 = vpack.c.b16 %v5934, %v5933
        %v5978 = vpack.c.b16 %v5936, %v5935
        %v5979 = vpack.c.b16 %v5938, %v5937
        %v5980 = vpack.c.b16 %v5940, %v5939
        %v5981 = vpack.c.b16 %v5942, %v5941
        %v5982 = vpack.c.b16 %v5944, %v5943
        %v5983 = vpack.c.b16 %v5946, %v5945
        %v5984 = vpack.c.b16 %v5948, %v5947
        %v5985 = vpack.c.b16 %v5950, %v5949
        %v5986 = vpack.c.b16 %v5952, %v5951
        %v5987 = vpack.c.b16 %v5954, %v5953
        %v5988 = vpack.c.b16 %v5956, %v5955
        %6021 = vmatpush.bf16.msra.mxu0 %v5964
        %6022 = vmatpush.bf16.msra.mxu0 %v5963
        %6023 = vmatpush.bf16.msra.mxu0 %v5962
        %6024 = vmatpush.bf16.msra.mxu0 %v5961
        %6025 = vmatpush.bf16.msra.mxu0 %v5960
        %6026 = vmatpush.bf16.msra.mxu0 %v5959
        %6027 = vmatpush.bf16.msra.mxu0 %v5958
        %6028 = vmatpush.bf16.msra.mxu0 %v5957
        %6029 = vmatmul.bf16.gmra.mxu0 %v5743
        %v6030 = vpop.f32.mrf.mxu0
        %v6031 = vadd.f32 %v5827, %v6030
        %v6032 = vpop.f32.mrf.mxu0
        %v6033 = vadd.f32 %v5827, %v6032
        %6034 = vmatmul.bf16.gmra.mxu0 %v5747
        %v6035 = vpop.f32.mrf.mxu0
        %v6036 = vadd.f32 %v5827, %v6035
        %v6037 = vpop.f32.mrf.mxu0
        %v6038 = vadd.f32 %v5827, %v6037
        %6039 = vmatmul.bf16.gmra.mxu0 %v5751
        %v6040 = vpop.f32.mrf.mxu0
        %v6041 = vadd.f32 %v5827, %v6040
        %v6042 = vpop.f32.mrf.mxu0
        %v6043 = vadd.f32 %v5827, %v6042
        %6044 = vmatmul.bf16.gmra.mxu0 %v5755
        %v6045 = vpop.f32.mrf.mxu0
        %v6046 = vadd.f32 %v5827, %v6045
        %v6047 = vpop.f32.mrf.mxu0
        %v6048 = vadd.f32 %v5827, %v6047
        %6049 = vdwg.mxu0
        %6050 = vmatpush.bf16.msra.mxu0 %v5972
        %6051 = vmatpush.bf16.msra.mxu0 %v5971
        %6052 = vmatpush.bf16.msra.mxu0 %v5970
        %6053 = vmatpush.bf16.msra.mxu0 %v5969
        %6054 = vmatpush.bf16.msra.mxu0 %v5968
        %6055 = vmatpush.bf16.msra.mxu0 %v5967
        %6056 = vmatpush.bf16.msra.mxu0 %v5966
        %6057 = vmatpush.bf16.msra.mxu0 %v5965
        %6058 = vmatmul.bf16.gmra.mxu0 %v5744
        %v6059 = vpop.f32.mrf.mxu0
        %v6060 = vadd.f32 %v6031, %v6059
        %v6061 = vpop.f32.mrf.mxu0
        %v6062 = vadd.f32 %v6033, %v6061
        %6063 = vmatmul.bf16.gmra.mxu0 %v5748
        %v6064 = vpop.f32.mrf.mxu0
        %v6065 = vadd.f32 %v6036, %v6064
        %v6066 = vpop.f32.mrf.mxu0
        %v6067 = vadd.f32 %v6038, %v6066
        %6068 = vmatmul.bf16.gmra.mxu0 %v5752
        %v6069 = vpop.f32.mrf.mxu0
        %v6070 = vadd.f32 %v6041, %v6069
        %v6071 = vpop.f32.mrf.mxu0
        %v6072 = vadd.f32 %v6043, %v6071
        %6073 = vmatmul.bf16.gmra.mxu0 %v5756
        %v6074 = vpop.f32.mrf.mxu0
        %v6075 = vadd.f32 %v6046, %v6074
        %v6076 = vpop.f32.mrf.mxu0
        %v6077 = vadd.f32 %v6048, %v6076
        %6078 = vdwg.mxu0
        %6079 = vmatpush.bf16.msra.mxu0 %v5980
        %6080 = vmatpush.bf16.msra.mxu0 %v5979
        %6081 = vmatpush.bf16.msra.mxu0 %v5978
        %6082 = vmatpush.bf16.msra.mxu0 %v5977
        %6083 = vmatpush.bf16.msra.mxu0 %v5976
        %6084 = vmatpush.bf16.msra.mxu0 %v5975
        %6085 = vmatpush.bf16.msra.mxu0 %v5974
        %6086 = vmatpush.bf16.msra.mxu0 %v5973
        %6087 = vmatmul.bf16.gmra.mxu0 %v5745
        %v6088 = vpop.f32.mrf.mxu0
        %v6089 = vadd.f32 %v6060, %v6088
        %v6090 = vpop.f32.mrf.mxu0
        %v6091 = vadd.f32 %v6062, %v6090
        %6092 = vmatmul.bf16.gmra.mxu0 %v5749
        %v6093 = vpop.f32.mrf.mxu0
        %v6094 = vadd.f32 %v6065, %v6093
        %v6095 = vpop.f32.mrf.mxu0
        %v6096 = vadd.f32 %v6067, %v6095
        %6097 = vmatmul.bf16.gmra.mxu0 %v5753
        %v6098 = vpop.f32.mrf.mxu0
        %v6099 = vadd.f32 %v6070, %v6098
        %v6100 = vpop.f32.mrf.mxu0
        %v6101 = vadd.f32 %v6072, %v6100
        %6102 = vmatmul.bf16.gmra.mxu0 %v5757
        %v6103 = vpop.f32.mrf.mxu0
        %v6104 = vadd.f32 %v6075, %v6103
        %v6105 = vpop.f32.mrf.mxu0
        %v6106 = vadd.f32 %v6077, %v6105
        %6107 = vdwg.mxu0
        %6108 = vmatpush.bf16.msra.mxu0 %v5988
        %6109 = vmatpush.bf16.msra.mxu0 %v5987
        %6110 = vmatpush.bf16.msra.mxu0 %v5986
        %6111 = vmatpush.bf16.msra.mxu0 %v5985
        %6112 = vmatpush.bf16.msra.mxu0 %v5984
        %6113 = vmatpush.bf16.msra.mxu0 %v5983
        %6114 = vmatpush.bf16.msra.mxu0 %v5982
        %6115 = vmatpush.bf16.msra.mxu0 %v5981
        %6116 = vmatmul.bf16.gmra.mxu0 %v5746
        %v6117 = vpop.f32.mrf.mxu0
        %v6118 = vadd.f32 %v6089, %v6117
        %v6119 = vpop.f32.mrf.mxu0
        %v6120 = vadd.f32 %v6091, %v6119
        %6121 = vmatmul.bf16.gmra.mxu0 %v5750
        %v6122 = vpop.f32.mrf.mxu0
        %v6123 = vadd.f32 %v6094, %v6122
        %v6124 = vpop.f32.mrf.mxu0
        %v6125 = vadd.f32 %v6096, %v6124
        %6126 = vmatmul.bf16.gmra.mxu0 %v5754
        %v6127 = vpop.f32.mrf.mxu0
        %v6128 = vadd.f32 %v6099, %v6127
        %v6129 = vpop.f32.mrf.mxu0
        %v6130 = vadd.f32 %v6101, %v6129
        %6131 = vmatmul.bf16.gmra.mxu0 %v5758
        %v6132 = vpop.f32.mrf.mxu0
        %v6133 = vadd.f32 %v6104, %v6132
        %v6134 = vpop.f32.mrf.mxu0
        %v6135 = vadd.f32 %v6106, %v6134
        %6136 = vdwg.mxu0
        %v6137 = vmax.f32 %v6118, 0.0
        %v6138 = vmax.f32 %v6120, 0.0
        %v6139 = vmax.f32 %v6123, 0.0
        %v6140 = vmax.f32 %v6125, 0.0
        %v6141 = vmax.f32 %v6128, 0.0
        %v6142 = vmax.f32 %v6130, 0.0
        %v6143 = vmax.f32 %v6133, 0.0
        %v6144 = vmax.f32 %v6135, 0.0
        %v6145 = vpack.c.bf16 %v6138, %v6137
        %v6146 = vpack.c.bf16 %v6140, %v6139
        %v6147 = vpack.c.bf16 %v6142, %v6141
        %v6148 = vpack.c.bf16 %v6144, %v6143
        %v6149 = vld [vmem:[%s6] sm:$0xf]
        %v6150 = vld [vmem:[%s6 + $0x4] sm:$0xf]
        %v6151 = vld [vmem:[%s6 + $0x8] sm:$0xf]
        %v6152 = vld [vmem:[%s6 + $0xc] sm:$0xf]
        %v6153 = vld [vmem:[%s7] sm:$0x1]
        %v6155 = vperm.slane %v6153, 0
        %v6161 = vunpack.c.l.b16 %v6149
        %v6162 = vunpack.c.l.b16 %v6150
        %v6163 = vunpack.c.l.b16 %v6151
        %v6164 = vunpack.c.l.b16 %v6152
        %v6165 = vpack.c.b16 %v6162, %v6161
        %v6166 = vpack.c.b16 %v6164, %v6163
        %v6170 = vsel %vm973, %v6145, 0
        %v6173 = vsel %vm973, %v6146, 0
        %v6176 = vsel %vm973, %v6147, 0
        %v6179 = vsel %vm973, %v6148, 0
        %6181 = vmatpush.bf16.msra.mxu0 0
        %6182 = vmatpush.bf16.msra.mxu0 0
        %6183 = vmatpush.bf16.msra.mxu0 0
        %6184 = vmatpush.bf16.msra.mxu0 0
        %6185 = vmatpush.bf16.msra.mxu0 0
        %6186 = vmatpush.bf16.msra.mxu0 0
        %6187 = vmatpush.bf16.msra.mxu0 %v6166
        %6188 = vmatpush.bf16.msra.mxu0 %v6165
        %6189 = vmatmul.bf16.gmra.mxu0 %v6170
        %v6190 = vpop.f32.mrf.mxu0
        %v6191 = vadd.f32 %v6155, %v6190
        %v6192 = vpop.f32.mrf.mxu0
        %v6193 = vadd.f32 %v6155, %v6192
        %6194 = vmatmul.bf16.gmra.mxu0 %v6173
        %v6195 = vpop.f32.mrf.mxu0
        %v6196 = vadd.f32 %v6155, %v6195
        %v6197 = vpop.f32.mrf.mxu0
        %v6198 = vadd.f32 %v6155, %v6197
        %6199 = vmatmul.bf16.gmra.mxu0 %v6176
        %v6200 = vpop.f32.mrf.mxu0
        %v6201 = vadd.f32 %v6155, %v6200
        %v6202 = vpop.f32.mrf.mxu0
        %v6203 = vadd.f32 %v6155, %v6202
        %6204 = vmatmul.bf16.gmra.mxu0 %v6179
        %v6205 = vpop.f32.mrf.mxu0
        %v6206 = vadd.f32 %v6155, %v6205
        %v6207 = vpop.f32.mrf.mxu0
        %v6208 = vadd.f32 %v6155, %v6207
        %6209 = vdwg.mxu0
        %6210 = vst [vmem:[%s298] sm:$0xff] %v6191
        %6211 = vst [vmem:[%s298 + $0x8] sm:$0xff] %v6193
        %6212 = vst [vmem:[%s298 + $0x10] sm:$0xff] %v6196
        %6213 = vst [vmem:[%s298 + $0x18] sm:$0xff] %v6198
        %6214 = vst [vmem:[%s298 + $0x20] sm:$0xff] %v6201
        %6215 = vst [vmem:[%s298 + $0x28] sm:$0xff] %v6203
        %6216 = vst [vmem:[%s298 + $0x30] sm:$0xff] %v6206
        %6217 = vst [vmem:[%s298 + $0x38] sm:$0xff] %v6208
        %s6218 = sand.u32 %s203, 1
        %s6219 = scalar_lea.sflag [#allocation3], %s6218
        %s6220 = sand.u32 %s203, 1
        %s6221 = smul.addr %s6220, 64
        %s6222 = scalar_lea.vmem [#allocation2], %s6221
        // Predicated region
        $region53: #{tpu_custom_call.1} parent=51 // pred_check
          %p6223 = pneg %p213
        $region54: #{tpu_custom_call.1} parent=51 // pred_check_branch
          %6225 = sbr.rel (%p6223) target = $region56
        $region55: #{tpu_custom_call.1} parent=51 // pred_region
          %6227 = vsyncadd %s6219, 0
          %s6228 = smul.addr %s22, 8
          %s6229 = smul.addr %s6228, 8
          %s6230 = scalar_lea.hbm %s8, %s6229
          %s6231 = sshll.u32 %s6222, 4
          %s6232 = int_to_ptr.vmem [resolvable:$true] %s6231
          %s6233 = sshll.u32 %s6230, 4
          %s6234 = int_to_ptr.hbm [resolvable:$true] %s6233
          %6239 = dma.vmem_to_hbm [thread:$0]  %s6232, 1024, %s6234, %s6219, 128, 128, 8
        $region56: #{tpu_custom_call.1} parent=51 // pred_fallthru
          _
      $region52: #{tpu_custom_call.1} parent=5 // pred_fallthru
        _
      %p6240 = scmp.le.s32.totalorder 2, %s17
      // Predicated region
      $region57: #{tpu_custom_call.1} parent=5 // pred_check
        %p6241 = pneg %p6240
      $region58: #{tpu_custom_call.1} parent=5 // pred_check_branch
        %6243 = sbr.rel (%p6241) target = $region60
      $region59: #{tpu_custom_call.1} parent=5 // pred_region
        %s6244 = ssub.s32 %s17, 2
        // Predicated region
        $region61: #{tpu_custom_call.1} parent=59 // pred_check
          %p6245 = pneg %p219
        $region62: #{tpu_custom_call.1} parent=59 // pred_check_branch
          %6247 = sbr.rel (%p6245) target = $region64
        $region63: #{tpu_custom_call.1} parent=59 // pred_region
          %s6248 = sand.u32 %s204, 1
          %s6249 = scalar_lea.sflag [#allocation3], %s6248
          %s6250 = sand.u32 %s204, 1
          %s6251 = smul.addr %s6250, 64
          %s6252 = scalar_lea.vmem [#allocation2], %s6251
          %6254 = dma.done %s6249, 1024
        $region64: #{tpu_custom_call.1} parent=59 // pred_fallthru
          _
      $region60: #{tpu_custom_call.1} parent=5 // pred_fallthru
        _
    $region6: #{tpu_custom_call.1} parent=1 // loop_footer
      %s21 = sadd.s32 1, %s17
    $region7: #{tpu_custom_call.1} parent=1 // loop_footer_branch
      %16 = sbr.rel target = $region3
    $region8: #{tpu_custom_call.1} parent=1 // loop_exit
      _
    %6255 = vsyncpa [#allocation3], 1
    %s6256 = scalar_lea.sflag [#allocation3], 1
    %6257 = vsyncpa %s6256, 1

</llo_original>
